<compile_context>
chip_gen: v7x
topology: tpu7x:2x2x1
jax: 0.10.0
libtpu: 0.0.40
codegen_flags: <defaults>
</compile_context>

<pallas_src>
import jax
import jax.numpy as jnp
from jax import lax
from jax.experimental import pallas as pl
from jax.experimental.pallas import tpu as pltpu


def _round_up(x, m):
    return ((x + m - 1) // m) * m


# ----------------------------------------------------------------------------
# Fused kernel: all LSTM layers over the full sequence + Linear + Sigmoid epilogue.
# Gate order matches PyTorch: i, f, g, o (each gate padded to Hp lanes).
# ----------------------------------------------------------------------------
def _make_fused_kernel(n_layers, T, BB, Hp, unroll):
    H4 = 4 * Hp

    def kernel(*args):
        x_ref = args[0]                                   # (T, BB, Ep) f32
        w_refs = args[1:1 + 3 * n_layers]                 # per layer: wih, whh, bias
        wfc_ref, bfc_ref, h0_ref, c0_ref = args[1 + 3 * n_layers:5 + 3 * n_layers]
        out_ref, hN_ref, cN_ref = args[5 + 3 * n_layers:8 + 3 * n_layers]
        xw_scr, h_scr, c_scr = args[8 + 3 * n_layers:11 + 3 * n_layers]

        Ep = x_ref.shape[2]

        # Load weights once (loop-invariant values).
        wih = [w_refs[3 * l][...] for l in range(n_layers)]        # bf16
        whh = [w_refs[3 * l + 1][...] for l in range(n_layers)]    # bf16
        bias = [w_refs[3 * l + 2][...] for l in range(n_layers)]   # (1, 4Hp) f32

        # Initialize running (h, c) state in VMEM scratch.
        h_scr[...] = h0_ref[...]
        c_scr[...] = c0_ref[...]

        # Hoisted layer-0 input projection: one big MXU-friendly GEMM for the whole
        # sequence, with the layer-0 bias folded in.  (T,BB,Ep)->(T*BB,Ep) is a pure
        # layout no-op for f32 since BB is a multiple of 8.
        x_all = x_ref[...].reshape(T * BB, Ep).astype(jnp.bfloat16)
        xw_scr[...] = (jnp.dot(x_all, wih[0], preferred_element_type=jnp.float32)
                       + bias[0])

        # Pre-broadcast the remaining per-layer biases once, outside the time loop.
        bias_bc = [None] + [jnp.broadcast_to(bias[l], (BB, H4))
                            for l in range(1, n_layers)]

        def step(t, carry):
            t0 = pl.multiple_of(t * BB, BB)
            # Layer-0 input projection for this timestep (already includes bias).
            proj = xw_scr[pl.ds(t0, BB), :]                         # (BB, 4Hp) f32
            for l in range(n_layers):
                h = h_scr[l]                                        # (BB, Hp) f32
                c = c_scr[l]
                gates = proj + jnp.dot(h.astype(jnp.bfloat16), whh[l],
                                       preferred_element_type=jnp.float32)
                # Lane-aligned 128-wide gate slices (Hp is a multiple of 128).
                i_g = jax.nn.sigmoid(gates[:, 0 * Hp:1 * Hp])
                f_g = jax.nn.sigmoid(gates[:, 1 * Hp:2 * Hp])
                g_g = jnp.tanh(gates[:, 2 * Hp:3 * Hp])
                o_g = jax.nn.sigmoid(gates[:, 3 * Hp:4 * Hp])
                c_new = f_g * c + i_g * g_g
                h_new = o_g * jnp.tanh(c_new)
                h_scr[l] = h_new
                c_scr[l] = c_new
                if l + 1 < n_layers:
                    # Next layer's input projection for this timestep.
                    proj = (jnp.dot(h_new.astype(jnp.bfloat16), wih[l + 1],
                                    preferred_element_type=jnp.float32)
                            + bias_bc[l + 1])
            return carry

        lax.fori_loop(0, T, step, 0, unroll=unroll)

        # Final hidden/cell states + fused Linear + Sigmoid epilogue on the last h.
        hN_ref[...] = h_scr[...]
        cN_ref[...] = c_scr[...]
        h_top = h_scr[n_layers - 1]                                 # (BB, Hp) f32
        logits = (jnp.dot(h_top.astype(jnp.bfloat16), wfc_ref[...],
                          preferred_element_type=jnp.float32) + bfc_ref[...])
        out_ref[...] = jax.nn.sigmoid(logits)

    return kernel


# ----------------------------------------------------------------------------
# Parameter init (PyTorch layout) + one-time packing (transpose/pad/bf16).
# ----------------------------------------------------------------------------
def init_params(key, vocab_size, embedding_dim, hidden_dim, output_dim, n_layers):
    params = {}
    k = 1.0 / jnp.sqrt(hidden_dim)
    keys = jax.random.split(key, 2 + 4 * n_layers + 2)
    params["embedding"] = jax.random.normal(keys[0], (vocab_size, embedding_dim),
                                            jnp.float32)
    ki = 1
    for l in range(n_layers):
        in_dim = embedding_dim if l == 0 else hidden_dim
        params[f"w_ih_l{l}"] = jax.random.uniform(keys[ki + 0], (4 * hidden_dim, in_dim),
                                                  jnp.float32, -k, k)
        params[f"w_hh_l{l}"] = jax.random.uniform(keys[ki + 1], (4 * hidden_dim, hidden_dim),
                                                  jnp.float32, -k, k)
        params[f"b_ih_l{l}"] = jax.random.uniform(keys[ki + 2], (4 * hidden_dim,),
                                                  jnp.float32, -k, k)
        params[f"b_hh_l{l}"] = jax.random.uniform(keys[ki + 3], (4 * hidden_dim,),
                                                  jnp.float32, -k, k)
        ki += 4
    params["w_fc"] = jax.random.uniform(keys[ki], (output_dim, hidden_dim),
                                        jnp.float32, -k, k)
    params["b_fc"] = jax.random.uniform(keys[ki + 1], (output_dim,), jnp.float32, -k, k)
    return params


def pack_params(params, n_layers):
    """One-time packing: transpose to (in, 4H), pad each gate to Hp=ceil128(H) lanes,
    sum biases, pad E/O to multiples of 128, cast matmul operands to bf16."""
    E = params["embedding"].shape[1]
    H = params["w_ih_l0"].shape[0] // 4
    O = params["w_fc"].shape[0]
    Hp = _round_up(H, 128)
    Ep = _round_up(E, 128)
    Op = _round_up(O, 128)

    packed = {"n_layers": n_layers, "H": H, "Hp": Hp, "E": E, "Ep": Ep, "O": O, "Op": Op}
    packed["embedding"] = jnp.pad(params["embedding"], ((0, 0), (0, Ep - E)))

    def pad_gate_rows(w):                       # (4H, D) -> (4Hp, D), per-gate padding
        wg = w.reshape(4, H, -1)
        wg = jnp.pad(wg, ((0, 0), (0, Hp - H), (0, 0)))
        return wg.reshape(4 * Hp, -1)

    for l in range(n_layers):
        in_dim = E if l == 0 else H
        in_pad = Ep if l == 0 else Hp
        w_ih = pad_gate_rows(params[f"w_ih_l{l}"])                 # (4Hp, in_dim)
        w_ih = jnp.pad(w_ih, ((0, 0), (0, in_pad - in_dim)))       # (4Hp, in_pad)
        w_hh = pad_gate_rows(params[f"w_hh_l{l}"])                 # (4Hp, H)
        w_hh = jnp.pad(w_hh, ((0, 0), (0, Hp - H)))                # (4Hp, Hp)
        b = params[f"b_ih_l{l}"] + params[f"b_hh_l{l}"]            # (4H,)
        b = jnp.pad(b.reshape(4, H), ((0, 0), (0, Hp - H))).reshape(1, 4 * Hp)
        packed[f"wih_l{l}"] = jnp.transpose(w_ih).astype(jnp.bfloat16)   # (in_pad, 4Hp)
        packed[f"whh_l{l}"] = jnp.transpose(w_hh).astype(jnp.bfloat16)   # (Hp, 4Hp)
        packed[f"b_l{l}"] = b.astype(jnp.float32)

    w_fc = jnp.pad(params["w_fc"], ((0, Op - O), (0, Hp - H)))     # (Op, Hp)
    packed["wfc"] = jnp.transpose(w_fc).astype(jnp.bfloat16)       # (Hp, Op)
    packed["bfc"] = jnp.pad(params["b_fc"], (0, Op - O)).reshape(1, Op).astype(jnp.float32)
    return packed


# ----------------------------------------------------------------------------
# Forward (eval mode: dropout == identity).
# ----------------------------------------------------------------------------
def sentiment_forward(packed, x_tokens, hidden):
    """x_tokens: (B, T) int32; hidden = (h0, c0) each (n_layers, B, H)."""
    n_layers = packed["n_layers"]
    H, Hp, Ep, O, Op = packed["H"], packed["Hp"], packed["Ep"], packed["O"], packed["Op"]
    h0, c0 = hidden
    B, T = x_tokens.shape

    BB = 8                                   # batch block = f32 sublane minimum
    Bp = _round_up(max(B, BB), BB)
    nb = Bp // BB

    # Embedding gather (glue) -> time-major, batch-padded, f32 (cast to bf16 in-kernel).
    emb = jnp.take(packed["embedding"], x_tokens, axis=0)          # (B, T, Ep)
    x_tbe = jnp.transpose(emb, (1, 0, 2))                          # (T, B, Ep)
    x_tbe = jnp.pad(x_tbe, ((0, 0), (0, Bp - B), (0, 0))).astype(jnp.float32)

    h0p = jnp.pad(h0, ((0, 0), (0, Bp - B), (0, Hp - H))).astype(jnp.float32)
    c0p = jnp.pad(c0, ((0, 0), (0, Bp - B), (0, Hp - H))).astype(jnp.float32)

    unroll = True if T <= 16 else 4
    kernel = _make_fused_kernel(n_layers, T, BB, Hp, unroll)

    weight_args = []
    in_specs = [pl.BlockSpec((T, BB, Ep), lambda b: (0, b, 0))]
    for l in range(n_layers):
        in_pad = Ep if l == 0 else Hp
        weight_args += [packed[f"wih_l{l}"], packed[f"whh_l{l}"], packed[f"b_l{l}"]]
        in_specs += [pl.BlockSpec((in_pad, 4 * Hp), lambda b: (0, 0)),
                     pl.BlockSpec((Hp, 4 * Hp), lambda b: (0, 0)),
                     pl.BlockSpec((1, 4 * Hp), lambda b: (0, 0))]
    weight_args += [packed["wfc"], packed["bfc"]]
    in_specs += [pl.BlockSpec((Hp, Op), lambda b: (0, 0)),
                 pl.BlockSpec((1, Op), lambda b: (0, 0)),
                 pl.BlockSpec((n_layers, BB, Hp), lambda b: (0, b, 0)),
                 pl.BlockSpec((n_layers, BB, Hp), lambda b: (0, b, 0))]

    out_shape = (jax.ShapeDtypeStruct((Bp, Op), jnp.float32),
                 jax.ShapeDtypeStruct((n_layers, Bp, Hp), jnp.float32),
                 jax.ShapeDtypeStruct((n_layers, Bp, Hp), jnp.float32))
    out_specs = (pl.BlockSpec((BB, Op), lambda b: (b, 0)),
                 pl.BlockSpec((n_layers, BB, Hp), lambda b: (0, b, 0)),
                 pl.BlockSpec((n_layers, BB, Hp), lambda b: (0, b, 0)))

    out_p, hN_p, cN_p = pl.pallas_call(
        kernel,
        out_shape=out_shape,
        grid=(nb,),
        in_specs=in_specs,
        out_specs=out_specs,
        scratch_shapes=[pltpu.VMEM((T * BB, 4 * Hp), jnp.float32),   # hoisted x@W_ih
                        pltpu.VMEM((n_layers, BB, Hp), jnp.float32),  # h state
                        pltpu.VMEM((n_layers, BB, Hp), jnp.float32)], # c state
        compiler_params=pltpu.CompilerParams(dimension_semantics=("parallel",)),
    )(x_tbe, *weight_args, h0p, c0p)

    out = out_p[:B, :O]
    h_n = hN_p[:, :B, :H]
    c_n = cN_p[:, :B, :H]
    return out, (h_n, c_n)


def init_hidden(n_layers, batch_size, hidden_dim):
    h0 = jnp.zeros((n_layers, batch_size, hidden_dim), jnp.float32)
    c0 = jnp.zeros((n_layers, batch_size, hidden_dim), jnp.float32)
    return (h0, c0)


if __name__ == "__main__":
    vocab_size, embedding_dim, hidden_dim, output_dim, n_layers = 50, 32, 32, 1, 2
    batch, seq = 2, 8

    key = jax.random.PRNGKey(0)
    pkey, xkey = jax.random.split(key)
    raw_params = init_params(pkey, vocab_size, embedding_dim, hidden_dim,
                             output_dim, n_layers)
    packed = pack_params(raw_params, n_layers)

    x = jax.random.randint(xkey, (batch, seq), 0, vocab_size, dtype=jnp.int32)
    hidden = init_hidden(n_layers, batch, hidden_dim)

    out, (h_n, c_n) = sentiment_forward(packed, x, hidden)
    jax.block_until_ready((out, h_n, c_n))

    assert out.shape == (batch, output_dim)
    assert h_n.shape == (n_layers, batch, hidden_dim)
    assert c_n.shape == (n_layers, batch, hidden_dim)
    assert bool(jnp.all((out > 0.0) & (out < 1.0)))
    print("KERNEL_OK")
</pallas_src>

<mosaic_0001>
module attributes {stable_mosaic.version = 11 : i64} {
  func.func @kernel(%arg0: i32, %arg1: memref<8x8x128xf32, #tpu.memory_space<vmem>>, %arg2: memref<128x512xbf16, #tpu.memory_space<vmem>>, %arg3: memref<128x512xbf16, #tpu.memory_space<vmem>>, %arg4: memref<1x512xf32, #tpu.memory_space<vmem>>, %arg5: memref<128x512xbf16, #tpu.memory_space<vmem>>, %arg6: memref<128x512xbf16, #tpu.memory_space<vmem>>, %arg7: memref<1x512xf32, #tpu.memory_space<vmem>>, %arg8: memref<128x128xbf16, #tpu.memory_space<vmem>>, %arg9: memref<1x128xf32, #tpu.memory_space<vmem>>, %arg10: memref<2x8x128xf32, #tpu.memory_space<vmem>>, %arg11: memref<2x8x128xf32, #tpu.memory_space<vmem>>, %arg12: memref<8x128xf32, #tpu.memory_space<vmem>>, %arg13: memref<2x8x128xf32, #tpu.memory_space<vmem>>, %arg14: memref<2x8x128xf32, #tpu.memory_space<vmem>>, %arg15: memref<64x512xf32, #tpu.memory_space<vmem>>, %arg16: memref<2x8x128xf32, #tpu.memory_space<vmem>>, %arg17: memref<2x8x128xf32, #tpu.memory_space<vmem>>) attributes {dimension_semantics = [#tpu.dimension_semantics<parallel>], iteration_bounds = array<i64: 1>, scalar_prefetch = 0 : i64, scratch_operands = 3 : i64, tpu.core_type = #tpu.core_type<tc>, window_params = [{transform_indices = @transform_0, window_bounds = array<i64: 8, 8, 128>}, {pipeline_mode = #tpu.pipeline_mode<synchronous>, transform_indices = @transform_1, window_bounds = array<i64: 128, 512>}, {pipeline_mode = #tpu.pipeline_mode<synchronous>, transform_indices = @transform_2, window_bounds = array<i64: 128, 512>}, {pipeline_mode = #tpu.pipeline_mode<synchronous>, transform_indices = @transform_3, window_bounds = array<i64: 1, 512>}, {pipeline_mode = #tpu.pipeline_mode<synchronous>, transform_indices = @transform_4, window_bounds = array<i64: 128, 512>}, {pipeline_mode = #tpu.pipeline_mode<synchronous>, transform_indices = @transform_5, window_bounds = array<i64: 128, 512>}, {pipeline_mode = #tpu.pipeline_mode<synchronous>, transform_indices = @transform_6, window_bounds = array<i64: 1, 512>}, {pipeline_mode = #tpu.pipeline_mode<synchronous>, transform_indices = @transform_7, window_bounds = array<i64: 128, 128>}, {pipeline_mode = #tpu.pipeline_mode<synchronous>, transform_indices = @transform_8, window_bounds = array<i64: 1, 128>}, {transform_indices = @transform_9, window_bounds = array<i64: 2, 8, 128>}, {transform_indices = @transform_10, window_bounds = array<i64: 2, 8, 128>}, {transform_indices = @transform_11, window_bounds = array<i64: 8, 128>}, {transform_indices = @transform_12, window_bounds = array<i64: 2, 8, 128>}, {transform_indices = @transform_13, window_bounds = array<i64: 2, 8, 128>}]} {
    %c0 = arith.constant 0 : index
    %c0_0 = arith.constant 0 : index
    %0 = vector.load %arg2[%c0, %c0_0] : memref<128x512xbf16, #tpu.memory_space<vmem>>, vector<128x512xbf16>
    %c0_1 = arith.constant 0 : index
    %c0_2 = arith.constant 0 : index
    %1 = vector.load %arg5[%c0_1, %c0_2] : memref<128x512xbf16, #tpu.memory_space<vmem>>, vector<128x512xbf16>
    %c0_3 = arith.constant 0 : index
    %c0_4 = arith.constant 0 : index
    %2 = vector.load %arg3[%c0_3, %c0_4] : memref<128x512xbf16, #tpu.memory_space<vmem>>, vector<128x512xbf16>
    %c0_5 = arith.constant 0 : index
    %c0_6 = arith.constant 0 : index
    %3 = vector.load %arg6[%c0_5, %c0_6] : memref<128x512xbf16, #tpu.memory_space<vmem>>, vector<128x512xbf16>
    %c0_7 = arith.constant 0 : index
    %c0_8 = arith.constant 0 : index
    %4 = vector.load %arg4[%c0_7, %c0_8] : memref<1x512xf32, #tpu.memory_space<vmem>>, vector<1x512xf32>
    %c0_9 = arith.constant 0 : index
    %c0_10 = arith.constant 0 : index
    %5 = vector.load %arg7[%c0_9, %c0_10] : memref<1x512xf32, #tpu.memory_space<vmem>>, vector<1x512xf32>
    %c0_11 = arith.constant 0 : index
    %c0_12 = arith.constant 0 : index
    %c0_13 = arith.constant 0 : index
    %6 = vector.load %arg10[%c0_11, %c0_12, %c0_13] : memref<2x8x128xf32, #tpu.memory_space<vmem>>, vector<2x8x128xf32>
    %c0_14 = arith.constant 0 : index
    %c0_15 = arith.constant 0 : index
    %c0_16 = arith.constant 0 : index
    %7 = vector.load %arg16[%c0_14, %c0_15, %c0_16] : memref<2x8x128xf32, #tpu.memory_space<vmem>>, vector<2x8x128xf32>
    tpu.vector_store %arg16[%c0_14, %c0_15, %c0_16], %6 {strides = array<i32>} : memref<2x8x128xf32, #tpu.memory_space<vmem>>, vector<2x8x128xf32>,
    %c0_17 = arith.constant 0 : index
    %c0_18 = arith.constant 0 : index
    %c0_19 = arith.constant 0 : index
    %8 = vector.load %arg11[%c0_17, %c0_18, %c0_19] : memref<2x8x128xf32, #tpu.memory_space<vmem>>, vector<2x8x128xf32>
    %c0_20 = arith.constant 0 : index
    %c0_21 = arith.constant 0 : index
    %c0_22 = arith.constant 0 : index
    %9 = vector.load %arg17[%c0_20, %c0_21, %c0_22] : memref<2x8x128xf32, #tpu.memory_space<vmem>>, vector<2x8x128xf32>
    tpu.vector_store %arg17[%c0_20, %c0_21, %c0_22], %8 {strides = array<i32>} : memref<2x8x128xf32, #tpu.memory_space<vmem>>, vector<2x8x128xf32>,
    %c0_23 = arith.constant 0 : index
    %c0_24 = arith.constant 0 : index
    %c0_25 = arith.constant 0 : index
    %10 = vector.load %arg1[%c0_23, %c0_24, %c0_25] : memref<8x8x128xf32, #tpu.memory_space<vmem>>, vector<8x8x128xf32>
    %11 = vector.shape_cast %10 : vector<8x8x128xf32> to vector<64x128xf32>
    %12 = arith.truncf %11 : vector<64x128xf32> to vector<64x128xbf16>
    %cst = arith.constant dense<0.000000e+00> : vector<64x512xf32>
    %13 = tpu.matmul %12, %0, %cst {dimension_numbers = #tpu.dot_dimension_numbers<[1], [0], [0], [1], [0, 0, 1, 1], [], []>} : vector<64x128xbf16>, vector<128x512xbf16>, vector<64x512xf32> -> vector<64x512xf32>
    %14 = vector.broadcast %4 : vector<1x512xf32> to vector<64x512xf32>
    %15 = arith.addf %13, %14 : vector<64x512xf32>
    %c0_26 = arith.constant 0 : index
    %c0_27 = arith.constant 0 : index
    %16 = vector.load %arg15[%c0_26, %c0_27] : memref<64x512xf32, #tpu.memory_space<vmem>>, vector<64x512xf32>
    tpu.vector_store %arg15[%c0_26, %c0_27], %15 {strides = array<i32>} : memref<64x512xf32, #tpu.memory_space<vmem>>, vector<64x512xf32>,
    %17 = vector.shape_cast %5 : vector<1x512xf32> to vector<1x512xf32>
    %18 = vector.broadcast %17 : vector<1x512xf32> to vector<8x512xf32>
    %c0_i32 = arith.constant 0 : i32
    %c8_i32 = arith.constant 8 : i32
    %19 = arith.muli %c0_i32, %c8_i32 : i32
    %20 = tpu.assume_multiple %19, 8 : i32
    %21 = arith.index_cast %20 : i32 to index
    %c0_28 = arith.constant 0 : index
    %22 = vector.load %arg15[%21, %c0_28] : memref<64x512xf32, #tpu.memory_space<vmem>>, vector<8x512xf32>
    %c0_29 = arith.constant 0 : index
    %c0_30 = arith.constant 0 : index
    %c0_31 = arith.constant 0 : index
    %23 = vector.load %arg16[%c0_29, %c0_30, %c0_31] : memref<2x8x128xf32, #tpu.memory_space<vmem>>, vector<1x8x128xf32>
    %24 = vector.shape_cast %23 : vector<1x8x128xf32> to vector<8x128xf32>
    %c0_32 = arith.constant 0 : index
    %c0_33 = arith.constant 0 : index
    %c0_34 = arith.constant 0 : index
    %25 = vector.load %arg17[%c0_32, %c0_33, %c0_34] : memref<2x8x128xf32, #tpu.memory_space<vmem>>, vector<1x8x128xf32>
    %26 = vector.shape_cast %25 : vector<1x8x128xf32> to vector<8x128xf32>
    %27 = arith.truncf %24 : vector<8x128xf32> to vector<8x128xbf16>
    %cst_35 = arith.constant dense<0.000000e+00> : vector<8x512xf32>
    %28 = tpu.matmul %27, %2, %cst_35 {dimension_numbers = #tpu.dot_dimension_numbers<[1], [0], [0], [1], [0, 0, 1, 1], [], []>} : vector<8x128xbf16>, vector<128x512xbf16>, vector<8x512xf32> -> vector<8x512xf32>
    %29 = arith.addf %22, %28 : vector<8x512xf32>
    %30 = vector.extract_strided_slice %29 {offsets = [0, 0], sizes = [8, 128], strides = [1, 1]} : vector<8x512xf32> to vector<8x128xf32>
    %31 = arith.negf %30 : vector<8x128xf32>
    %32 = math.exp %31 : vector<8x128xf32>
    %cst_36 = arith.constant 1.000000e+00 : f32
    %33 = vector.broadcast %cst_36 : f32 to vector<8x128xf32>
    %34 = arith.addf %33, %32 : vector<8x128xf32>
    %35 = arith.divf %33, %34 : vector<8x128xf32>
    %36 = vector.extract_strided_slice %29 {offsets = [0, 128], sizes = [8, 128], strides = [1, 1]} : vector<8x512xf32> to vector<8x128xf32>
    %37 = arith.negf %36 : vector<8x128xf32>
    %38 = math.exp %37 : vector<8x128xf32>
    %cst_37 = arith.constant 1.000000e+00 : f32
    %39 = vector.broadcast %cst_37 : f32 to vector<8x128xf32>
    %40 = arith.addf %39, %38 : vector<8x128xf32>
    %41 = arith.divf %39, %40 : vector<8x128xf32>
    %42 = vector.extract_strided_slice %29 {offsets = [0, 256], sizes = [8, 128], strides = [1, 1]} : vector<8x512xf32> to vector<8x128xf32>
    %43 = math.tanh %42 : vector<8x128xf32>
    %44 = vector.extract_strided_slice %29 {offsets = [0, 384], sizes = [8, 128], strides = [1, 1]} : vector<8x512xf32> to vector<8x128xf32>
    %45 = arith.negf %44 : vector<8x128xf32>
    %46 = math.exp %45 : vector<8x128xf32>
    %cst_38 = arith.constant 1.000000e+00 : f32
    %47 = vector.broadcast %cst_38 : f32 to vector<8x128xf32>
    %48 = arith.addf %47, %46 : vector<8x128xf32>
    %49 = arith.divf %47, %48 : vector<8x128xf32>
    %50 = arith.mulf %41, %26 : vector<8x128xf32>
    %51 = arith.mulf %35, %43 : vector<8x128xf32>
    %52 = arith.addf %50, %51 : vector<8x128xf32>
    %53 = math.tanh %52 : vector<8x128xf32>
    %54 = arith.mulf %49, %53 : vector<8x128xf32>
    %c0_39 = arith.constant 0 : index
    %c0_40 = arith.constant 0 : index
    %c0_41 = arith.constant 0 : index
    %55 = vector.load %arg16[%c0_39, %c0_40, %c0_41] : memref<2x8x128xf32, #tpu.memory_space<vmem>>, vector<1x8x128xf32>
    %56 = vector.shape_cast %55 : vector<1x8x128xf32> to vector<8x128xf32>
    %57 = vector.shape_cast %54 : vector<8x128xf32> to vector<1x8x128xf32>
    tpu.vector_store %arg16[%c0_39, %c0_40, %c0_41], %57 {strides = array<i32>} : memref<2x8x128xf32, #tpu.memory_space<vmem>>, vector<1x8x128xf32>,
    %c0_42 = arith.constant 0 : index
    %c0_43 = arith.constant 0 : index
    %c0_44 = arith.constant 0 : index
    %58 = vector.load %arg17[%c0_42, %c0_43, %c0_44] : memref<2x8x128xf32, #tpu.memory_space<vmem>>, vector<1x8x128xf32>
    %59 = vector.shape_cast %58 : vector<1x8x128xf32> to vector<8x128xf32>
    %60 = vector.shape_cast %52 : vector<8x128xf32> to vector<1x8x128xf32>
    tpu.vector_store %arg17[%c0_42, %c0_43, %c0_44], %60 {strides = array<i32>} : memref<2x8x128xf32, #tpu.memory_space<vmem>>, vector<1x8x128xf32>,
    %61 = arith.truncf %54 : vector<8x128xf32> to vector<8x128xbf16>
    %cst_45 = arith.constant dense<0.000000e+00> : vector<8x512xf32>
    %62 = tpu.matmul %61, %1, %cst_45 {dimension_numbers = #tpu.dot_dimension_numbers<[1], [0], [0], [1], [0, 0, 1, 1], [], []>} : vector<8x128xbf16>, vector<128x512xbf16>, vector<8x512xf32> -> vector<8x512xf32>
    %63 = arith.addf %62, %18 : vector<8x512xf32>
    %c1 = arith.constant 1 : index
    %c0_46 = arith.constant 0 : index
    %c0_47 = arith.constant 0 : index
    %64 = vector.load %arg16[%c1, %c0_46, %c0_47] : memref<2x8x128xf32, #tpu.memory_space<vmem>>, vector<1x8x128xf32>
    %65 = vector.shape_cast %64 : vector<1x8x128xf32> to vector<8x128xf32>
    %c1_48 = arith.constant 1 : index
    %c0_49 = arith.constant 0 : index
    %c0_50 = arith.constant 0 : index
    %66 = vector.load %arg17[%c1_48, %c0_49, %c0_50] : memref<2x8x128xf32, #tpu.memory_space<vmem>>, vector<1x8x128xf32>
    %67 = vector.shape_cast %66 : vector<1x8x128xf32> to vector<8x128xf32>
    %68 = arith.truncf %65 : vector<8x128xf32> to vector<8x128xbf16>
    %cst_51 = arith.constant dense<0.000000e+00> : vector<8x512xf32>
    %69 = tpu.matmul %68, %3, %cst_51 {dimension_numbers = #tpu.dot_dimension_numbers<[1], [0], [0], [1], [0, 0, 1, 1], [], []>} : vector<8x128xbf16>, vector<128x512xbf16>, vector<8x512xf32> -> vector<8x512xf32>
    %70 = arith.addf %63, %69 : vector<8x512xf32>
    %71 = vector.extract_strided_slice %70 {offsets = [0, 0], sizes = [8, 128], strides = [1, 1]} : vector<8x512xf32> to vector<8x128xf32>
    %72 = arith.negf %71 : vector<8x128xf32>
    %73 = math.exp %72 : vector<8x128xf32>
    %cst_52 = arith.constant 1.000000e+00 : f32
    %74 = vector.broadcast %cst_52 : f32 to vector<8x128xf32>
    %75 = arith.addf %74, %73 : vector<8x128xf32>
    %76 = arith.divf %74, %75 : vector<8x128xf32>
    %77 = vector.extract_strided_slice %70 {offsets = [0, 128], sizes = [8, 128], strides = [1, 1]} : vector<8x512xf32> to vector<8x128xf32>
    %78 = arith.negf %77 : vector<8x128xf32>
    %79 = math.exp %78 : vector<8x128xf32>
    %cst_53 = arith.constant 1.000000e+00 : f32
    %80 = vector.broadcast %cst_53 : f32 to vector<8x128xf32>
    %81 = arith.addf %80, %79 : vector<8x128xf32>
    %82 = arith.divf %80, %81 : vector<8x128xf32>
    %83 = vector.extract_strided_slice %70 {offsets = [0, 256], sizes = [8, 128], strides = [1, 1]} : vector<8x512xf32> to vector<8x128xf32>
    %84 = math.tanh %83 : vector<8x128xf32>
    %85 = vector.extract_strided_slice %70 {offsets = [0, 384], sizes = [8, 128], strides = [1, 1]} : vector<8x512xf32> to vector<8x128xf32>
    %86 = arith.negf %85 : vector<8x128xf32>
    %87 = math.exp %86 : vector<8x128xf32>
    %cst_54 = arith.constant 1.000000e+00 : f32
    %88 = vector.broadcast %cst_54 : f32 to vector<8x128xf32>
    %89 = arith.addf %88, %87 : vector<8x128xf32>
    %90 = arith.divf %88, %89 : vector<8x128xf32>
    %91 = arith.mulf %82, %67 : vector<8x128xf32>
    %92 = arith.mulf %76, %84 : vector<8x128xf32>
    %93 = arith.addf %91, %92 : vector<8x128xf32>
    %94 = math.tanh %93 : vector<8x128xf32>
    %95 = arith.mulf %90, %94 : vector<8x128xf32>
    %c1_55 = arith.constant 1 : index
    %c0_56 = arith.constant 0 : index
    %c0_57 = arith.constant 0 : index
    %96 = vector.load %arg16[%c1_55, %c0_56, %c0_57] : memref<2x8x128xf32, #tpu.memory_space<vmem>>, vector<1x8x128xf32>
    %97 = vector.shape_cast %96 : vector<1x8x128xf32> to vector<8x128xf32>
    %98 = vector.shape_cast %95 : vector<8x128xf32> to vector<1x8x128xf32>
    tpu.vector_store %arg16[%c1_55, %c0_56, %c0_57], %98 {strides = array<i32>} : memref<2x8x128xf32, #tpu.memory_space<vmem>>, vector<1x8x128xf32>,
    %c1_58 = arith.constant 1 : index
    %c0_59 = arith.constant 0 : index
    %c0_60 = arith.constant 0 : index
    %99 = vector.load %arg17[%c1_58, %c0_59, %c0_60] : memref<2x8x128xf32, #tpu.memory_space<vmem>>, vector<1x8x128xf32>
    %100 = vector.shape_cast %99 : vector<1x8x128xf32> to vector<8x128xf32>
    %101 = vector.shape_cast %93 : vector<8x128xf32> to vector<1x8x128xf32>
    tpu.vector_store %arg17[%c1_58, %c0_59, %c0_60], %101 {strides = array<i32>} : memref<2x8x128xf32, #tpu.memory_space<vmem>>, vector<1x8x128xf32>,
    %c1_i32 = arith.constant 1 : i32
    %c8_i32_61 = arith.constant 8 : i32
    %102 = arith.muli %c1_i32, %c8_i32_61 : i32
    %103 = tpu.assume_multiple %102, 8 : i32
    %104 = arith.index_cast %103 : i32 to index
    %c0_62 = arith.constant 0 : index
    %105 = vector.load %arg15[%104, %c0_62] : memref<64x512xf32, #tpu.memory_space<vmem>>, vector<8x512xf32>
    %c0_63 = arith.constant 0 : index
    %c0_64 = arith.constant 0 : index
    %c0_65 = arith.constant 0 : index
    %106 = vector.load %arg16[%c0_63, %c0_64, %c0_65] : memref<2x8x128xf32, #tpu.memory_space<vmem>>, vector<1x8x128xf32>
    %107 = vector.shape_cast %106 : vector<1x8x128xf32> to vector<8x128xf32>
    %c0_66 = arith.constant 0 : index
    %c0_67 = arith.constant 0 : index
    %c0_68 = arith.constant 0 : index
    %108 = vector.load %arg17[%c0_66, %c0_67, %c0_68] : memref<2x8x128xf32, #tpu.memory_space<vmem>>, vector<1x8x128xf32>
    %109 = vector.shape_cast %108 : vector<1x8x128xf32> to vector<8x128xf32>
    %110 = arith.truncf %107 : vector<8x128xf32> to vector<8x128xbf16>
    %cst_69 = arith.constant dense<0.000000e+00> : vector<8x512xf32>
    %111 = tpu.matmul %110, %2, %cst_69 {dimension_numbers = #tpu.dot_dimension_numbers<[1], [0], [0], [1], [0, 0, 1, 1], [], []>} : vector<8x128xbf16>, vector<128x512xbf16>, vector<8x512xf32> -> vector<8x512xf32>
    %112 = arith.addf %105, %111 : vector<8x512xf32>
    %113 = vector.extract_strided_slice %112 {offsets = [0, 0], sizes = [8, 128], strides = [1, 1]} : vector<8x512xf32> to vector<8x128xf32>
    %114 = arith.negf %113 : vector<8x128xf32>
    %115 = math.exp %114 : vector<8x128xf32>
    %cst_70 = arith.constant 1.000000e+00 : f32
    %116 = vector.broadcast %cst_70 : f32 to vector<8x128xf32>
    %117 = arith.addf %116, %115 : vector<8x128xf32>
    %118 = arith.divf %116, %117 : vector<8x128xf32>
    %119 = vector.extract_strided_slice %112 {offsets = [0, 128], sizes = [8, 128], strides = [1, 1]} : vector<8x512xf32> to vector<8x128xf32>
    %120 = arith.negf %119 : vector<8x128xf32>
    %121 = math.exp %120 : vector<8x128xf32>
    %cst_71 = arith.constant 1.000000e+00 : f32
    %122 = vector.broadcast %cst_71 : f32 to vector<8x128xf32>
    %123 = arith.addf %122, %121 : vector<8x128xf32>
    %124 = arith.divf %122, %123 : vector<8x128xf32>
    %125 = vector.extract_strided_slice %112 {offsets = [0, 256], sizes = [8, 128], strides = [1, 1]} : vector<8x512xf32> to vector<8x128xf32>
    %126 = math.tanh %125 : vector<8x128xf32>
    %127 = vector.extract_strided_slice %112 {offsets = [0, 384], sizes = [8, 128], strides = [1, 1]} : vector<8x512xf32> to vector<8x128xf32>
    %128 = arith.negf %127 : vector<8x128xf32>
    %129 = math.exp %128 : vector<8x128xf32>
    %cst_72 = arith.constant 1.000000e+00 : f32
    %130 = vector.broadcast %cst_72 : f32 to vector<8x128xf32>
    %131 = arith.addf %130, %129 : vector<8x128xf32>
    %132 = arith.divf %130, %131 : vector<8x128xf32>
    %133 = arith.mulf %124, %109 : vector<8x128xf32>
    %134 = arith.mulf %118, %126 : vector<8x128xf32>
    %135 = arith.addf %133, %134 : vector<8x128xf32>
    %136 = math.tanh %135 : vector<8x128xf32>
    %137 = arith.mulf %132, %136 : vector<8x128xf32>
    %c0_73 = arith.constant 0 : index
    %c0_74 = arith.constant 0 : index
    %c0_75 = arith.constant 0 : index
    %138 = vector.load %arg16[%c0_73, %c0_74, %c0_75] : memref<2x8x128xf32, #tpu.memory_space<vmem>>, vector<1x8x128xf32>
    %139 = vector.shape_cast %138 : vector<1x8x128xf32> to vector<8x128xf32>
    %140 = vector.shape_cast %137 : vector<8x128xf32> to vector<1x8x128xf32>
    tpu.vector_store %arg16[%c0_73, %c0_74, %c0_75], %140 {strides = array<i32>} : memref<2x8x128xf32, #tpu.memory_space<vmem>>, vector<1x8x128xf32>,
    %c0_76 = arith.constant 0 : index
    %c0_77 = arith.constant 0 : index
    %c0_78 = arith.constant 0 : index
    %141 = vector.load %arg17[%c0_76, %c0_77, %c0_78] : memref<2x8x128xf32, #tpu.memory_space<vmem>>, vector<1x8x128xf32>
    %142 = vector.shape_cast %141 : vector<1x8x128xf32> to vector<8x128xf32>
    %143 = vector.shape_cast %135 : vector<8x128xf32> to vector<1x8x128xf32>
    tpu.vector_store %arg17[%c0_76, %c0_77, %c0_78], %143 {strides = array<i32>} : memref<2x8x128xf32, #tpu.memory_space<vmem>>, vector<1x8x128xf32>,
    %144 = arith.truncf %137 : vector<8x128xf32> to vector<8x128xbf16>
    %cst_79 = arith.constant dense<0.000000e+00> : vector<8x512xf32>
    %145 = tpu.matmul %144, %1, %cst_79 {dimension_numbers = #tpu.dot_dimension_numbers<[1], [0], [0], [1], [0, 0, 1, 1], [], []>} : vector<8x128xbf16>, vector<128x512xbf16>, vector<8x512xf32> -> vector<8x512xf32>
    %146 = arith.addf %145, %18 : vector<8x512xf32>
    %c1_80 = arith.constant 1 : index
    %c0_81 = arith.constant 0 : index
    %c0_82 = arith.constant 0 : index
    %147 = vector.load %arg16[%c1_80, %c0_81, %c0_82] : memref<2x8x128xf32, #tpu.memory_space<vmem>>, vector<1x8x128xf32>
    %148 = vector.shape_cast %147 : vector<1x8x128xf32> to vector<8x128xf32>
    %c1_83 = arith.constant 1 : index
    %c0_84 = arith.constant 0 : index
    %c0_85 = arith.constant 0 : index
    %149 = vector.load %arg17[%c1_83, %c0_84, %c0_85] : memref<2x8x128xf32, #tpu.memory_space<vmem>>, vector<1x8x128xf32>
    %150 = vector.shape_cast %149 : vector<1x8x128xf32> to vector<8x128xf32>
    %151 = arith.truncf %148 : vector<8x128xf32> to vector<8x128xbf16>
    %cst_86 = arith.constant dense<0.000000e+00> : vector<8x512xf32>
    %152 = tpu.matmul %151, %3, %cst_86 {dimension_numbers = #tpu.dot_dimension_numbers<[1], [0], [0], [1], [0, 0, 1, 1], [], []>} : vector<8x128xbf16>, vector<128x512xbf16>, vector<8x512xf32> -> vector<8x512xf32>
    %153 = arith.addf %146, %152 : vector<8x512xf32>
    %154 = vector.extract_strided_slice %153 {offsets = [0, 0], sizes = [8, 128], strides = [1, 1]} : vector<8x512xf32> to vector<8x128xf32>
    %155 = arith.negf %154 : vector<8x128xf32>
    %156 = math.exp %155 : vector<8x128xf32>
    %cst_87 = arith.constant 1.000000e+00 : f32
    %157 = vector.broadcast %cst_87 : f32 to vector<8x128xf32>
    %158 = arith.addf %157, %156 : vector<8x128xf32>
    %159 = arith.divf %157, %158 : vector<8x128xf32>
    %160 = vector.extract_strided_slice %153 {offsets = [0, 128], sizes = [8, 128], strides = [1, 1]} : vector<8x512xf32> to vector<8x128xf32>
    %161 = arith.negf %160 : vector<8x128xf32>
    %162 = math.exp %161 : vector<8x128xf32>
    %cst_88 = arith.constant 1.000000e+00 : f32
    %163 = vector.broadcast %cst_88 : f32 to vector<8x128xf32>
    %164 = arith.addf %163, %162 : vector<8x128xf32>
    %165 = arith.divf %163, %164 : vector<8x128xf32>
    %166 = vector.extract_strided_slice %153 {offsets = [0, 256], sizes = [8, 128], strides = [1, 1]} : vector<8x512xf32> to vector<8x128xf32>
    %167 = math.tanh %166 : vector<8x128xf32>
    %168 = vector.extract_strided_slice %153 {offsets = [0, 384], sizes = [8, 128], strides = [1, 1]} : vector<8x512xf32> to vector<8x128xf32>
    %169 = arith.negf %168 : vector<8x128xf32>
    %170 = math.exp %169 : vector<8x128xf32>
    %cst_89 = arith.constant 1.000000e+00 : f32
    %171 = vector.broadcast %cst_89 : f32 to vector<8x128xf32>
    %172 = arith.addf %171, %170 : vector<8x128xf32>
    %173 = arith.divf %171, %172 : vector<8x128xf32>
    %174 = arith.mulf %165, %150 : vector<8x128xf32>
    %175 = arith.mulf %159, %167 : vector<8x128xf32>
    %176 = arith.addf %174, %175 : vector<8x128xf32>
    %177 = math.tanh %176 : vector<8x128xf32>
    %178 = arith.mulf %173, %177 : vector<8x128xf32>
    %c1_90 = arith.constant 1 : index
    %c0_91 = arith.constant 0 : index
    %c0_92 = arith.constant 0 : index
    %179 = vector.load %arg16[%c1_90, %c0_91, %c0_92] : memref<2x8x128xf32, #tpu.memory_space<vmem>>, vector<1x8x128xf32>
    %180 = vector.shape_cast %179 : vector<1x8x128xf32> to vector<8x128xf32>
    %181 = vector.shape_cast %178 : vector<8x128xf32> to vector<1x8x128xf32>
    tpu.vector_store %arg16[%c1_90, %c0_91, %c0_92], %181 {strides = array<i32>} : memref<2x8x128xf32, #tpu.memory_space<vmem>>, vector<1x8x128xf32>,
    %c1_93 = arith.constant 1 : index
    %c0_94 = arith.constant 0 : index
    %c0_95 = arith.constant 0 : index
    %182 = vector.load %arg17[%c1_93, %c0_94, %c0_95] : memref<2x8x128xf32, #tpu.memory_space<vmem>>, vector<1x8x128xf32>
    %183 = vector.shape_cast %182 : vector<1x8x128xf32> to vector<8x128xf32>
    %184 = vector.shape_cast %176 : vector<8x128xf32> to vector<1x8x128xf32>
    tpu.vector_store %arg17[%c1_93, %c0_94, %c0_95], %184 {strides = array<i32>} : memref<2x8x128xf32, #tpu.memory_space<vmem>>, vector<1x8x128xf32>,
    %c2_i32 = arith.constant 2 : i32
    %c8_i32_96 = arith.constant 8 : i32
    %185 = arith.muli %c2_i32, %c8_i32_96 : i32
    %186 = tpu.assume_multiple %185, 8 : i32
    %187 = arith.index_cast %186 : i32 to index
    %c0_97 = arith.constant 0 : index
    %188 = vector.load %arg15[%187, %c0_97] : memref<64x512xf32, #tpu.memory_space<vmem>>, vector<8x512xf32>
    %c0_98 = arith.constant 0 : index
    %c0_99 = arith.constant 0 : index
    %c0_100 = arith.constant 0 : index
    %189 = vector.load %arg16[%c0_98, %c0_99, %c0_100] : memref<2x8x128xf32, #tpu.memory_space<vmem>>, vector<1x8x128xf32>
    %190 = vector.shape_cast %189 : vector<1x8x128xf32> to vector<8x128xf32>
    %c0_101 = arith.constant 0 : index
    %c0_102 = arith.constant 0 : index
    %c0_103 = arith.constant 0 : index
    %191 = vector.load %arg17[%c0_101, %c0_102, %c0_103] : memref<2x8x128xf32, #tpu.memory_space<vmem>>, vector<1x8x128xf32>
    %192 = vector.shape_cast %191 : vector<1x8x128xf32> to vector<8x128xf32>
    %193 = arith.truncf %190 : vector<8x128xf32> to vector<8x128xbf16>
    %cst_104 = arith.constant dense<0.000000e+00> : vector<8x512xf32>
    %194 = tpu.matmul %193, %2, %cst_104 {dimension_numbers = #tpu.dot_dimension_numbers<[1], [0], [0], [1], [0, 0, 1, 1], [], []>} : vector<8x128xbf16>, vector<128x512xbf16>, vector<8x512xf32> -> vector<8x512xf32>
    %195 = arith.addf %188, %194 : vector<8x512xf32>
    %196 = vector.extract_strided_slice %195 {offsets = [0, 0], sizes = [8, 128], strides = [1, 1]} : vector<8x512xf32> to vector<8x128xf32>
    %197 = arith.negf %196 : vector<8x128xf32>
    %198 = math.exp %197 : vector<8x128xf32>
    %cst_105 = arith.constant 1.000000e+00 : f32
    %199 = vector.broadcast %cst_105 : f32 to vector<8x128xf32>
    %200 = arith.addf %199, %198 : vector<8x128xf32>
    %201 = arith.divf %199, %200 : vector<8x128xf32>
    %202 = vector.extract_strided_slice %195 {offsets = [0, 128], sizes = [8, 128], strides = [1, 1]} : vector<8x512xf32> to vector<8x128xf32>
    %203 = arith.negf %202 : vector<8x128xf32>
    %204 = math.exp %203 : vector<8x128xf32>
    %cst_106 = arith.constant 1.000000e+00 : f32
    %205 = vector.broadcast %cst_106 : f32 to vector<8x128xf32>
    %206 = arith.addf %205, %204 : vector<8x128xf32>
    %207 = arith.divf %205, %206 : vector<8x128xf32>
    %208 = vector.extract_strided_slice %195 {offsets = [0, 256], sizes = [8, 128], strides = [1, 1]} : vector<8x512xf32> to vector<8x128xf32>
    %209 = math.tanh %208 : vector<8x128xf32>
    %210 = vector.extract_strided_slice %195 {offsets = [0, 384], sizes = [8, 128], strides = [1, 1]} : vector<8x512xf32> to vector<8x128xf32>
    %211 = arith.negf %210 : vector<8x128xf32>
    %212 = math.exp %211 : vector<8x128xf32>
    %cst_107 = arith.constant 1.000000e+00 : f32
    %213 = vector.broadcast %cst_107 : f32 to vector<8x128xf32>
    %214 = arith.addf %213, %212 : vector<8x128xf32>
    %215 = arith.divf %213, %214 : vector<8x128xf32>
    %216 = arith.mulf %207, %192 : vector<8x128xf32>
    %217 = arith.mulf %201, %209 : vector<8x128xf32>
    %218 = arith.addf %216, %217 : vector<8x128xf32>
    %219 = math.tanh %218 : vector<8x128xf32>
    %220 = arith.mulf %215, %219 : vector<8x128xf32>
    %c0_108 = arith.constant 0 : index
    %c0_109 = arith.constant 0 : index
    %c0_110 = arith.constant 0 : index
    %221 = vector.load %arg16[%c0_108, %c0_109, %c0_110] : memref<2x8x128xf32, #tpu.memory_space<vmem>>, vector<1x8x128xf32>
    %222 = vector.shape_cast %221 : vector<1x8x128xf32> to vector<8x128xf32>
    %223 = vector.shape_cast %220 : vector<8x128xf32> to vector<1x8x128xf32>
    tpu.vector_store %arg16[%c0_108, %c0_109, %c0_110], %223 {strides = array<i32>} : memref<2x8x128xf32, #tpu.memory_space<vmem>>, vector<1x8x128xf32>,
    %c0_111 = arith.constant 0 : index
    %c0_112 = arith.constant 0 : index
    %c0_113 = arith.constant 0 : index
    %224 = vector.load %arg17[%c0_111, %c0_112, %c0_113] : memref<2x8x128xf32, #tpu.memory_space<vmem>>, vector<1x8x128xf32>
    %225 = vector.shape_cast %224 : vector<1x8x128xf32> to vector<8x128xf32>
    %226 = vector.shape_cast %218 : vector<8x128xf32> to vector<1x8x128xf32>
    tpu.vector_store %arg17[%c0_111, %c0_112, %c0_113], %226 {strides = array<i32>} : memref<2x8x128xf32, #tpu.memory_space<vmem>>, vector<1x8x128xf32>,
    %227 = arith.truncf %220 : vector<8x128xf32> to vector<8x128xbf16>
    %cst_114 = arith.constant dense<0.000000e+00> : vector<8x512xf32>
    %228 = tpu.matmul %227, %1, %cst_114 {dimension_numbers = #tpu.dot_dimension_numbers<[1], [0], [0], [1], [0, 0, 1, 1], [], []>} : vector<8x128xbf16>, vector<128x512xbf16>, vector<8x512xf32> -> vector<8x512xf32>
    %229 = arith.addf %228, %18 : vector<8x512xf32>
    %c1_115 = arith.constant 1 : index
    %c0_116 = arith.constant 0 : index
    %c0_117 = arith.constant 0 : index
    %230 = vector.load %arg16[%c1_115, %c0_116, %c0_117] : memref<2x8x128xf32, #tpu.memory_space<vmem>>, vector<1x8x128xf32>
    %231 = vector.shape_cast %230 : vector<1x8x128xf32> to vector<8x128xf32>
    %c1_118 = arith.constant 1 : index
    %c0_119 = arith.constant 0 : index
    %c0_120 = arith.constant 0 : index
    %232 = vector.load %arg17[%c1_118, %c0_119, %c0_120] : memref<2x8x128xf32, #tpu.memory_space<vmem>>, vector<1x8x128xf32>
    %233 = vector.shape_cast %232 : vector<1x8x128xf32> to vector<8x128xf32>
    %234 = arith.truncf %231 : vector<8x128xf32> to vector<8x128xbf16>
    %cst_121 = arith.constant dense<0.000000e+00> : vector<8x512xf32>
    %235 = tpu.matmul %234, %3, %cst_121 {dimension_numbers = #tpu.dot_dimension_numbers<[1], [0], [0], [1], [0, 0, 1, 1], [], []>} : vector<8x128xbf16>, vector<128x512xbf16>, vector<8x512xf32> -> vector<8x512xf32>
    %236 = arith.addf %229, %235 : vector<8x512xf32>
    %237 = vector.extract_strided_slice %236 {offsets = [0, 0], sizes = [8, 128], strides = [1, 1]} : vector<8x512xf32> to vector<8x128xf32>
    %238 = arith.negf %237 : vector<8x128xf32>
    %239 = math.exp %238 : vector<8x128xf32>
    %cst_122 = arith.constant 1.000000e+00 : f32
    %240 = vector.broadcast %cst_122 : f32 to vector<8x128xf32>
    %241 = arith.addf %240, %239 : vector<8x128xf32>
    %242 = arith.divf %240, %241 : vector<8x128xf32>
    %243 = vector.extract_strided_slice %236 {offsets = [0, 128], sizes = [8, 128], strides = [1, 1]} : vector<8x512xf32> to vector<8x128xf32>
    %244 = arith.negf %243 : vector<8x128xf32>
    %245 = math.exp %244 : vector<8x128xf32>
    %cst_123 = arith.constant 1.000000e+00 : f32
    %246 = vector.broadcast %cst_123 : f32 to vector<8x128xf32>
    %247 = arith.addf %246, %245 : vector<8x128xf32>
    %248 = arith.divf %246, %247 : vector<8x128xf32>
    %249 = vector.extract_strided_slice %236 {offsets = [0, 256], sizes = [8, 128], strides = [1, 1]} : vector<8x512xf32> to vector<8x128xf32>
    %250 = math.tanh %249 : vector<8x128xf32>
    %251 = vector.extract_strided_slice %236 {offsets = [0, 384], sizes = [8, 128], strides = [1, 1]} : vector<8x512xf32> to vector<8x128xf32>
    %252 = arith.negf %251 : vector<8x128xf32>
    %253 = math.exp %252 : vector<8x128xf32>
    %cst_124 = arith.constant 1.000000e+00 : f32
    %254 = vector.broadcast %cst_124 : f32 to vector<8x128xf32>
    %255 = arith.addf %254, %253 : vector<8x128xf32>
    %256 = arith.divf %254, %255 : vector<8x128xf32>
    %257 = arith.mulf %248, %233 : vector<8x128xf32>
    %258 = arith.mulf %242, %250 : vector<8x128xf32>
    %259 = arith.addf %257, %258 : vector<8x128xf32>
    %260 = math.tanh %259 : vector<8x128xf32>
    %261 = arith.mulf %256, %260 : vector<8x128xf32>
    %c1_125 = arith.constant 1 : index
    %c0_126 = arith.constant 0 : index
    %c0_127 = arith.constant 0 : index
    %262 = vector.load %arg16[%c1_125, %c0_126, %c0_127] : memref<2x8x128xf32, #tpu.memory_space<vmem>>, vector<1x8x128xf32>
    %263 = vector.shape_cast %262 : vector<1x8x128xf32> to vector<8x128xf32>
    %264 = vector.shape_cast %261 : vector<8x128xf32> to vector<1x8x128xf32>
    tpu.vector_store %arg16[%c1_125, %c0_126, %c0_127], %264 {strides = array<i32>} : memref<2x8x128xf32, #tpu.memory_space<vmem>>, vector<1x8x128xf32>,
    %c1_128 = arith.constant 1 : index
    %c0_129 = arith.constant 0 : index
    %c0_130 = arith.constant 0 : index
    %265 = vector.load %arg17[%c1_128, %c0_129, %c0_130] : memref<2x8x128xf32, #tpu.memory_space<vmem>>, vector<1x8x128xf32>
    %266 = vector.shape_cast %265 : vector<1x8x128xf32> to vector<8x128xf32>
    %267 = vector.shape_cast %259 : vector<8x128xf32> to vector<1x8x128xf32>
    tpu.vector_store %arg17[%c1_128, %c0_129, %c0_130], %267 {strides = array<i32>} : memref<2x8x128xf32, #tpu.memory_space<vmem>>, vector<1x8x128xf32>,
    %c3_i32 = arith.constant 3 : i32
    %c8_i32_131 = arith.constant 8 : i32
    %268 = arith.muli %c3_i32, %c8_i32_131 : i32
    %269 = tpu.assume_multiple %268, 8 : i32
    %270 = arith.index_cast %269 : i32 to index
    %c0_132 = arith.constant 0 : index
    %271 = vector.load %arg15[%270, %c0_132] : memref<64x512xf32, #tpu.memory_space<vmem>>, vector<8x512xf32>
    %c0_133 = arith.constant 0 : index
    %c0_134 = arith.constant 0 : index
    %c0_135 = arith.constant 0 : index
    %272 = vector.load %arg16[%c0_133, %c0_134, %c0_135] : memref<2x8x128xf32, #tpu.memory_space<vmem>>, vector<1x8x128xf32>
    %273 = vector.shape_cast %272 : vector<1x8x128xf32> to vector<8x128xf32>
    %c0_136 = arith.constant 0 : index
    %c0_137 = arith.constant 0 : index
    %c0_138 = arith.constant 0 : index
    %274 = vector.load %arg17[%c0_136, %c0_137, %c0_138] : memref<2x8x128xf32, #tpu.memory_space<vmem>>, vector<1x8x128xf32>
    %275 = vector.shape_cast %274 : vector<1x8x128xf32> to vector<8x128xf32>
    %276 = arith.truncf %273 : vector<8x128xf32> to vector<8x128xbf16>
    %cst_139 = arith.constant dense<0.000000e+00> : vector<8x512xf32>
    %277 = tpu.matmul %276, %2, %cst_139 {dimension_numbers = #tpu.dot_dimension_numbers<[1], [0], [0], [1], [0, 0, 1, 1], [], []>} : vector<8x128xbf16>, vector<128x512xbf16>, vector<8x512xf32> -> vector<8x512xf32>
    %278 = arith.addf %271, %277 : vector<8x512xf32>
    %279 = vector.extract_strided_slice %278 {offsets = [0, 0], sizes = [8, 128], strides = [1, 1]} : vector<8x512xf32> to vector<8x128xf32>
    %280 = arith.negf %279 : vector<8x128xf32>
    %281 = math.exp %280 : vector<8x128xf32>
    %cst_140 = arith.constant 1.000000e+00 : f32
    %282 = vector.broadcast %cst_140 : f32 to vector<8x128xf32>
    %283 = arith.addf %282, %281 : vector<8x128xf32>
    %284 = arith.divf %282, %283 : vector<8x128xf32>
    %285 = vector.extract_strided_slice %278 {offsets = [0, 128], sizes = [8, 128], strides = [1, 1]} : vector<8x512xf32> to vector<8x128xf32>
    %286 = arith.negf %285 : vector<8x128xf32>
    %287 = math.exp %286 : vector<8x128xf32>
    %cst_141 = arith.constant 1.000000e+00 : f32
    %288 = vector.broadcast %cst_141 : f32 to vector<8x128xf32>
    %289 = arith.addf %288, %287 : vector<8x128xf32>
    %290 = arith.divf %288, %289 : vector<8x128xf32>
    %291 = vector.extract_strided_slice %278 {offsets = [0, 256], sizes = [8, 128], strides = [1, 1]} : vector<8x512xf32> to vector<8x128xf32>
    %292 = math.tanh %291 : vector<8x128xf32>
    %293 = vector.extract_strided_slice %278 {offsets = [0, 384], sizes = [8, 128], strides = [1, 1]} : vector<8x512xf32> to vector<8x128xf32>
    %294 = arith.negf %293 : vector<8x128xf32>
    %295 = math.exp %294 : vector<8x128xf32>
    %cst_142 = arith.constant 1.000000e+00 : f32
    %296 = vector.broadcast %cst_142 : f32 to vector<8x128xf32>
    %297 = arith.addf %296, %295 : vector<8x128xf32>
    %298 = arith.divf %296, %297 : vector<8x128xf32>
    %299 = arith.mulf %290, %275 : vector<8x128xf32>
    %300 = arith.mulf %284, %292 : vector<8x128xf32>
    %301 = arith.addf %299, %300 : vector<8x128xf32>
    %302 = math.tanh %301 : vector<8x128xf32>
    %303 = arith.mulf %298, %302 : vector<8x128xf32>
    %c0_143 = arith.constant 0 : index
    %c0_144 = arith.constant 0 : index
    %c0_145 = arith.constant 0 : index
    %304 = vector.load %arg16[%c0_143, %c0_144, %c0_145] : memref<2x8x128xf32, #tpu.memory_space<vmem>>, vector<1x8x128xf32>
    %305 = vector.shape_cast %304 : vector<1x8x128xf32> to vector<8x128xf32>
    %306 = vector.shape_cast %303 : vector<8x128xf32> to vector<1x8x128xf32>
    tpu.vector_store %arg16[%c0_143, %c0_144, %c0_145], %306 {strides = array<i32>} : memref<2x8x128xf32, #tpu.memory_space<vmem>>, vector<1x8x128xf32>,
    %c0_146 = arith.constant 0 : index
    %c0_147 = arith.constant 0 : index
    %c0_148 = arith.constant 0 : index
    %307 = vector.load %arg17[%c0_146, %c0_147, %c0_148] : memref<2x8x128xf32, #tpu.memory_space<vmem>>, vector<1x8x128xf32>
    %308 = vector.shape_cast %307 : vector<1x8x128xf32> to vector<8x128xf32>
    %309 = vector.shape_cast %301 : vector<8x128xf32> to vector<1x8x128xf32>
    tpu.vector_store %arg17[%c0_146, %c0_147, %c0_148], %309 {strides = array<i32>} : memref<2x8x128xf32, #tpu.memory_space<vmem>>, vector<1x8x128xf32>,
    %310 = arith.truncf %303 : vector<8x128xf32> to vector<8x128xbf16>
    %cst_149 = arith.constant dense<0.000000e+00> : vector<8x512xf32>
    %311 = tpu.matmul %310, %1, %cst_149 {dimension_numbers = #tpu.dot_dimension_numbers<[1], [0], [0], [1], [0, 0, 1, 1], [], []>} : vector<8x128xbf16>, vector<128x512xbf16>, vector<8x512xf32> -> vector<8x512xf32>
    %312 = arith.addf %311, %18 : vector<8x512xf32>
    %c1_150 = arith.constant 1 : index
    %c0_151 = arith.constant 0 : index
    %c0_152 = arith.constant 0 : index
    %313 = vector.load %arg16[%c1_150, %c0_151, %c0_152] : memref<2x8x128xf32, #tpu.memory_space<vmem>>, vector<1x8x128xf32>
    %314 = vector.shape_cast %313 : vector<1x8x128xf32> to vector<8x128xf32>
    %c1_153 = arith.constant 1 : index
    %c0_154 = arith.constant 0 : index
    %c0_155 = arith.constant 0 : index
    %315 = vector.load %arg17[%c1_153, %c0_154, %c0_155] : memref<2x8x128xf32, #tpu.memory_space<vmem>>, vector<1x8x128xf32>
    %316 = vector.shape_cast %315 : vector<1x8x128xf32> to vector<8x128xf32>
    %317 = arith.truncf %314 : vector<8x128xf32> to vector<8x128xbf16>
    %cst_156 = arith.constant dense<0.000000e+00> : vector<8x512xf32>
    %318 = tpu.matmul %317, %3, %cst_156 {dimension_numbers = #tpu.dot_dimension_numbers<[1], [0], [0], [1], [0, 0, 1, 1], [], []>} : vector<8x128xbf16>, vector<128x512xbf16>, vector<8x512xf32> -> vector<8x512xf32>
    %319 = arith.addf %312, %318 : vector<8x512xf32>
    %320 = vector.extract_strided_slice %319 {offsets = [0, 0], sizes = [8, 128], strides = [1, 1]} : vector<8x512xf32> to vector<8x128xf32>
    %321 = arith.negf %320 : vector<8x128xf32>
    %322 = math.exp %321 : vector<8x128xf32>
    %cst_157 = arith.constant 1.000000e+00 : f32
    %323 = vector.broadcast %cst_157 : f32 to vector<8x128xf32>
    %324 = arith.addf %323, %322 : vector<8x128xf32>
    %325 = arith.divf %323, %324 : vector<8x128xf32>
    %326 = vector.extract_strided_slice %319 {offsets = [0, 128], sizes = [8, 128], strides = [1, 1]} : vector<8x512xf32> to vector<8x128xf32>
    %327 = arith.negf %326 : vector<8x128xf32>
    %328 = math.exp %327 : vector<8x128xf32>
    %cst_158 = arith.constant 1.000000e+00 : f32
    %329 = vector.broadcast %cst_158 : f32 to vector<8x128xf32>
    %330 = arith.addf %329, %328 : vector<8x128xf32>
    %331 = arith.divf %329, %330 : vector<8x128xf32>
    %332 = vector.extract_strided_slice %319 {offsets = [0, 256], sizes = [8, 128], strides = [1, 1]} : vector<8x512xf32> to vector<8x128xf32>
    %333 = math.tanh %332 : vector<8x128xf32>
    %334 = vector.extract_strided_slice %319 {offsets = [0, 384], sizes = [8, 128], strides = [1, 1]} : vector<8x512xf32> to vector<8x128xf32>
    %335 = arith.negf %334 : vector<8x128xf32>
    %336 = math.exp %335 : vector<8x128xf32>
    %cst_159 = arith.constant 1.000000e+00 : f32
    %337 = vector.broadcast %cst_159 : f32 to vector<8x128xf32>
    %338 = arith.addf %337, %336 : vector<8x128xf32>
    %339 = arith.divf %337, %338 : vector<8x128xf32>
    %340 = arith.mulf %331, %316 : vector<8x128xf32>
    %341 = arith.mulf %325, %333 : vector<8x128xf32>
    %342 = arith.addf %340, %341 : vector<8x128xf32>
    %343 = math.tanh %342 : vector<8x128xf32>
    %344 = arith.mulf %339, %343 : vector<8x128xf32>
    %c1_160 = arith.constant 1 : index
    %c0_161 = arith.constant 0 : index
    %c0_162 = arith.constant 0 : index
    %345 = vector.load %arg16[%c1_160, %c0_161, %c0_162] : memref<2x8x128xf32, #tpu.memory_space<vmem>>, vector<1x8x128xf32>
    %346 = vector.shape_cast %345 : vector<1x8x128xf32> to vector<8x128xf32>
    %347 = vector.shape_cast %344 : vector<8x128xf32> to vector<1x8x128xf32>
    tpu.vector_store %arg16[%c1_160, %c0_161, %c0_162], %347 {strides = array<i32>} : memref<2x8x128xf32, #tpu.memory_space<vmem>>, vector<1x8x128xf32>,
    %c1_163 = arith.constant 1 : index
    %c0_164 = arith.constant 0 : index
    %c0_165 = arith.constant 0 : index
    %348 = vector.load %arg17[%c1_163, %c0_164, %c0_165] : memref<2x8x128xf32, #tpu.memory_space<vmem>>, vector<1x8x128xf32>
    %349 = vector.shape_cast %348 : vector<1x8x128xf32> to vector<8x128xf32>
    %350 = vector.shape_cast %342 : vector<8x128xf32> to vector<1x8x128xf32>
    tpu.vector_store %arg17[%c1_163, %c0_164, %c0_165], %350 {strides = array<i32>} : memref<2x8x128xf32, #tpu.memory_space<vmem>>, vector<1x8x128xf32>,
    %c4_i32 = arith.constant 4 : i32
    %c8_i32_166 = arith.constant 8 : i32
    %351 = arith.muli %c4_i32, %c8_i32_166 : i32
    %352 = tpu.assume_multiple %351, 8 : i32
    %353 = arith.index_cast %352 : i32 to index
    %c0_167 = arith.constant 0 : index
    %354 = vector.load %arg15[%353, %c0_167] : memref<64x512xf32, #tpu.memory_space<vmem>>, vector<8x512xf32>
    %c0_168 = arith.constant 0 : index
    %c0_169 = arith.constant 0 : index
    %c0_170 = arith.constant 0 : index
    %355 = vector.load %arg16[%c0_168, %c0_169, %c0_170] : memref<2x8x128xf32, #tpu.memory_space<vmem>>, vector<1x8x128xf32>
    %356 = vector.shape_cast %355 : vector<1x8x128xf32> to vector<8x128xf32>
    %c0_171 = arith.constant 0 : index
    %c0_172 = arith.constant 0 : index
    %c0_173 = arith.constant 0 : index
    %357 = vector.load %arg17[%c0_171, %c0_172, %c0_173] : memref<2x8x128xf32, #tpu.memory_space<vmem>>, vector<1x8x128xf32>
    %358 = vector.shape_cast %357 : vector<1x8x128xf32> to vector<8x128xf32>
    %359 = arith.truncf %356 : vector<8x128xf32> to vector<8x128xbf16>
    %cst_174 = arith.constant dense<0.000000e+00> : vector<8x512xf32>
    %360 = tpu.matmul %359, %2, %cst_174 {dimension_numbers = #tpu.dot_dimension_numbers<[1], [0], [0], [1], [0, 0, 1, 1], [], []>} : vector<8x128xbf16>, vector<128x512xbf16>, vector<8x512xf32> -> vector<8x512xf32>
    %361 = arith.addf %354, %360 : vector<8x512xf32>
    %362 = vector.extract_strided_slice %361 {offsets = [0, 0], sizes = [8, 128], strides = [1, 1]} : vector<8x512xf32> to vector<8x128xf32>
    %363 = arith.negf %362 : vector<8x128xf32>
    %364 = math.exp %363 : vector<8x128xf32>
    %cst_175 = arith.constant 1.000000e+00 : f32
    %365 = vector.broadcast %cst_175 : f32 to vector<8x128xf32>
    %366 = arith.addf %365, %364 : vector<8x128xf32>
    %367 = arith.divf %365, %366 : vector<8x128xf32>
    %368 = vector.extract_strided_slice %361 {offsets = [0, 128], sizes = [8, 128], strides = [1, 1]} : vector<8x512xf32> to vector<8x128xf32>
    %369 = arith.negf %368 : vector<8x128xf32>
    %370 = math.exp %369 : vector<8x128xf32>
    %cst_176 = arith.constant 1.000000e+00 : f32
    %371 = vector.broadcast %cst_176 : f32 to vector<8x128xf32>
    %372 = arith.addf %371, %370 : vector<8x128xf32>
    %373 = arith.divf %371, %372 : vector<8x128xf32>
    %374 = vector.extract_strided_slice %361 {offsets = [0, 256], sizes = [8, 128], strides = [1, 1]} : vector<8x512xf32> to vector<8x128xf32>
    %375 = math.tanh %374 : vector<8x128xf32>
    %376 = vector.extract_strided_slice %361 {offsets = [0, 384], sizes = [8, 128], strides = [1, 1]} : vector<8x512xf32> to vector<8x128xf32>
    %377 = arith.negf %376 : vector<8x128xf32>
    %378 = math.exp %377 : vector<8x128xf32>
    %cst_177 = arith.constant 1.000000e+00 : f32
    %379 = vector.broadcast %cst_177 : f32 to vector<8x128xf32>
    %380 = arith.addf %379, %378 : vector<8x128xf32>
    %381 = arith.divf %379, %380 : vector<8x128xf32>
    %382 = arith.mulf %373, %358 : vector<8x128xf32>
    %383 = arith.mulf %367, %375 : vector<8x128xf32>
    %384 = arith.addf %382, %383 : vector<8x128xf32>
    %385 = math.tanh %384 : vector<8x128xf32>
    %386 = arith.mulf %381, %385 : vector<8x128xf32>
    %c0_178 = arith.constant 0 : index
    %c0_179 = arith.constant 0 : index
    %c0_180 = arith.constant 0 : index
    %387 = vector.load %arg16[%c0_178, %c0_179, %c0_180] : memref<2x8x128xf32, #tpu.memory_space<vmem>>, vector<1x8x128xf32>
    %388 = vector.shape_cast %387 : vector<1x8x128xf32> to vector<8x128xf32>
    %389 = vector.shape_cast %386 : vector<8x128xf32> to vector<1x8x128xf32>
    tpu.vector_store %arg16[%c0_178, %c0_179, %c0_180], %389 {strides = array<i32>} : memref<2x8x128xf32, #tpu.memory_space<vmem>>, vector<1x8x128xf32>,
    %c0_181 = arith.constant 0 : index
    %c0_182 = arith.constant 0 : index
    %c0_183 = arith.constant 0 : index
    %390 = vector.load %arg17[%c0_181, %c0_182, %c0_183] : memref<2x8x128xf32, #tpu.memory_space<vmem>>, vector<1x8x128xf32>
    %391 = vector.shape_cast %390 : vector<1x8x128xf32> to vector<8x128xf32>
    %392 = vector.shape_cast %384 : vector<8x128xf32> to vector<1x8x128xf32>
    tpu.vector_store %arg17[%c0_181, %c0_182, %c0_183], %392 {strides = array<i32>} : memref<2x8x128xf32, #tpu.memory_space<vmem>>, vector<1x8x128xf32>,
    %393 = arith.truncf %386 : vector<8x128xf32> to vector<8x128xbf16>
    %cst_184 = arith.constant dense<0.000000e+00> : vector<8x512xf32>
    %394 = tpu.matmul %393, %1, %cst_184 {dimension_numbers = #tpu.dot_dimension_numbers<[1], [0], [0], [1], [0, 0, 1, 1], [], []>} : vector<8x128xbf16>, vector<128x512xbf16>, vector<8x512xf32> -> vector<8x512xf32>
    %395 = arith.addf %394, %18 : vector<8x512xf32>
    %c1_185 = arith.constant 1 : index
    %c0_186 = arith.constant 0 : index
    %c0_187 = arith.constant 0 : index
    %396 = vector.load %arg16[%c1_185, %c0_186, %c0_187] : memref<2x8x128xf32, #tpu.memory_space<vmem>>, vector<1x8x128xf32>
    %397 = vector.shape_cast %396 : vector<1x8x128xf32> to vector<8x128xf32>
    %c1_188 = arith.constant 1 : index
    %c0_189 = arith.constant 0 : index
    %c0_190 = arith.constant 0 : index
    %398 = vector.load %arg17[%c1_188, %c0_189, %c0_190] : memref<2x8x128xf32, #tpu.memory_space<vmem>>, vector<1x8x128xf32>
    %399 = vector.shape_cast %398 : vector<1x8x128xf32> to vector<8x128xf32>
    %400 = arith.truncf %397 : vector<8x128xf32> to vector<8x128xbf16>
    %cst_191 = arith.constant dense<0.000000e+00> : vector<8x512xf32>
    %401 = tpu.matmul %400, %3, %cst_191 {dimension_numbers = #tpu.dot_dimension_numbers<[1], [0], [0], [1], [0, 0, 1, 1], [], []>} : vector<8x128xbf16>, vector<128x512xbf16>, vector<8x512xf32> -> vector<8x512xf32>
    %402 = arith.addf %395, %401 : vector<8x512xf32>
    %403 = vector.extract_strided_slice %402 {offsets = [0, 0], sizes = [8, 128], strides = [1, 1]} : vector<8x512xf32> to vector<8x128xf32>
    %404 = arith.negf %403 : vector<8x128xf32>
    %405 = math.exp %404 : vector<8x128xf32>
    %cst_192 = arith.constant 1.000000e+00 : f32
    %406 = vector.broadcast %cst_192 : f32 to vector<8x128xf32>
    %407 = arith.addf %406, %405 : vector<8x128xf32>
    %408 = arith.divf %406, %407 : vector<8x128xf32>
    %409 = vector.extract_strided_slice %402 {offsets = [0, 128], sizes = [8, 128], strides = [1, 1]} : vector<8x512xf32> to vector<8x128xf32>
    %410 = arith.negf %409 : vector<8x128xf32>
    %411 = math.exp %410 : vector<8x128xf32>
    %cst_193 = arith.constant 1.000000e+00 : f32
    %412 = vector.broadcast %cst_193 : f32 to vector<8x128xf32>
    %413 = arith.addf %412, %411 : vector<8x128xf32>
    %414 = arith.divf %412, %413 : vector<8x128xf32>
    %415 = vector.extract_strided_slice %402 {offsets = [0, 256], sizes = [8, 128], strides = [1, 1]} : vector<8x512xf32> to vector<8x128xf32>
    %416 = math.tanh %415 : vector<8x128xf32>
    %417 = vector.extract_strided_slice %402 {offsets = [0, 384], sizes = [8, 128], strides = [1, 1]} : vector<8x512xf32> to vector<8x128xf32>
    %418 = arith.negf %417 : vector<8x128xf32>
    %419 = math.exp %418 : vector<8x128xf32>
    %cst_194 = arith.constant 1.000000e+00 : f32
    %420 = vector.broadcast %cst_194 : f32 to vector<8x128xf32>
    %421 = arith.addf %420, %419 : vector<8x128xf32>
    %422 = arith.divf %420, %421 : vector<8x128xf32>
    %423 = arith.mulf %414, %399 : vector<8x128xf32>
    %424 = arith.mulf %408, %416 : vector<8x128xf32>
    %425 = arith.addf %423, %424 : vector<8x128xf32>
    %426 = math.tanh %425 : vector<8x128xf32>
    %427 = arith.mulf %422, %426 : vector<8x128xf32>
    %c1_195 = arith.constant 1 : index
    %c0_196 = arith.constant 0 : index
    %c0_197 = arith.constant 0 : index
    %428 = vector.load %arg16[%c1_195, %c0_196, %c0_197] : memref<2x8x128xf32, #tpu.memory_space<vmem>>, vector<1x8x128xf32>
    %429 = vector.shape_cast %428 : vector<1x8x128xf32> to vector<8x128xf32>
    %430 = vector.shape_cast %427 : vector<8x128xf32> to vector<1x8x128xf32>
    tpu.vector_store %arg16[%c1_195, %c0_196, %c0_197], %430 {strides = array<i32>} : memref<2x8x128xf32, #tpu.memory_space<vmem>>, vector<1x8x128xf32>,
    %c1_198 = arith.constant 1 : index
    %c0_199 = arith.constant 0 : index
    %c0_200 = arith.constant 0 : index
    %431 = vector.load %arg17[%c1_198, %c0_199, %c0_200] : memref<2x8x128xf32, #tpu.memory_space<vmem>>, vector<1x8x128xf32>
    %432 = vector.shape_cast %431 : vector<1x8x128xf32> to vector<8x128xf32>
    %433 = vector.shape_cast %425 : vector<8x128xf32> to vector<1x8x128xf32>
    tpu.vector_store %arg17[%c1_198, %c0_199, %c0_200], %433 {strides = array<i32>} : memref<2x8x128xf32, #tpu.memory_space<vmem>>, vector<1x8x128xf32>,
    %c5_i32 = arith.constant 5 : i32
    %c8_i32_201 = arith.constant 8 : i32
    %434 = arith.muli %c5_i32, %c8_i32_201 : i32
    %435 = tpu.assume_multiple %434, 8 : i32
    %436 = arith.index_cast %435 : i32 to index
    %c0_202 = arith.constant 0 : index
    %437 = vector.load %arg15[%436, %c0_202] : memref<64x512xf32, #tpu.memory_space<vmem>>, vector<8x512xf32>
    %c0_203 = arith.constant 0 : index
    %c0_204 = arith.constant 0 : index
    %c0_205 = arith.constant 0 : index
    %438 = vector.load %arg16[%c0_203, %c0_204, %c0_205] : memref<2x8x128xf32, #tpu.memory_space<vmem>>, vector<1x8x128xf32>
    %439 = vector.shape_cast %438 : vector<1x8x128xf32> to vector<8x128xf32>
    %c0_206 = arith.constant 0 : index
    %c0_207 = arith.constant 0 : index
    %c0_208 = arith.constant 0 : index
    %440 = vector.load %arg17[%c0_206, %c0_207, %c0_208] : memref<2x8x128xf32, #tpu.memory_space<vmem>>, vector<1x8x128xf32>
    %441 = vector.shape_cast %440 : vector<1x8x128xf32> to vector<8x128xf32>
    %442 = arith.truncf %439 : vector<8x128xf32> to vector<8x128xbf16>
    %cst_209 = arith.constant dense<0.000000e+00> : vector<8x512xf32>
    %443 = tpu.matmul %442, %2, %cst_209 {dimension_numbers = #tpu.dot_dimension_numbers<[1], [0], [0], [1], [0, 0, 1, 1], [], []>} : vector<8x128xbf16>, vector<128x512xbf16>, vector<8x512xf32> -> vector<8x512xf32>
    %444 = arith.addf %437, %443 : vector<8x512xf32>
    %445 = vector.extract_strided_slice %444 {offsets = [0, 0], sizes = [8, 128], strides = [1, 1]} : vector<8x512xf32> to vector<8x128xf32>
    %446 = arith.negf %445 : vector<8x128xf32>
    %447 = math.exp %446 : vector<8x128xf32>
    %cst_210 = arith.constant 1.000000e+00 : f32
    %448 = vector.broadcast %cst_210 : f32 to vector<8x128xf32>
    %449 = arith.addf %448, %447 : vector<8x128xf32>
    %450 = arith.divf %448, %449 : vector<8x128xf32>
    %451 = vector.extract_strided_slice %444 {offsets = [0, 128], sizes = [8, 128], strides = [1, 1]} : vector<8x512xf32> to vector<8x128xf32>
    %452 = arith.negf %451 : vector<8x128xf32>
    %453 = math.exp %452 : vector<8x128xf32>
    %cst_211 = arith.constant 1.000000e+00 : f32
    %454 = vector.broadcast %cst_211 : f32 to vector<8x128xf32>
    %455 = arith.addf %454, %453 : vector<8x128xf32>
    %456 = arith.divf %454, %455 : vector<8x128xf32>
    %457 = vector.extract_strided_slice %444 {offsets = [0, 256], sizes = [8, 128], strides = [1, 1]} : vector<8x512xf32> to vector<8x128xf32>
    %458 = math.tanh %457 : vector<8x128xf32>
    %459 = vector.extract_strided_slice %444 {offsets = [0, 384], sizes = [8, 128], strides = [1, 1]} : vector<8x512xf32> to vector<8x128xf32>
    %460 = arith.negf %459 : vector<8x128xf32>
    %461 = math.exp %460 : vector<8x128xf32>
    %cst_212 = arith.constant 1.000000e+00 : f32
    %462 = vector.broadcast %cst_212 : f32 to vector<8x128xf32>
    %463 = arith.addf %462, %461 : vector<8x128xf32>
    %464 = arith.divf %462, %463 : vector<8x128xf32>
    %465 = arith.mulf %456, %441 : vector<8x128xf32>
    %466 = arith.mulf %450, %458 : vector<8x128xf32>
    %467 = arith.addf %465, %466 : vector<8x128xf32>
    %468 = math.tanh %467 : vector<8x128xf32>
    %469 = arith.mulf %464, %468 : vector<8x128xf32>
    %c0_213 = arith.constant 0 : index
    %c0_214 = arith.constant 0 : index
    %c0_215 = arith.constant 0 : index
    %470 = vector.load %arg16[%c0_213, %c0_214, %c0_215] : memref<2x8x128xf32, #tpu.memory_space<vmem>>, vector<1x8x128xf32>
    %471 = vector.shape_cast %470 : vector<1x8x128xf32> to vector<8x128xf32>
    %472 = vector.shape_cast %469 : vector<8x128xf32> to vector<1x8x128xf32>
    tpu.vector_store %arg16[%c0_213, %c0_214, %c0_215], %472 {strides = array<i32>} : memref<2x8x128xf32, #tpu.memory_space<vmem>>, vector<1x8x128xf32>,
    %c0_216 = arith.constant 0 : index
    %c0_217 = arith.constant 0 : index
    %c0_218 = arith.constant 0 : index
    %473 = vector.load %arg17[%c0_216, %c0_217, %c0_218] : memref<2x8x128xf32, #tpu.memory_space<vmem>>, vector<1x8x128xf32>
    %474 = vector.shape_cast %473 : vector<1x8x128xf32> to vector<8x128xf32>
    %475 = vector.shape_cast %467 : vector<8x128xf32> to vector<1x8x128xf32>
    tpu.vector_store %arg17[%c0_216, %c0_217, %c0_218], %475 {strides = array<i32>} : memref<2x8x128xf32, #tpu.memory_space<vmem>>, vector<1x8x128xf32>,
    %476 = arith.truncf %469 : vector<8x128xf32> to vector<8x128xbf16>
    %cst_219 = arith.constant dense<0.000000e+00> : vector<8x512xf32>
    %477 = tpu.matmul %476, %1, %cst_219 {dimension_numbers = #tpu.dot_dimension_numbers<[1], [0], [0], [1], [0, 0, 1, 1], [], []>} : vector<8x128xbf16>, vector<128x512xbf16>, vector<8x512xf32> -> vector<8x512xf32>
    %478 = arith.addf %477, %18 : vector<8x512xf32>
    %c1_220 = arith.constant 1 : index
    %c0_221 = arith.constant 0 : index
    %c0_222 = arith.constant 0 : index
    %479 = vector.load %arg16[%c1_220, %c0_221, %c0_222] : memref<2x8x128xf32, #tpu.memory_space<vmem>>, vector<1x8x128xf32>
    %480 = vector.shape_cast %479 : vector<1x8x128xf32> to vector<8x128xf32>
    %c1_223 = arith.constant 1 : index
    %c0_224 = arith.constant 0 : index
    %c0_225 = arith.constant 0 : index
    %481 = vector.load %arg17[%c1_223, %c0_224, %c0_225] : memref<2x8x128xf32, #tpu.memory_space<vmem>>, vector<1x8x128xf32>
    %482 = vector.shape_cast %481 : vector<1x8x128xf32> to vector<8x128xf32>
    %483 = arith.truncf %480 : vector<8x128xf32> to vector<8x128xbf16>
    %cst_226 = arith.constant dense<0.000000e+00> : vector<8x512xf32>
    %484 = tpu.matmul %483, %3, %cst_226 {dimension_numbers = #tpu.dot_dimension_numbers<[1], [0], [0], [1], [0, 0, 1, 1], [], []>} : vector<8x128xbf16>, vector<128x512xbf16>, vector<8x512xf32> -> vector<8x512xf32>
    %485 = arith.addf %478, %484 : vector<8x512xf32>
    %486 = vector.extract_strided_slice %485 {offsets = [0, 0], sizes = [8, 128], strides = [1, 1]} : vector<8x512xf32> to vector<8x128xf32>
    %487 = arith.negf %486 : vector<8x128xf32>
    %488 = math.exp %487 : vector<8x128xf32>
    %cst_227 = arith.constant 1.000000e+00 : f32
    %489 = vector.broadcast %cst_227 : f32 to vector<8x128xf32>
    %490 = arith.addf %489, %488 : vector<8x128xf32>
    %491 = arith.divf %489, %490 : vector<8x128xf32>
    %492 = vector.extract_strided_slice %485 {offsets = [0, 128], sizes = [8, 128], strides = [1, 1]} : vector<8x512xf32> to vector<8x128xf32>
    %493 = arith.negf %492 : vector<8x128xf32>
    %494 = math.exp %493 : vector<8x128xf32>
    %cst_228 = arith.constant 1.000000e+00 : f32
    %495 = vector.broadcast %cst_228 : f32 to vector<8x128xf32>
    %496 = arith.addf %495, %494 : vector<8x128xf32>
    %497 = arith.divf %495, %496 : vector<8x128xf32>
    %498 = vector.extract_strided_slice %485 {offsets = [0, 256], sizes = [8, 128], strides = [1, 1]} : vector<8x512xf32> to vector<8x128xf32>
    %499 = math.tanh %498 : vector<8x128xf32>
    %500 = vector.extract_strided_slice %485 {offsets = [0, 384], sizes = [8, 128], strides = [1, 1]} : vector<8x512xf32> to vector<8x128xf32>
    %501 = arith.negf %500 : vector<8x128xf32>
    %502 = math.exp %501 : vector<8x128xf32>
    %cst_229 = arith.constant 1.000000e+00 : f32
    %503 = vector.broadcast %cst_229 : f32 to vector<8x128xf32>
    %504 = arith.addf %503, %502 : vector<8x128xf32>
    %505 = arith.divf %503, %504 : vector<8x128xf32>
    %506 = arith.mulf %497, %482 : vector<8x128xf32>
    %507 = arith.mulf %491, %499 : vector<8x128xf32>
    %508 = arith.addf %506, %507 : vector<8x128xf32>
    %509 = math.tanh %508 : vector<8x128xf32>
    %510 = arith.mulf %505, %509 : vector<8x128xf32>
    %c1_230 = arith.constant 1 : index
    %c0_231 = arith.constant 0 : index
    %c0_232 = arith.constant 0 : index
    %511 = vector.load %arg16[%c1_230, %c0_231, %c0_232] : memref<2x8x128xf32, #tpu.memory_space<vmem>>, vector<1x8x128xf32>
    %512 = vector.shape_cast %511 : vector<1x8x128xf32> to vector<8x128xf32>
    %513 = vector.shape_cast %510 : vector<8x128xf32> to vector<1x8x128xf32>
    tpu.vector_store %arg16[%c1_230, %c0_231, %c0_232], %513 {strides = array<i32>} : memref<2x8x128xf32, #tpu.memory_space<vmem>>, vector<1x8x128xf32>,
    %c1_233 = arith.constant 1 : index
    %c0_234 = arith.constant 0 : index
    %c0_235 = arith.constant 0 : index
    %514 = vector.load %arg17[%c1_233, %c0_234, %c0_235] : memref<2x8x128xf32, #tpu.memory_space<vmem>>, vector<1x8x128xf32>
    %515 = vector.shape_cast %514 : vector<1x8x128xf32> to vector<8x128xf32>
    %516 = vector.shape_cast %508 : vector<8x128xf32> to vector<1x8x128xf32>
    tpu.vector_store %arg17[%c1_233, %c0_234, %c0_235], %516 {strides = array<i32>} : memref<2x8x128xf32, #tpu.memory_space<vmem>>, vector<1x8x128xf32>,
    %c6_i32 = arith.constant 6 : i32
    %c8_i32_236 = arith.constant 8 : i32
    %517 = arith.muli %c6_i32, %c8_i32_236 : i32
    %518 = tpu.assume_multiple %517, 8 : i32
    %519 = arith.index_cast %518 : i32 to index
    %c0_237 = arith.constant 0 : index
    %520 = vector.load %arg15[%519, %c0_237] : memref<64x512xf32, #tpu.memory_space<vmem>>, vector<8x512xf32>
    %c0_238 = arith.constant 0 : index
    %c0_239 = arith.constant 0 : index
    %c0_240 = arith.constant 0 : index
    %521 = vector.load %arg16[%c0_238, %c0_239, %c0_240] : memref<2x8x128xf32, #tpu.memory_space<vmem>>, vector<1x8x128xf32>
    %522 = vector.shape_cast %521 : vector<1x8x128xf32> to vector<8x128xf32>
    %c0_241 = arith.constant 0 : index
    %c0_242 = arith.constant 0 : index
    %c0_243 = arith.constant 0 : index
    %523 = vector.load %arg17[%c0_241, %c0_242, %c0_243] : memref<2x8x128xf32, #tpu.memory_space<vmem>>, vector<1x8x128xf32>
    %524 = vector.shape_cast %523 : vector<1x8x128xf32> to vector<8x128xf32>
    %525 = arith.truncf %522 : vector<8x128xf32> to vector<8x128xbf16>
    %cst_244 = arith.constant dense<0.000000e+00> : vector<8x512xf32>
    %526 = tpu.matmul %525, %2, %cst_244 {dimension_numbers = #tpu.dot_dimension_numbers<[1], [0], [0], [1], [0, 0, 1, 1], [], []>} : vector<8x128xbf16>, vector<128x512xbf16>, vector<8x512xf32> -> vector<8x512xf32>
    %527 = arith.addf %520, %526 : vector<8x512xf32>
    %528 = vector.extract_strided_slice %527 {offsets = [0, 0], sizes = [8, 128], strides = [1, 1]} : vector<8x512xf32> to vector<8x128xf32>
    %529 = arith.negf %528 : vector<8x128xf32>
    %530 = math.exp %529 : vector<8x128xf32>
    %cst_245 = arith.constant 1.000000e+00 : f32
    %531 = vector.broadcast %cst_245 : f32 to vector<8x128xf32>
    %532 = arith.addf %531, %530 : vector<8x128xf32>
    %533 = arith.divf %531, %532 : vector<8x128xf32>
    %534 = vector.extract_strided_slice %527 {offsets = [0, 128], sizes = [8, 128], strides = [1, 1]} : vector<8x512xf32> to vector<8x128xf32>
    %535 = arith.negf %534 : vector<8x128xf32>
    %536 = math.exp %535 : vector<8x128xf32>
    %cst_246 = arith.constant 1.000000e+00 : f32
    %537 = vector.broadcast %cst_246 : f32 to vector<8x128xf32>
    %538 = arith.addf %537, %536 : vector<8x128xf32>
    %539 = arith.divf %537, %538 : vector<8x128xf32>
    %540 = vector.extract_strided_slice %527 {offsets = [0, 256], sizes = [8, 128], strides = [1, 1]} : vector<8x512xf32> to vector<8x128xf32>
    %541 = math.tanh %540 : vector<8x128xf32>
    %542 = vector.extract_strided_slice %527 {offsets = [0, 384], sizes = [8, 128], strides = [1, 1]} : vector<8x512xf32> to vector<8x128xf32>
    %543 = arith.negf %542 : vector<8x128xf32>
    %544 = math.exp %543 : vector<8x128xf32>
    %cst_247 = arith.constant 1.000000e+00 : f32
    %545 = vector.broadcast %cst_247 : f32 to vector<8x128xf32>
    %546 = arith.addf %545, %544 : vector<8x128xf32>
    %547 = arith.divf %545, %546 : vector<8x128xf32>
    %548 = arith.mulf %539, %524 : vector<8x128xf32>
    %549 = arith.mulf %533, %541 : vector<8x128xf32>
    %550 = arith.addf %548, %549 : vector<8x128xf32>
    %551 = math.tanh %550 : vector<8x128xf32>
    %552 = arith.mulf %547, %551 : vector<8x128xf32>
    %c0_248 = arith.constant 0 : index
    %c0_249 = arith.constant 0 : index
    %c0_250 = arith.constant 0 : index
    %553 = vector.load %arg16[%c0_248, %c0_249, %c0_250] : memref<2x8x128xf32, #tpu.memory_space<vmem>>, vector<1x8x128xf32>
    %554 = vector.shape_cast %553 : vector<1x8x128xf32> to vector<8x128xf32>
    %555 = vector.shape_cast %552 : vector<8x128xf32> to vector<1x8x128xf32>
    tpu.vector_store %arg16[%c0_248, %c0_249, %c0_250], %555 {strides = array<i32>} : memref<2x8x128xf32, #tpu.memory_space<vmem>>, vector<1x8x128xf32>,
    %c0_251 = arith.constant 0 : index
    %c0_252 = arith.constant 0 : index
    %c0_253 = arith.constant 0 : index
    %556 = vector.load %arg17[%c0_251, %c0_252, %c0_253] : memref<2x8x128xf32, #tpu.memory_space<vmem>>, vector<1x8x128xf32>
    %557 = vector.shape_cast %556 : vector<1x8x128xf32> to vector<8x128xf32>
    %558 = vector.shape_cast %550 : vector<8x128xf32> to vector<1x8x128xf32>
    tpu.vector_store %arg17[%c0_251, %c0_252, %c0_253], %558 {strides = array<i32>} : memref<2x8x128xf32, #tpu.memory_space<vmem>>, vector<1x8x128xf32>,
    %559 = arith.truncf %552 : vector<8x128xf32> to vector<8x128xbf16>
    %cst_254 = arith.constant dense<0.000000e+00> : vector<8x512xf32>
    %560 = tpu.matmul %559, %1, %cst_254 {dimension_numbers = #tpu.dot_dimension_numbers<[1], [0], [0], [1], [0, 0, 1, 1], [], []>} : vector<8x128xbf16>, vector<128x512xbf16>, vector<8x512xf32> -> vector<8x512xf32>
    %561 = arith.addf %560, %18 : vector<8x512xf32>
    %c1_255 = arith.constant 1 : index
    %c0_256 = arith.constant 0 : index
    %c0_257 = arith.constant 0 : index
    %562 = vector.load %arg16[%c1_255, %c0_256, %c0_257] : memref<2x8x128xf32, #tpu.memory_space<vmem>>, vector<1x8x128xf32>
    %563 = vector.shape_cast %562 : vector<1x8x128xf32> to vector<8x128xf32>
    %c1_258 = arith.constant 1 : index
    %c0_259 = arith.constant 0 : index
    %c0_260 = arith.constant 0 : index
    %564 = vector.load %arg17[%c1_258, %c0_259, %c0_260] : memref<2x8x128xf32, #tpu.memory_space<vmem>>, vector<1x8x128xf32>
    %565 = vector.shape_cast %564 : vector<1x8x128xf32> to vector<8x128xf32>
    %566 = arith.truncf %563 : vector<8x128xf32> to vector<8x128xbf16>
    %cst_261 = arith.constant dense<0.000000e+00> : vector<8x512xf32>
    %567 = tpu.matmul %566, %3, %cst_261 {dimension_numbers = #tpu.dot_dimension_numbers<[1], [0], [0], [1], [0, 0, 1, 1], [], []>} : vector<8x128xbf16>, vector<128x512xbf16>, vector<8x512xf32> -> vector<8x512xf32>
    %568 = arith.addf %561, %567 : vector<8x512xf32>
    %569 = vector.extract_strided_slice %568 {offsets = [0, 0], sizes = [8, 128], strides = [1, 1]} : vector<8x512xf32> to vector<8x128xf32>
    %570 = arith.negf %569 : vector<8x128xf32>
    %571 = math.exp %570 : vector<8x128xf32>
    %cst_262 = arith.constant 1.000000e+00 : f32
    %572 = vector.broadcast %cst_262 : f32 to vector<8x128xf32>
    %573 = arith.addf %572, %571 : vector<8x128xf32>
    %574 = arith.divf %572, %573 : vector<8x128xf32>
    %575 = vector.extract_strided_slice %568 {offsets = [0, 128], sizes = [8, 128], strides = [1, 1]} : vector<8x512xf32> to vector<8x128xf32>
    %576 = arith.negf %575 : vector<8x128xf32>
    %577 = math.exp %576 : vector<8x128xf32>
    %cst_263 = arith.constant 1.000000e+00 : f32
    %578 = vector.broadcast %cst_263 : f32 to vector<8x128xf32>
    %579 = arith.addf %578, %577 : vector<8x128xf32>
    %580 = arith.divf %578, %579 : vector<8x128xf32>
    %581 = vector.extract_strided_slice %568 {offsets = [0, 256], sizes = [8, 128], strides = [1, 1]} : vector<8x512xf32> to vector<8x128xf32>
    %582 = math.tanh %581 : vector<8x128xf32>
    %583 = vector.extract_strided_slice %568 {offsets = [0, 384], sizes = [8, 128], strides = [1, 1]} : vector<8x512xf32> to vector<8x128xf32>
    %584 = arith.negf %583 : vector<8x128xf32>
    %585 = math.exp %584 : vector<8x128xf32>
    %cst_264 = arith.constant 1.000000e+00 : f32
    %586 = vector.broadcast %cst_264 : f32 to vector<8x128xf32>
    %587 = arith.addf %586, %585 : vector<8x128xf32>
    %588 = arith.divf %586, %587 : vector<8x128xf32>
    %589 = arith.mulf %580, %565 : vector<8x128xf32>
    %590 = arith.mulf %574, %582 : vector<8x128xf32>
    %591 = arith.addf %589, %590 : vector<8x128xf32>
    %592 = math.tanh %591 : vector<8x128xf32>
    %593 = arith.mulf %588, %592 : vector<8x128xf32>
    %c1_265 = arith.constant 1 : index
    %c0_266 = arith.constant 0 : index
    %c0_267 = arith.constant 0 : index
    %594 = vector.load %arg16[%c1_265, %c0_266, %c0_267] : memref<2x8x128xf32, #tpu.memory_space<vmem>>, vector<1x8x128xf32>
    %595 = vector.shape_cast %594 : vector<1x8x128xf32> to vector<8x128xf32>
    %596 = vector.shape_cast %593 : vector<8x128xf32> to vector<1x8x128xf32>
    tpu.vector_store %arg16[%c1_265, %c0_266, %c0_267], %596 {strides = array<i32>} : memref<2x8x128xf32, #tpu.memory_space<vmem>>, vector<1x8x128xf32>,
    %c1_268 = arith.constant 1 : index
    %c0_269 = arith.constant 0 : index
    %c0_270 = arith.constant 0 : index
    %597 = vector.load %arg17[%c1_268, %c0_269, %c0_270] : memref<2x8x128xf32, #tpu.memory_space<vmem>>, vector<1x8x128xf32>
    %598 = vector.shape_cast %597 : vector<1x8x128xf32> to vector<8x128xf32>
    %599 = vector.shape_cast %591 : vector<8x128xf32> to vector<1x8x128xf32>
    tpu.vector_store %arg17[%c1_268, %c0_269, %c0_270], %599 {strides = array<i32>} : memref<2x8x128xf32, #tpu.memory_space<vmem>>, vector<1x8x128xf32>,
    %c7_i32 = arith.constant 7 : i32
    %c8_i32_271 = arith.constant 8 : i32
    %600 = arith.muli %c7_i32, %c8_i32_271 : i32
    %601 = tpu.assume_multiple %600, 8 : i32
    %602 = arith.index_cast %601 : i32 to index
    %c0_272 = arith.constant 0 : index
    %603 = vector.load %arg15[%602, %c0_272] : memref<64x512xf32, #tpu.memory_space<vmem>>, vector<8x512xf32>
    %c0_273 = arith.constant 0 : index
    %c0_274 = arith.constant 0 : index
    %c0_275 = arith.constant 0 : index
    %604 = vector.load %arg16[%c0_273, %c0_274, %c0_275] : memref<2x8x128xf32, #tpu.memory_space<vmem>>, vector<1x8x128xf32>
    %605 = vector.shape_cast %604 : vector<1x8x128xf32> to vector<8x128xf32>
    %c0_276 = arith.constant 0 : index
    %c0_277 = arith.constant 0 : index
    %c0_278 = arith.constant 0 : index
    %606 = vector.load %arg17[%c0_276, %c0_277, %c0_278] : memref<2x8x128xf32, #tpu.memory_space<vmem>>, vector<1x8x128xf32>
    %607 = vector.shape_cast %606 : vector<1x8x128xf32> to vector<8x128xf32>
    %608 = arith.truncf %605 : vector<8x128xf32> to vector<8x128xbf16>
    %cst_279 = arith.constant dense<0.000000e+00> : vector<8x512xf32>
    %609 = tpu.matmul %608, %2, %cst_279 {dimension_numbers = #tpu.dot_dimension_numbers<[1], [0], [0], [1], [0, 0, 1, 1], [], []>} : vector<8x128xbf16>, vector<128x512xbf16>, vector<8x512xf32> -> vector<8x512xf32>
    %610 = arith.addf %603, %609 : vector<8x512xf32>
    %611 = vector.extract_strided_slice %610 {offsets = [0, 0], sizes = [8, 128], strides = [1, 1]} : vector<8x512xf32> to vector<8x128xf32>
    %612 = arith.negf %611 : vector<8x128xf32>
    %613 = math.exp %612 : vector<8x128xf32>
    %cst_280 = arith.constant 1.000000e+00 : f32
    %614 = vector.broadcast %cst_280 : f32 to vector<8x128xf32>
    %615 = arith.addf %614, %613 : vector<8x128xf32>
    %616 = arith.divf %614, %615 : vector<8x128xf32>
    %617 = vector.extract_strided_slice %610 {offsets = [0, 128], sizes = [8, 128], strides = [1, 1]} : vector<8x512xf32> to vector<8x128xf32>
    %618 = arith.negf %617 : vector<8x128xf32>
    %619 = math.exp %618 : vector<8x128xf32>
    %cst_281 = arith.constant 1.000000e+00 : f32
    %620 = vector.broadcast %cst_281 : f32 to vector<8x128xf32>
    %621 = arith.addf %620, %619 : vector<8x128xf32>
    %622 = arith.divf %620, %621 : vector<8x128xf32>
    %623 = vector.extract_strided_slice %610 {offsets = [0, 256], sizes = [8, 128], strides = [1, 1]} : vector<8x512xf32> to vector<8x128xf32>
    %624 = math.tanh %623 : vector<8x128xf32>
    %625 = vector.extract_strided_slice %610 {offsets = [0, 384], sizes = [8, 128], strides = [1, 1]} : vector<8x512xf32> to vector<8x128xf32>
    %626 = arith.negf %625 : vector<8x128xf32>
    %627 = math.exp %626 : vector<8x128xf32>
    %cst_282 = arith.constant 1.000000e+00 : f32
    %628 = vector.broadcast %cst_282 : f32 to vector<8x128xf32>
    %629 = arith.addf %628, %627 : vector<8x128xf32>
    %630 = arith.divf %628, %629 : vector<8x128xf32>
    %631 = arith.mulf %622, %607 : vector<8x128xf32>
    %632 = arith.mulf %616, %624 : vector<8x128xf32>
    %633 = arith.addf %631, %632 : vector<8x128xf32>
    %634 = math.tanh %633 : vector<8x128xf32>
    %635 = arith.mulf %630, %634 : vector<8x128xf32>
    %c0_283 = arith.constant 0 : index
    %c0_284 = arith.constant 0 : index
    %c0_285 = arith.constant 0 : index
    %636 = vector.load %arg16[%c0_283, %c0_284, %c0_285] : memref<2x8x128xf32, #tpu.memory_space<vmem>>, vector<1x8x128xf32>
    %637 = vector.shape_cast %636 : vector<1x8x128xf32> to vector<8x128xf32>
    %638 = vector.shape_cast %635 : vector<8x128xf32> to vector<1x8x128xf32>
    tpu.vector_store %arg16[%c0_283, %c0_284, %c0_285], %638 {strides = array<i32>} : memref<2x8x128xf32, #tpu.memory_space<vmem>>, vector<1x8x128xf32>,
    %c0_286 = arith.constant 0 : index
    %c0_287 = arith.constant 0 : index
    %c0_288 = arith.constant 0 : index
    %639 = vector.load %arg17[%c0_286, %c0_287, %c0_288] : memref<2x8x128xf32, #tpu.memory_space<vmem>>, vector<1x8x128xf32>
    %640 = vector.shape_cast %639 : vector<1x8x128xf32> to vector<8x128xf32>
    %641 = vector.shape_cast %633 : vector<8x128xf32> to vector<1x8x128xf32>
    tpu.vector_store %arg17[%c0_286, %c0_287, %c0_288], %641 {strides = array<i32>} : memref<2x8x128xf32, #tpu.memory_space<vmem>>, vector<1x8x128xf32>,
    %642 = arith.truncf %635 : vector<8x128xf32> to vector<8x128xbf16>
    %cst_289 = arith.constant dense<0.000000e+00> : vector<8x512xf32>
    %643 = tpu.matmul %642, %1, %cst_289 {dimension_numbers = #tpu.dot_dimension_numbers<[1], [0], [0], [1], [0, 0, 1, 1], [], []>} : vector<8x128xbf16>, vector<128x512xbf16>, vector<8x512xf32> -> vector<8x512xf32>
    %644 = arith.addf %643, %18 : vector<8x512xf32>
    %c1_290 = arith.constant 1 : index
    %c0_291 = arith.constant 0 : index
    %c0_292 = arith.constant 0 : index
    %645 = vector.load %arg16[%c1_290, %c0_291, %c0_292] : memref<2x8x128xf32, #tpu.memory_space<vmem>>, vector<1x8x128xf32>
    %646 = vector.shape_cast %645 : vector<1x8x128xf32> to vector<8x128xf32>
    %c1_293 = arith.constant 1 : index
    %c0_294 = arith.constant 0 : index
    %c0_295 = arith.constant 0 : index
    %647 = vector.load %arg17[%c1_293, %c0_294, %c0_295] : memref<2x8x128xf32, #tpu.memory_space<vmem>>, vector<1x8x128xf32>
    %648 = vector.shape_cast %647 : vector<1x8x128xf32> to vector<8x128xf32>
    %649 = arith.truncf %646 : vector<8x128xf32> to vector<8x128xbf16>
    %cst_296 = arith.constant dense<0.000000e+00> : vector<8x512xf32>
    %650 = tpu.matmul %649, %3, %cst_296 {dimension_numbers = #tpu.dot_dimension_numbers<[1], [0], [0], [1], [0, 0, 1, 1], [], []>} : vector<8x128xbf16>, vector<128x512xbf16>, vector<8x512xf32> -> vector<8x512xf32>
    %651 = arith.addf %644, %650 : vector<8x512xf32>
    %652 = vector.extract_strided_slice %651 {offsets = [0, 0], sizes = [8, 128], strides = [1, 1]} : vector<8x512xf32> to vector<8x128xf32>
    %653 = arith.negf %652 : vector<8x128xf32>
    %654 = math.exp %653 : vector<8x128xf32>
    %cst_297 = arith.constant 1.000000e+00 : f32
    %655 = vector.broadcast %cst_297 : f32 to vector<8x128xf32>
    %656 = arith.addf %655, %654 : vector<8x128xf32>
    %657 = arith.divf %655, %656 : vector<8x128xf32>
    %658 = vector.extract_strided_slice %651 {offsets = [0, 128], sizes = [8, 128], strides = [1, 1]} : vector<8x512xf32> to vector<8x128xf32>
    %659 = arith.negf %658 : vector<8x128xf32>
    %660 = math.exp %659 : vector<8x128xf32>
    %cst_298 = arith.constant 1.000000e+00 : f32
    %661 = vector.broadcast %cst_298 : f32 to vector<8x128xf32>
    %662 = arith.addf %661, %660 : vector<8x128xf32>
    %663 = arith.divf %661, %662 : vector<8x128xf32>
    %664 = vector.extract_strided_slice %651 {offsets = [0, 256], sizes = [8, 128], strides = [1, 1]} : vector<8x512xf32> to vector<8x128xf32>
    %665 = math.tanh %664 : vector<8x128xf32>
    %666 = vector.extract_strided_slice %651 {offsets = [0, 384], sizes = [8, 128], strides = [1, 1]} : vector<8x512xf32> to vector<8x128xf32>
    %667 = arith.negf %666 : vector<8x128xf32>
    %668 = math.exp %667 : vector<8x128xf32>
    %cst_299 = arith.constant 1.000000e+00 : f32
    %669 = vector.broadcast %cst_299 : f32 to vector<8x128xf32>
    %670 = arith.addf %669, %668 : vector<8x128xf32>
    %671 = arith.divf %669, %670 : vector<8x128xf32>
    %672 = arith.mulf %663, %648 : vector<8x128xf32>
    %673 = arith.mulf %657, %665 : vector<8x128xf32>
    %674 = arith.addf %672, %673 : vector<8x128xf32>
    %675 = math.tanh %674 : vector<8x128xf32>
    %676 = arith.mulf %671, %675 : vector<8x128xf32>
    %c1_300 = arith.constant 1 : index
    %c0_301 = arith.constant 0 : index
    %c0_302 = arith.constant 0 : index
    %677 = vector.load %arg16[%c1_300, %c0_301, %c0_302] : memref<2x8x128xf32, #tpu.memory_space<vmem>>, vector<1x8x128xf32>
    %678 = vector.shape_cast %677 : vector<1x8x128xf32> to vector<8x128xf32>
    %679 = vector.shape_cast %676 : vector<8x128xf32> to vector<1x8x128xf32>
    tpu.vector_store %arg16[%c1_300, %c0_301, %c0_302], %679 {strides = array<i32>} : memref<2x8x128xf32, #tpu.memory_space<vmem>>, vector<1x8x128xf32>,
    %c1_303 = arith.constant 1 : index
    %c0_304 = arith.constant 0 : index
    %c0_305 = arith.constant 0 : index
    %680 = vector.load %arg17[%c1_303, %c0_304, %c0_305] : memref<2x8x128xf32, #tpu.memory_space<vmem>>, vector<1x8x128xf32>
    %681 = vector.shape_cast %680 : vector<1x8x128xf32> to vector<8x128xf32>
    %682 = vector.shape_cast %674 : vector<8x128xf32> to vector<1x8x128xf32>
    tpu.vector_store %arg17[%c1_303, %c0_304, %c0_305], %682 {strides = array<i32>} : memref<2x8x128xf32, #tpu.memory_space<vmem>>, vector<1x8x128xf32>,
    %c8_i32_306 = arith.constant 8 : i32
    %c0_307 = arith.constant 0 : index
    %c0_308 = arith.constant 0 : index
    %c0_309 = arith.constant 0 : index
    %683 = vector.load %arg16[%c0_307, %c0_308, %c0_309] : memref<2x8x128xf32, #tpu.memory_space<vmem>>, vector<2x8x128xf32>
    %c0_310 = arith.constant 0 : index
    %c0_311 = arith.constant 0 : index
    %c0_312 = arith.constant 0 : index
    %684 = vector.load %arg13[%c0_310, %c0_311, %c0_312] : memref<2x8x128xf32, #tpu.memory_space<vmem>>, vector<2x8x128xf32>
    tpu.vector_store %arg13[%c0_310, %c0_311, %c0_312], %683 {strides = array<i32>} : memref<2x8x128xf32, #tpu.memory_space<vmem>>, vector<2x8x128xf32>,
    %c0_313 = arith.constant 0 : index
    %c0_314 = arith.constant 0 : index
    %c0_315 = arith.constant 0 : index
    %685 = vector.load %arg17[%c0_313, %c0_314, %c0_315] : memref<2x8x128xf32, #tpu.memory_space<vmem>>, vector<2x8x128xf32>
    %c0_316 = arith.constant 0 : index
    %c0_317 = arith.constant 0 : index
    %c0_318 = arith.constant 0 : index
    %686 = vector.load %arg14[%c0_316, %c0_317, %c0_318] : memref<2x8x128xf32, #tpu.memory_space<vmem>>, vector<2x8x128xf32>
    tpu.vector_store %arg14[%c0_316, %c0_317, %c0_318], %685 {strides = array<i32>} : memref<2x8x128xf32, #tpu.memory_space<vmem>>, vector<2x8x128xf32>,
    %c1_319 = arith.constant 1 : index
    %c0_320 = arith.constant 0 : index
    %c0_321 = arith.constant 0 : index
    %687 = vector.load %arg16[%c1_319, %c0_320, %c0_321] : memref<2x8x128xf32, #tpu.memory_space<vmem>>, vector<1x8x128xf32>
    %688 = vector.shape_cast %687 : vector<1x8x128xf32> to vector<8x128xf32>
    %689 = arith.truncf %688 : vector<8x128xf32> to vector<8x128xbf16>
    %c0_322 = arith.constant 0 : index
    %c0_323 = arith.constant 0 : index
    %690 = vector.load %arg8[%c0_322, %c0_323] : memref<128x128xbf16, #tpu.memory_space<vmem>>, vector<128x128xbf16>
    %cst_324 = arith.constant dense<0.000000e+00> : vector<8x128xf32>
    %691 = tpu.matmul %689, %690, %cst_324 {dimension_numbers = #tpu.dot_dimension_numbers<[1], [0], [0], [1], [0, 0, 1, 1], [], []>} : vector<8x128xbf16>, vector<128x128xbf16>, vector<8x128xf32> -> vector<8x128xf32>
    %c0_325 = arith.constant 0 : index
    %c0_326 = arith.constant 0 : index
    %692 = vector.load %arg9[%c0_325, %c0_326] : memref<1x128xf32, #tpu.memory_space<vmem>>, vector<1x128xf32>
    %693 = vector.broadcast %692 : vector<1x128xf32> to vector<8x128xf32>
    %694 = arith.addf %691, %693 : vector<8x128xf32>
    %695 = arith.negf %694 : vector<8x128xf32>
    %696 = math.exp %695 : vector<8x128xf32>
    %cst_327 = arith.constant 1.000000e+00 : f32
    %697 = vector.broadcast %cst_327 : f32 to vector<8x128xf32>
    %698 = arith.addf %697, %696 : vector<8x128xf32>
    %699 = arith.divf %697, %698 : vector<8x128xf32>
    %c0_328 = arith.constant 0 : index
    %c0_329 = arith.constant 0 : index
    %700 = vector.load %arg12[%c0_328, %c0_329] : memref<8x128xf32, #tpu.memory_space<vmem>>, vector<8x128xf32>
    tpu.vector_store %arg12[%c0_328, %c0_329], %699 {strides = array<i32>} : memref<8x128xf32, #tpu.memory_space<vmem>>, vector<8x128xf32>,
    return
  }
  func.func @transform_0(%arg0: i32) -> (i32, i32, i32) {
    %c0_i32 = arith.constant 0 : i32
    %c0_i32_0 = arith.constant 0 : i32
    %c0_i32_1 = arith.constant 0 : i32
    return %c0_i32, %arg0, %c0_i32_0 : i32, i32, i32
  }
  func.func @transform_1(%arg0: i32) -> (i32, i32) {
    %c0_i32 = arith.constant 0 : i32
    %c0_i32_0 = arith.constant 0 : i32
    %c0_i32_1 = arith.constant 0 : i32
    return %c0_i32, %c0_i32_0 : i32, i32
  }
  func.func @transform_2(%arg0: i32) -> (i32, i32) {
    %c0_i32 = arith.constant 0 : i32
    %c0_i32_0 = arith.constant 0 : i32
    %c0_i32_1 = arith.constant 0 : i32
    return %c0_i32, %c0_i32_0 : i32, i32
  }
  func.func @transform_3(%arg0: i32) -> (i32, i32) {
    %c0_i32 = arith.constant 0 : i32
    %c0_i32_0 = arith.constant 0 : i32
    %c0_i32_1 = arith.constant 0 : i32
    return %c0_i32, %c0_i32_0 : i32, i32
  }
  func.func @transform_4(%arg0: i32) -> (i32, i32) {
    %c0_i32 = arith.constant 0 : i32
    %c0_i32_0 = arith.constant 0 : i32
    %c0_i32_1 = arith.constant 0 : i32
    return %c0_i32, %c0_i32_0 : i32, i32
  }
  func.func @transform_5(%arg0: i32) -> (i32, i32) {
    %c0_i32 = arith.constant 0 : i32
    %c0_i32_0 = arith.constant 0 : i32
    %c0_i32_1 = arith.constant 0 : i32
    return %c0_i32, %c0_i32_0 : i32, i32
  }
  func.func @transform_6(%arg0: i32) -> (i32, i32) {
    %c0_i32 = arith.constant 0 : i32
    %c0_i32_0 = arith.constant 0 : i32
    %c0_i32_1 = arith.constant 0 : i32
    return %c0_i32, %c0_i32_0 : i32, i32
  }
  func.func @transform_7(%arg0: i32) -> (i32, i32) {
    %c0_i32 = arith.constant 0 : i32
    %c0_i32_0 = arith.constant 0 : i32
    %c0_i32_1 = arith.constant 0 : i32
    return %c0_i32, %c0_i32_0 : i32, i32
  }
  func.func @transform_8(%arg0: i32) -> (i32, i32) {
    %c0_i32 = arith.constant 0 : i32
    %c0_i32_0 = arith.constant 0 : i32
    %c0_i32_1 = arith.constant 0 : i32
    return %c0_i32, %c0_i32_0 : i32, i32
  }
  func.func @transform_9(%arg0: i32) -> (i32, i32, i32) {
    %c0_i32 = arith.constant 0 : i32
    %c0_i32_0 = arith.constant 0 : i32
    %c0_i32_1 = arith.constant 0 : i32
    return %c0_i32, %arg0, %c0_i32_0 : i32, i32, i32
  }
  func.func @transform_10(%arg0: i32) -> (i32, i32, i32) {
    %c0_i32 = arith.constant 0 : i32
    %c0_i32_0 = arith.constant 0 : i32
    %c0_i32_1 = arith.constant 0 : i32
    return %c0_i32, %arg0, %c0_i32_0 : i32, i32, i32
  }
  func.func @transform_11(%arg0: i32) -> (i32, i32) {
    %c0_i32 = arith.constant 0 : i32
    %c0_i32_0 = arith.constant 0 : i32
    return %arg0, %c0_i32 : i32, i32
  }
  func.func @transform_12(%arg0: i32) -> (i32, i32, i32) {
    %c0_i32 = arith.constant 0 : i32
    %c0_i32_0 = arith.constant 0 : i32
    %c0_i32_1 = arith.constant 0 : i32
    return %c0_i32, %arg0, %c0_i32_0 : i32, i32, i32
  }
  func.func @transform_13(%arg0: i32) -> (i32, i32, i32) {
    %c0_i32 = arith.constant 0 : i32
    %c0_i32_0 = arith.constant 0 : i32
    %c0_i32_1 = arith.constant 0 : i32
    return %c0_i32, %arg0, %c0_i32_0 : i32, i32, i32
  }
}

</mosaic_0001>

<llo_original>
// kernel: tpu_custom_call.1
$region0: #{tpu_custom_call.1}
  #allocation0 [shape = 'u32[]', space=smem, size = 0x4, offset = 0x4, fixed_abs, tag = 'smem constant byte address 0x4 - core index']
  #allocation1 [shape = 'u32[144,128]{1,0:T(1,128)}', space=vmem, size = 0x12000, scoped, tag = 'internal scratch']
  #allocation2 [shape = 'f32[64,512]{1,0:T(8,128)}', space=vmem, size = 0x20000, scoped, tag = 'scratch operand']
  #allocation3 [shape = 'f32[2,8,128]{2,1,0:T(8,128)}', space=vmem, size = 0x2000, scoped, tag = 'scratch operand']
  #allocation4 [shape = 'f32[2,8,128]{2,1,0:T(8,128)}', space=vmem, size = 0x2000, scoped, tag = 'scratch operand']
  %s0 = inlined_call_operand.hbm [shape: f32[8,8,128], index: 0, kind: input, shape index: {}]
  %s1 = inlined_call_operand.hbm [shape: bf16[128,512], index: 1, kind: input, shape index: {}]
  %s2 = inlined_call_operand.hbm [shape: bf16[128,512], index: 2, kind: input, shape index: {}]
  %s3 = inlined_call_operand.hbm [shape: f32[1,512], index: 3, kind: input, shape index: {}]
  %s4 = inlined_call_operand.hbm [shape: bf16[128,512], index: 4, kind: input, shape index: {}]
  %s5 = inlined_call_operand.hbm [shape: bf16[128,512], index: 5, kind: input, shape index: {}]
  %s6 = inlined_call_operand.hbm [shape: f32[1,512], index: 6, kind: input, shape index: {}]
  %s7 = inlined_call_operand.hbm [shape: bf16[128,128], index: 7, kind: input, shape index: {}]
  %s8 = inlined_call_operand.vmem [shape: f32[1,128], index: 8, kind: input, shape index: {}]
  %s9 = inlined_call_operand.vmem [shape: f32[2,8,128], index: 9, kind: input, shape index: {}]
  %s10 = inlined_call_operand.vmem [shape: f32[2,8,128], index: 10, kind: input, shape index: {}]
  %s11 = inlined_call_operand.hbm [shape: f32[8,128], index: 11, kind: output, shape index: {0}]
  %s12 = inlined_call_operand.hbm [shape: f32[2,8,128], index: 12, kind: output, shape index: {1}]
  %s13 = inlined_call_operand.hbm [shape: f32[2,8,128], index: 13, kind: output, shape index: {2}]
  %14 = xla_tuple %s11, %s12, %s13
  %s15 = sld [smem:[#allocation0]]
  $region102: #{tpu_custom_call.1} parent=0
    _
  %s17 = ssub.s32 1, %s15
  %s18 = scalar_select 0, %s17, %s15
  $region1: #{tpu_custom_call.1} parent=0
    #allocation5 [shape = 'u8[32768]{0}', space=vmem, size = 0x8000, scoped, tag = 'input window, operand 0, single buffered']
    #allocation6 [shape = 's32[1]{0}', space=sflag, size = 0x4, scoped, tag = 'scoped memory for tpu_custom_call.1']
    #allocation7 [shape = 's32[1]{0}', space=sflag, size = 0x4, scoped, tag = 'scoped memory for tpu_custom_call.1']
    #allocation8 [shape = 'u8[131072]{0}', space=vmem, size = 0x20000, scoped, tag = 'input window, operand 1, single buffered']
    #allocation9 [shape = 's32[1]{0}', space=sflag, size = 0x4, scoped, tag = 'scoped memory for tpu_custom_call.1']
    #allocation10 [shape = 'u8[131072]{0}', space=vmem, size = 0x20000, scoped, tag = 'input window, operand 2, single buffered']
    #allocation11 [shape = 'u8[2048]{0}', space=vmem, size = 0x800, scoped, tag = 'input window, operand 3, single buffered']
    #allocation12 [shape = 's32[1]{0}', space=sflag, size = 0x4, scoped, tag = 'scoped memory for tpu_custom_call.1']
    #allocation13 [shape = 'u8[131072]{0}', space=vmem, size = 0x20000, scoped, tag = 'input window, operand 4, single buffered']
    #allocation14 [shape = 'u8[131072]{0}', space=vmem, size = 0x20000, scoped, tag = 'input window, operand 5, single buffered']
    #allocation15 [shape = 's32[1]{0}', space=sflag, size = 0x4, scoped, tag = 'scoped memory for tpu_custom_call.1']
    #allocation16 [shape = 'u8[2048]{0}', space=vmem, size = 0x800, scoped, tag = 'input window, operand 6, single buffered']
    #allocation17 [shape = 'u8[32768]{0}', space=vmem, size = 0x8000, scoped, tag = 'input window, operand 7, single buffered']
    #allocation18 [shape = 's32[1]{0}', space=sflag, size = 0x4, scoped, tag = 'scoped memory for tpu_custom_call.1']
    #allocation19 [shape = 'u8[4096]{0}', space=vmem, size = 0x1000, scoped, tag = 'output window, operand 0, single buffered']
    #allocation20 [shape = 'u8[8192]{0}', space=vmem, size = 0x2000, scoped, tag = 'output window, operand 1, single buffered']
    #allocation21 [shape = 's32[1]{0}', space=sflag, size = 0x4, scoped, tag = 'scoped memory for tpu_custom_call.1']
    #allocation22 [shape = 'u8[8192]{0}', space=vmem, size = 0x2000, scoped, tag = 'output window, operand 2, single buffered']
    %19 = vsyncpa [#allocation6], 0
    %20 = vsyncpa [#allocation9], 0
    %21 = vsyncpa [#allocation12], 0
    %22 = vsyncpa [#allocation15], 0
    %23 = vsyncpa [#allocation18], 0
    %24 = vsyncpa [#allocation7], 0
    %25 = vsyncpa [#allocation21], 0
    // Predicated region
    $region2: #{tpu_custom_call.1} parent=1 // pred_check
      _
    $region3: #{tpu_custom_call.1} parent=1 // pred_check_branch
      %27 = sbr.rel (0) target = $region5
    $region4: #{tpu_custom_call.1} parent=1 // pred_region
      %s29 = ssub.s32 1024, 1024
      %30 = vsyncadd [#allocation6], %s29
      %s31 = sshll.u32 [#allocation5], 4
      %s32 = int_to_ptr.vmem [resolvable:$true] %s31
      %37 = dma.hbm_to_vmem [thread:$0]  %s0, 1024, %s32, [#allocation6], 128, 128, 8
    $region5: #{tpu_custom_call.1} parent=1 // pred_fallthru
      _
    // Predicated region
    $region6: #{tpu_custom_call.1} parent=1 // pred_check
      _
    $region7: #{tpu_custom_call.1} parent=1 // pred_check_branch
      %39 = sbr.rel (0) target = $region9
    $region8: #{tpu_custom_call.1} parent=1 // pred_region
      %s41 = ssub.s32 4096, 4096
      %42 = vsyncadd [#allocation9], %s41
      %s43 = sshll.u32 [#allocation8], 4
      %s44 = int_to_ptr.vmem [resolvable:$true] %s43
      %49 = dma.hbm_to_vmem [thread:$0]  %s1, 4096, %s44, [#allocation9], 256, 256, 16
    $region9: #{tpu_custom_call.1} parent=1 // pred_fallthru
      _
    // Predicated region
    $region10: #{tpu_custom_call.1} parent=1 // pred_check
      _
    $region11: #{tpu_custom_call.1} parent=1 // pred_check_branch
      %51 = sbr.rel (0) target = $region13
    $region12: #{tpu_custom_call.1} parent=1 // pred_region
      %s53 = ssub.s32 4096, 4096
      %54 = vsyncadd [#allocation9], %s53
      %s55 = sshll.u32 [#allocation10], 4
      %s56 = int_to_ptr.vmem [resolvable:$true] %s55
      %61 = dma.hbm_to_vmem [thread:$0]  %s2, 4096, %s56, [#allocation9], 256, 256, 16
    $region13: #{tpu_custom_call.1} parent=1 // pred_fallthru
      _
    // Predicated region
    $region14: #{tpu_custom_call.1} parent=1 // pred_check
      _
    $region15: #{tpu_custom_call.1} parent=1 // pred_check_branch
      %63 = sbr.rel (0) target = $region17
    $region16: #{tpu_custom_call.1} parent=1 // pred_region
      %s65 = ssub.s32 64, 64
      %66 = vsyncadd [#allocation12], %s65
      %s68 = sshll.u32 [#allocation11], 4
      %s69 = int_to_ptr.vmem [resolvable:$true] %s68
      %71 = dma.hbm_to_vmem [thread:$0]  %s3, 64, %s69, [#allocation12]
    $region17: #{tpu_custom_call.1} parent=1 // pred_fallthru
      _
    // Predicated region
    $region18: #{tpu_custom_call.1} parent=1 // pred_check
      _
    $region19: #{tpu_custom_call.1} parent=1 // pred_check_branch
      %73 = sbr.rel (0) target = $region21
    $region20: #{tpu_custom_call.1} parent=1 // pred_region
      %s75 = ssub.s32 4096, 4096
      %76 = vsyncadd [#allocation12], %s75
      %s77 = sshll.u32 [#allocation13], 4
      %s78 = int_to_ptr.vmem [resolvable:$true] %s77
      %83 = dma.hbm_to_vmem [thread:$0]  %s4, 4096, %s78, [#allocation12], 256, 256, 16
    $region21: #{tpu_custom_call.1} parent=1 // pred_fallthru
      _
    // Predicated region
    $region22: #{tpu_custom_call.1} parent=1 // pred_check
      _
    $region23: #{tpu_custom_call.1} parent=1 // pred_check_branch
      %85 = sbr.rel (0) target = $region25
    $region24: #{tpu_custom_call.1} parent=1 // pred_region
      %s87 = ssub.s32 4096, 4096
      %88 = vsyncadd [#allocation15], %s87
      %s89 = sshll.u32 [#allocation14], 4
      %s90 = int_to_ptr.vmem [resolvable:$true] %s89
      %95 = dma.hbm_to_vmem [thread:$0]  %s5, 4096, %s90, [#allocation15], 256, 256, 16
    $region25: #{tpu_custom_call.1} parent=1 // pred_fallthru
      _
    // Predicated region
    $region26: #{tpu_custom_call.1} parent=1 // pred_check
      _
    $region27: #{tpu_custom_call.1} parent=1 // pred_check_branch
      %97 = sbr.rel (0) target = $region29
    $region28: #{tpu_custom_call.1} parent=1 // pred_region
      %s99 = ssub.s32 64, 64
      %100 = vsyncadd [#allocation15], %s99
      %s102 = sshll.u32 [#allocation16], 4
      %s103 = int_to_ptr.vmem [resolvable:$true] %s102
      %105 = dma.hbm_to_vmem [thread:$0]  %s6, 64, %s103, [#allocation15]
    $region29: #{tpu_custom_call.1} parent=1 // pred_fallthru
      _
    // Predicated region
    $region30: #{tpu_custom_call.1} parent=1 // pred_check
      _
    $region31: #{tpu_custom_call.1} parent=1 // pred_check_branch
      %107 = sbr.rel (0) target = $region33
    $region32: #{tpu_custom_call.1} parent=1 // pred_region
      %s109 = ssub.s32 1024, 1024
      %110 = vsyncadd [#allocation18], %s109
      %s111 = sshll.u32 [#allocation17], 4
      %s112 = int_to_ptr.vmem [resolvable:$true] %s111
      %117 = dma.hbm_to_vmem [thread:$0]  %s7, 1024, %s112, [#allocation18], 64, 64, 4
    $region33: #{tpu_custom_call.1} parent=1 // pred_fallthru
      _
    // Predicated region
    $region34: #{tpu_custom_call.1} parent=1 // pred_check
      _
    $region35: #{tpu_custom_call.1} parent=1 // pred_check_branch
      %119 = sbr.rel (0) target = $region37
    $region36: #{tpu_custom_call.1} parent=1 // pred_region
      _
    $region37: #{tpu_custom_call.1} parent=1 // pred_fallthru
      _
    // Predicated region
    $region38: #{tpu_custom_call.1} parent=1 // pred_check
      _
    $region39: #{tpu_custom_call.1} parent=1 // pred_check_branch
      %121 = sbr.rel (0) target = $region41
    $region40: #{tpu_custom_call.1} parent=1 // pred_region
      _
    $region41: #{tpu_custom_call.1} parent=1 // pred_fallthru
      _
    // Predicated region
    $region42: #{tpu_custom_call.1} parent=1 // pred_check
      _
    $region43: #{tpu_custom_call.1} parent=1 // pred_check_branch
      %123 = sbr.rel (0) target = $region45
    $region44: #{tpu_custom_call.1} parent=1 // pred_region
      _
    $region45: #{tpu_custom_call.1} parent=1 // pred_fallthru
      _
    // Predicated region
    $region46: #{tpu_custom_call.1} parent=1 // pred_check
      _
    $region47: #{tpu_custom_call.1} parent=1 // pred_check_branch
      %125 = sbr.rel (0) target = $region49
    $region48: #{tpu_custom_call.1} parent=1 // pred_region
      %126 = dma.done [#allocation6], 1024
    $region49: #{tpu_custom_call.1} parent=1 // pred_fallthru
      _
    // Predicated region
    $region50: #{tpu_custom_call.1} parent=1 // pred_check
      _
    $region51: #{tpu_custom_call.1} parent=1 // pred_check_branch
      %128 = sbr.rel (0) target = $region53
    $region52: #{tpu_custom_call.1} parent=1 // pred_region
      %129 = dma.done [#allocation9], 4096
    $region53: #{tpu_custom_call.1} parent=1 // pred_fallthru
      _
    // Predicated region
    $region54: #{tpu_custom_call.1} parent=1 // pred_check
      _
    $region55: #{tpu_custom_call.1} parent=1 // pred_check_branch
      %131 = sbr.rel (0) target = $region57
    $region56: #{tpu_custom_call.1} parent=1 // pred_region
      %132 = dma.done [#allocation9], 4096
    $region57: #{tpu_custom_call.1} parent=1 // pred_fallthru
      _
    // Predicated region
    $region58: #{tpu_custom_call.1} parent=1 // pred_check
      _
    $region59: #{tpu_custom_call.1} parent=1 // pred_check_branch
      %134 = sbr.rel (0) target = $region61
    $region60: #{tpu_custom_call.1} parent=1 // pred_region
      %135 = dma.done [#allocation12], 64
    $region61: #{tpu_custom_call.1} parent=1 // pred_fallthru
      _
    // Predicated region
    $region62: #{tpu_custom_call.1} parent=1 // pred_check
      _
    $region63: #{tpu_custom_call.1} parent=1 // pred_check_branch
      %137 = sbr.rel (0) target = $region65
    $region64: #{tpu_custom_call.1} parent=1 // pred_region
      %138 = dma.done [#allocation12], 4096
    $region65: #{tpu_custom_call.1} parent=1 // pred_fallthru
      _
    // Predicated region
    $region66: #{tpu_custom_call.1} parent=1 // pred_check
      _
    $region67: #{tpu_custom_call.1} parent=1 // pred_check_branch
      %140 = sbr.rel (0) target = $region69
    $region68: #{tpu_custom_call.1} parent=1 // pred_region
      %141 = dma.done [#allocation15], 4096
    $region69: #{tpu_custom_call.1} parent=1 // pred_fallthru
      _
    // Predicated region
    $region70: #{tpu_custom_call.1} parent=1 // pred_check
      _
    $region71: #{tpu_custom_call.1} parent=1 // pred_check_branch
      %143 = sbr.rel (0) target = $region73
    $region72: #{tpu_custom_call.1} parent=1 // pred_region
      %144 = dma.done [#allocation15], 64
    $region73: #{tpu_custom_call.1} parent=1 // pred_fallthru
      _
    // Predicated region
    $region74: #{tpu_custom_call.1} parent=1 // pred_check
      _
    $region75: #{tpu_custom_call.1} parent=1 // pred_check_branch
      %146 = sbr.rel (0) target = $region77
    $region76: #{tpu_custom_call.1} parent=1 // pred_region
      %147 = dma.done [#allocation18], 1024
    $region77: #{tpu_custom_call.1} parent=1 // pred_fallthru
      _
    %v149 = vld [vmem:[#allocation8] sm:$0xff]
    %v150 = vld [vmem:[#allocation8 + $0x8] sm:$0xff]
    %v151 = vld [vmem:[#allocation8 + $0x10] sm:$0xff]
    %v152 = vld [vmem:[#allocation8 + $0x18] sm:$0xff]
    %v153 = vld [vmem:[#allocation8 + $0x20] sm:$0xff]
    %v154 = vld [vmem:[#allocation8 + $0x28] sm:$0xff]
    %v155 = vld [vmem:[#allocation8 + $0x30] sm:$0xff]
    %v156 = vld [vmem:[#allocation8 + $0x38] sm:$0xff]
    %v157 = vld [vmem:[#allocation8 + $0x40] sm:$0xff]
    %v158 = vld [vmem:[#allocation8 + $0x48] sm:$0xff]
    %v159 = vld [vmem:[#allocation8 + $0x50] sm:$0xff]
    %v160 = vld [vmem:[#allocation8 + $0x58] sm:$0xff]
    %v161 = vld [vmem:[#allocation8 + $0x60] sm:$0xff]
    %v162 = vld [vmem:[#allocation8 + $0x68] sm:$0xff]
    %v163 = vld [vmem:[#allocation8 + $0x70] sm:$0xff]
    %v164 = vld [vmem:[#allocation8 + $0x78] sm:$0xff]
    %v165 = vld [vmem:[#allocation8 + $0x80] sm:$0xff]
    %v166 = vld [vmem:[#allocation8 + $0x88] sm:$0xff]
    %v167 = vld [vmem:[#allocation8 + $0x90] sm:$0xff]
    %v168 = vld [vmem:[#allocation8 + $0x98] sm:$0xff]
    %v169 = vld [vmem:[#allocation8 + $0xa0] sm:$0xff]
    %v170 = vld [vmem:[#allocation8 + $0xa8] sm:$0xff]
    %v171 = vld [vmem:[#allocation8 + $0xb0] sm:$0xff]
    %v172 = vld [vmem:[#allocation8 + $0xb8] sm:$0xff]
    %v173 = vld [vmem:[#allocation8 + $0xc0] sm:$0xff]
    %v174 = vld [vmem:[#allocation8 + $0xc8] sm:$0xff]
    %v175 = vld [vmem:[#allocation8 + $0xd0] sm:$0xff]
    %v176 = vld [vmem:[#allocation8 + $0xd8] sm:$0xff]
    %v177 = vld [vmem:[#allocation8 + $0xe0] sm:$0xff]
    %v178 = vld [vmem:[#allocation8 + $0xe8] sm:$0xff]
    %v179 = vld [vmem:[#allocation8 + $0xf0] sm:$0xff]
    %v180 = vld [vmem:[#allocation8 + $0xf8] sm:$0xff]
    %v181 = vld [vmem:[#allocation13] sm:$0xff]
    %v182 = vld [vmem:[#allocation13 + $0x8] sm:$0xff]
    %v183 = vld [vmem:[#allocation13 + $0x10] sm:$0xff]
    %v184 = vld [vmem:[#allocation13 + $0x18] sm:$0xff]
    %v185 = vld [vmem:[#allocation13 + $0x20] sm:$0xff]
    %v186 = vld [vmem:[#allocation13 + $0x28] sm:$0xff]
    %v187 = vld [vmem:[#allocation13 + $0x30] sm:$0xff]
    %v188 = vld [vmem:[#allocation13 + $0x38] sm:$0xff]
    %v189 = vld [vmem:[#allocation13 + $0x40] sm:$0xff]
    %v190 = vld [vmem:[#allocation13 + $0x48] sm:$0xff]
    %v191 = vld [vmem:[#allocation13 + $0x50] sm:$0xff]
    %v192 = vld [vmem:[#allocation13 + $0x58] sm:$0xff]
    %v193 = vld [vmem:[#allocation13 + $0x60] sm:$0xff]
    %v194 = vld [vmem:[#allocation13 + $0x68] sm:$0xff]
    %v195 = vld [vmem:[#allocation13 + $0x70] sm:$0xff]
    %v196 = vld [vmem:[#allocation13 + $0x78] sm:$0xff]
    %v197 = vld [vmem:[#allocation13 + $0x80] sm:$0xff]
    %v198 = vld [vmem:[#allocation13 + $0x88] sm:$0xff]
    %v199 = vld [vmem:[#allocation13 + $0x90] sm:$0xff]
    %v200 = vld [vmem:[#allocation13 + $0x98] sm:$0xff]
    %v201 = vld [vmem:[#allocation13 + $0xa0] sm:$0xff]
    %v202 = vld [vmem:[#allocation13 + $0xa8] sm:$0xff]
    %v203 = vld [vmem:[#allocation13 + $0xb0] sm:$0xff]
    %v204 = vld [vmem:[#allocation13 + $0xb8] sm:$0xff]
    %v205 = vld [vmem:[#allocation13 + $0xc0] sm:$0xff]
    %v206 = vld [vmem:[#allocation13 + $0xc8] sm:$0xff]
    %v207 = vld [vmem:[#allocation13 + $0xd0] sm:$0xff]
    %v208 = vld [vmem:[#allocation13 + $0xd8] sm:$0xff]
    %v209 = vld [vmem:[#allocation13 + $0xe0] sm:$0xff]
    %v210 = vld [vmem:[#allocation13 + $0xe8] sm:$0xff]
    %v211 = vld [vmem:[#allocation13 + $0xf0] sm:$0xff]
    %v212 = vld [vmem:[#allocation13 + $0xf8] sm:$0xff]
    %v213 = vld [vmem:[#allocation10] sm:$0xff]
    %v214 = vld [vmem:[#allocation10 + $0x8] sm:$0xff]
    %v215 = vld [vmem:[#allocation10 + $0x10] sm:$0xff]
    %v216 = vld [vmem:[#allocation10 + $0x18] sm:$0xff]
    %v217 = vld [vmem:[#allocation10 + $0x20] sm:$0xff]
    %v218 = vld [vmem:[#allocation10 + $0x28] sm:$0xff]
    %v219 = vld [vmem:[#allocation10 + $0x30] sm:$0xff]
    %v220 = vld [vmem:[#allocation10 + $0x38] sm:$0xff]
    %v221 = vld [vmem:[#allocation10 + $0x40] sm:$0xff]
    %v222 = vld [vmem:[#allocation10 + $0x48] sm:$0xff]
    %v223 = vld [vmem:[#allocation10 + $0x50] sm:$0xff]
    %v224 = vld [vmem:[#allocation10 + $0x58] sm:$0xff]
    %v225 = vld [vmem:[#allocation10 + $0x60] sm:$0xff]
    %v226 = vld [vmem:[#allocation10 + $0x68] sm:$0xff]
    %v227 = vld [vmem:[#allocation10 + $0x70] sm:$0xff]
    %v228 = vld [vmem:[#allocation10 + $0x78] sm:$0xff]
    %v229 = vld [vmem:[#allocation10 + $0x80] sm:$0xff]
    %v230 = vld [vmem:[#allocation10 + $0x88] sm:$0xff]
    %v231 = vld [vmem:[#allocation10 + $0x90] sm:$0xff]
    %v232 = vld [vmem:[#allocation10 + $0x98] sm:$0xff]
    %v233 = vld [vmem:[#allocation10 + $0xa0] sm:$0xff]
    %v234 = vld [vmem:[#allocation10 + $0xa8] sm:$0xff]
    %v235 = vld [vmem:[#allocation10 + $0xb0] sm:$0xff]
    %v236 = vld [vmem:[#allocation10 + $0xb8] sm:$0xff]
    %v237 = vld [vmem:[#allocation10 + $0xc0] sm:$0xff]
    %v238 = vld [vmem:[#allocation10 + $0xc8] sm:$0xff]
    %v239 = vld [vmem:[#allocation10 + $0xd0] sm:$0xff]
    %v240 = vld [vmem:[#allocation10 + $0xd8] sm:$0xff]
    %v241 = vld [vmem:[#allocation10 + $0xe0] sm:$0xff]
    %v242 = vld [vmem:[#allocation10 + $0xe8] sm:$0xff]
    %v243 = vld [vmem:[#allocation10 + $0xf0] sm:$0xff]
    %v244 = vld [vmem:[#allocation10 + $0xf8] sm:$0xff]
    %v245 = vld [vmem:[#allocation14] sm:$0xff]
    %v246 = vld [vmem:[#allocation14 + $0x8] sm:$0xff]
    %v247 = vld [vmem:[#allocation14 + $0x10] sm:$0xff]
    %v248 = vld [vmem:[#allocation14 + $0x18] sm:$0xff]
    %v249 = vld [vmem:[#allocation14 + $0x20] sm:$0xff]
    %v250 = vld [vmem:[#allocation14 + $0x28] sm:$0xff]
    %v251 = vld [vmem:[#allocation14 + $0x30] sm:$0xff]
    %v252 = vld [vmem:[#allocation14 + $0x38] sm:$0xff]
    %v253 = vld [vmem:[#allocation14 + $0x40] sm:$0xff]
    %v254 = vld [vmem:[#allocation14 + $0x48] sm:$0xff]
    %v255 = vld [vmem:[#allocation14 + $0x50] sm:$0xff]
    %v256 = vld [vmem:[#allocation14 + $0x58] sm:$0xff]
    %v257 = vld [vmem:[#allocation14 + $0x60] sm:$0xff]
    %v258 = vld [vmem:[#allocation14 + $0x68] sm:$0xff]
    %v259 = vld [vmem:[#allocation14 + $0x70] sm:$0xff]
    %v260 = vld [vmem:[#allocation14 + $0x78] sm:$0xff]
    %v261 = vld [vmem:[#allocation14 + $0x80] sm:$0xff]
    %v262 = vld [vmem:[#allocation14 + $0x88] sm:$0xff]
    %v263 = vld [vmem:[#allocation14 + $0x90] sm:$0xff]
    %v264 = vld [vmem:[#allocation14 + $0x98] sm:$0xff]
    %v265 = vld [vmem:[#allocation14 + $0xa0] sm:$0xff]
    %v266 = vld [vmem:[#allocation14 + $0xa8] sm:$0xff]
    %v267 = vld [vmem:[#allocation14 + $0xb0] sm:$0xff]
    %v268 = vld [vmem:[#allocation14 + $0xb8] sm:$0xff]
    %v269 = vld [vmem:[#allocation14 + $0xc0] sm:$0xff]
    %v270 = vld [vmem:[#allocation14 + $0xc8] sm:$0xff]
    %v271 = vld [vmem:[#allocation14 + $0xd0] sm:$0xff]
    %v272 = vld [vmem:[#allocation14 + $0xd8] sm:$0xff]
    %v273 = vld [vmem:[#allocation14 + $0xe0] sm:$0xff]
    %v274 = vld [vmem:[#allocation14 + $0xe8] sm:$0xff]
    %v275 = vld [vmem:[#allocation14 + $0xf0] sm:$0xff]
    %v276 = vld [vmem:[#allocation14 + $0xf8] sm:$0xff]
    %v277 = vld [vmem:[#allocation11] sm:$0xf]
    %v278 = vld [vmem:[#allocation16] sm:$0xf]
    %v279 = vld [vmem:[%s9] sm:$0xff]
    %v280 = vld [vmem:[%s9 + $0x8] sm:$0xff]
    %281 = vst [vmem:[#allocation3] sm:$0xff] %v279
    %282 = vst [vmem:[#allocation3 + $0x8] sm:$0xff] %v280
    %v283 = vld [vmem:[%s10] sm:$0xff]
    %v284 = vld [vmem:[%s10 + $0x8] sm:$0xff]
    %285 = vst [vmem:[#allocation4] sm:$0xff] %v283
    %286 = vst [vmem:[#allocation4 + $0x8] sm:$0xff] %v284
    %v287 = vld [vmem:[#allocation5] sm:$0xff]
    %v288 = vld [vmem:[#allocation5 + $0x8] sm:$0xff]
    %v289 = vld [vmem:[#allocation5 + $0x10] sm:$0xff]
    %v290 = vld [vmem:[#allocation5 + $0x18] sm:$0xff]
    %v291 = vld [vmem:[#allocation5 + $0x20] sm:$0xff]
    %v292 = vld [vmem:[#allocation5 + $0x28] sm:$0xff]
    %v293 = vld [vmem:[#allocation5 + $0x30] sm:$0xff]
    %v294 = vld [vmem:[#allocation5 + $0x38] sm:$0xff]
    %v295 = vpack.c.bf16 %v288, %v287
    %v296 = vpack.c.bf16 %v290, %v289
    %v297 = vpack.c.bf16 %v292, %v291
    %v298 = vpack.c.bf16 %v294, %v293
    %v300 = vlaneseq
    %v301 = vshrl.u32 %v300, 7
    %v302 = vsub.s32 0, %v301
    %v303 = vrot.slane %v277, %v302
    %v304 = vlaneseq
    %v305 = vshrl.u32 %v304, 7
    %v306 = vsub.s32 1, %v305
    %v307 = vrot.slane %v277, %v306
    %v308 = vlaneseq
    %v309 = vshrl.u32 %v308, 7
    %v310 = vsub.s32 2, %v309
    %v311 = vrot.slane %v277, %v310
    %v312 = vlaneseq
    %v313 = vshrl.u32 %v312, 7
    %v314 = vsub.s32 3, %v313
    %v315 = vrot.slane %v277, %v314
    %v352 = vunpack.c.l.b16 %v149
    %v353 = vunpack.c.h.b16 %v149
    %v354 = vunpack.c.l.b16 %v150
    %v355 = vunpack.c.h.b16 %v150
    %v356 = vunpack.c.l.b16 %v151
    %v357 = vunpack.c.h.b16 %v151
    %v358 = vunpack.c.l.b16 %v152
    %v359 = vunpack.c.h.b16 %v152
    %v360 = vunpack.c.l.b16 %v153
    %v361 = vunpack.c.h.b16 %v153
    %v362 = vunpack.c.l.b16 %v154
    %v363 = vunpack.c.h.b16 %v154
    %v364 = vunpack.c.l.b16 %v155
    %v365 = vunpack.c.h.b16 %v155
    %v366 = vunpack.c.l.b16 %v156
    %v367 = vunpack.c.h.b16 %v156
    %v368 = vunpack.c.l.b16 %v157
    %v369 = vunpack.c.h.b16 %v157
    %v370 = vunpack.c.l.b16 %v158
    %v371 = vunpack.c.h.b16 %v158
    %v372 = vunpack.c.l.b16 %v159
    %v373 = vunpack.c.h.b16 %v159
    %v374 = vunpack.c.l.b16 %v160
    %v375 = vunpack.c.h.b16 %v160
    %v376 = vunpack.c.l.b16 %v161
    %v377 = vunpack.c.h.b16 %v161
    %v378 = vunpack.c.l.b16 %v162
    %v379 = vunpack.c.h.b16 %v162
    %v380 = vunpack.c.l.b16 %v163
    %v381 = vunpack.c.h.b16 %v163
    %v382 = vunpack.c.l.b16 %v164
    %v383 = vunpack.c.h.b16 %v164
    %v384 = vunpack.c.l.b16 %v165
    %v385 = vunpack.c.h.b16 %v165
    %v386 = vunpack.c.l.b16 %v166
    %v387 = vunpack.c.h.b16 %v166
    %v388 = vunpack.c.l.b16 %v167
    %v389 = vunpack.c.h.b16 %v167
    %v390 = vunpack.c.l.b16 %v168
    %v391 = vunpack.c.h.b16 %v168
    %v392 = vunpack.c.l.b16 %v169
    %v393 = vunpack.c.h.b16 %v169
    %v394 = vunpack.c.l.b16 %v170
    %v395 = vunpack.c.h.b16 %v170
    %v396 = vunpack.c.l.b16 %v171
    %v397 = vunpack.c.h.b16 %v171
    %v398 = vunpack.c.l.b16 %v172
    %v399 = vunpack.c.h.b16 %v172
    %v400 = vunpack.c.l.b16 %v173
    %v401 = vunpack.c.h.b16 %v173
    %v402 = vunpack.c.l.b16 %v174
    %v403 = vunpack.c.h.b16 %v174
    %v404 = vunpack.c.l.b16 %v175
    %v405 = vunpack.c.h.b16 %v175
    %v406 = vunpack.c.l.b16 %v176
    %v407 = vunpack.c.h.b16 %v176
    %v408 = vunpack.c.l.b16 %v177
    %v409 = vunpack.c.h.b16 %v177
    %v410 = vunpack.c.l.b16 %v178
    %v411 = vunpack.c.h.b16 %v178
    %v412 = vunpack.c.l.b16 %v179
    %v413 = vunpack.c.h.b16 %v179
    %v414 = vunpack.c.l.b16 %v180
    %v415 = vunpack.c.h.b16 %v180
    %v416 = vpack.c.b16 %v356, %v352
    %v417 = vpack.c.b16 %v357, %v353
    %v418 = vpack.c.b16 %v358, %v354
    %v419 = vpack.c.b16 %v359, %v355
    %v420 = vpack.c.b16 %v364, %v360
    %v421 = vpack.c.b16 %v365, %v361
    %v422 = vpack.c.b16 %v366, %v362
    %v423 = vpack.c.b16 %v367, %v363
    %v424 = vpack.c.b16 %v372, %v368
    %v425 = vpack.c.b16 %v373, %v369
    %v426 = vpack.c.b16 %v374, %v370
    %v427 = vpack.c.b16 %v375, %v371
    %v428 = vpack.c.b16 %v380, %v376
    %v429 = vpack.c.b16 %v381, %v377
    %v430 = vpack.c.b16 %v382, %v378
    %v431 = vpack.c.b16 %v383, %v379
    %v432 = vpack.c.b16 %v388, %v384
    %v433 = vpack.c.b16 %v389, %v385
    %v434 = vpack.c.b16 %v390, %v386
    %v435 = vpack.c.b16 %v391, %v387
    %v436 = vpack.c.b16 %v396, %v392
    %v437 = vpack.c.b16 %v397, %v393
    %v438 = vpack.c.b16 %v398, %v394
    %v439 = vpack.c.b16 %v399, %v395
    %v440 = vpack.c.b16 %v404, %v400
    %v441 = vpack.c.b16 %v405, %v401
    %v442 = vpack.c.b16 %v406, %v402
    %v443 = vpack.c.b16 %v407, %v403
    %v444 = vpack.c.b16 %v412, %v408
    %v445 = vpack.c.b16 %v413, %v409
    %v446 = vpack.c.b16 %v414, %v410
    %v447 = vpack.c.b16 %v415, %v411
    %480 = vmatprep.subr.bf16.mxu0 %v417
    %481 = vmatpush1.bf16.msra.mxu0 %v416
    %482 = vmatprep.subr.bf16.mxu0 %v421
    %483 = vmatpush1.bf16.msra.mxu0 %v420
    %484 = vmatprep.subr.bf16.mxu0 %v425
    %485 = vmatpush1.bf16.msra.mxu0 %v424
    %486 = vmatprep.subr.bf16.mxu0 %v429
    %487 = vmatpush1.bf16.msra.mxu0 %v428
    %488 = vmatprep.subr.bf16.mxu0 %v433
    %489 = vmatpush1.bf16.msra.mxu0 %v432
    %490 = vmatprep.subr.bf16.mxu0 %v437
    %491 = vmatpush1.bf16.msra.mxu0 %v436
    %492 = vmatprep.subr.bf16.mxu0 %v441
    %493 = vmatpush1.bf16.msra.mxu0 %v440
    %494 = vmatprep.subr.bf16.mxu0 %v445
    %495 = vmatpush1.bf16.msra.mxu0 %v444
    %496 = vmatprep.subr.bf16.mxu0 0
    %497 = vmatpush1.bf16.msra.mxu0 0
    %498 = vmatprep.subr.bf16.mxu0 0
    %499 = vmatpush1.bf16.msra.mxu0 0
    %500 = vmatprep.subr.bf16.mxu0 0
    %501 = vmatpush1.bf16.msra.mxu0 0
    %502 = vmatprep.subr.bf16.mxu0 0
    %503 = vmatpush1.bf16.msra.mxu0 0
    %504 = vmatprep.subr.bf16.mxu0 0
    %505 = vmatpush1.bf16.msra.mxu0 0
    %506 = vmatprep.subr.bf16.mxu0 0
    %507 = vmatpush1.bf16.msra.mxu0 0
    %508 = vmatprep.subr.bf16.mxu0 0
    %509 = vmatpush1.bf16.msra.mxu0 0
    %510 = vmatprep.subr.bf16.mxu0 0
    %511 = vmatpush1.bf16.msra.mxu0 0
    %512 = vmatprep.mubr.bf16.mxu0 0
    %513 = vmatmul.mubr.bf16.gmra.mrb[0].mxu0 %v295
    %v514 = vpop.f32.mrb[0].mxu0
    %v515 = vadd.f32 %v303, %v514
    %v516 = vpop.f32.mrb[0].mxu0
    %v517 = vadd.f32 %v307, %v516
    %v518 = vpop.f32.mrb[0].mxu0
    %v519 = vadd.f32 %v303, %v518
    %v520 = vpop.f32.mrb[0].mxu0
    %v521 = vadd.f32 %v307, %v520
    %522 = vmatprep.mubr.bf16.mxu0 0
    %523 = vmatmul.mubr.bf16.gmra.mrb[0].mxu0 %v296
    %v524 = vpop.f32.mrb[0].mxu0
    %v525 = vadd.f32 %v303, %v524
    %v526 = vpop.f32.mrb[0].mxu0
    %v527 = vadd.f32 %v307, %v526
    %v528 = vpop.f32.mrb[0].mxu0
    %v529 = vadd.f32 %v303, %v528
    %v530 = vpop.f32.mrb[0].mxu0
    %v531 = vadd.f32 %v307, %v530
    %532 = vmatprep.mubr.bf16.mxu0 0
    %533 = vmatmul.mubr.bf16.gmra.mrb[0].mxu0 %v297
    %v534 = vpop.f32.mrb[0].mxu0
    %v535 = vadd.f32 %v303, %v534
    %v536 = vpop.f32.mrb[0].mxu0
    %v537 = vadd.f32 %v307, %v536
    %v538 = vpop.f32.mrb[0].mxu0
    %v539 = vadd.f32 %v303, %v538
    %v540 = vpop.f32.mrb[0].mxu0
    %v541 = vadd.f32 %v307, %v540
    %542 = vmatprep.mubr.bf16.mxu0 0
    %543 = vmatmul.mubr.bf16.gmra.mrb[0].mxu0 %v298
    %v544 = vpop.f32.mrb[0].mxu0
    %v545 = vadd.f32 %v303, %v544
    %v546 = vpop.f32.mrb[0].mxu0
    %v547 = vadd.f32 %v307, %v546
    %v548 = vpop.f32.mrb[0].mxu0
    %v549 = vadd.f32 %v303, %v548
    %v550 = vpop.f32.mrb[0].mxu0
    %v551 = vadd.f32 %v307, %v550
    %552 = vdwg.mxu0
    %553 = vmatprep.subr.bf16.mxu0 %v419
    %554 = vmatpush1.bf16.msra.mxu0 %v418
    %555 = vmatprep.subr.bf16.mxu0 %v423
    %556 = vmatpush1.bf16.msra.mxu0 %v422
    %557 = vmatprep.subr.bf16.mxu0 %v427
    %558 = vmatpush1.bf16.msra.mxu0 %v426
    %559 = vmatprep.subr.bf16.mxu0 %v431
    %560 = vmatpush1.bf16.msra.mxu0 %v430
    %561 = vmatprep.subr.bf16.mxu0 %v435
    %562 = vmatpush1.bf16.msra.mxu0 %v434
    %563 = vmatprep.subr.bf16.mxu0 %v439
    %564 = vmatpush1.bf16.msra.mxu0 %v438
    %565 = vmatprep.subr.bf16.mxu0 %v443
    %566 = vmatpush1.bf16.msra.mxu0 %v442
    %567 = vmatprep.subr.bf16.mxu0 %v447
    %568 = vmatpush1.bf16.msra.mxu0 %v446
    %569 = vmatprep.subr.bf16.mxu0 0
    %570 = vmatpush1.bf16.msra.mxu0 0
    %571 = vmatprep.subr.bf16.mxu0 0
    %572 = vmatpush1.bf16.msra.mxu0 0
    %573 = vmatprep.subr.bf16.mxu0 0
    %574 = vmatpush1.bf16.msra.mxu0 0
    %575 = vmatprep.subr.bf16.mxu0 0
    %576 = vmatpush1.bf16.msra.mxu0 0
    %577 = vmatprep.subr.bf16.mxu0 0
    %578 = vmatpush1.bf16.msra.mxu0 0
    %579 = vmatprep.subr.bf16.mxu0 0
    %580 = vmatpush1.bf16.msra.mxu0 0
    %581 = vmatprep.subr.bf16.mxu0 0
    %582 = vmatpush1.bf16.msra.mxu0 0
    %583 = vmatprep.subr.bf16.mxu0 0
    %584 = vmatpush1.bf16.msra.mxu0 0
    %585 = vmatprep.mubr.bf16.mxu0 0
    %586 = vmatmul.mubr.bf16.gmra.mrb[0].mxu0 %v295
    %v587 = vpop.f32.mrb[0].mxu0
    %v588 = vadd.f32 %v311, %v587
    %v589 = vpop.f32.mrb[0].mxu0
    %v590 = vadd.f32 %v315, %v589
    %v591 = vpop.f32.mrb[0].mxu0
    %v592 = vadd.f32 %v311, %v591
    %v593 = vpop.f32.mrb[0].mxu0
    %v594 = vadd.f32 %v315, %v593
    %595 = vmatprep.mubr.bf16.mxu0 0
    %596 = vmatmul.mubr.bf16.gmra.mrb[0].mxu0 %v296
    %v597 = vpop.f32.mrb[0].mxu0
    %v598 = vadd.f32 %v311, %v597
    %v599 = vpop.f32.mrb[0].mxu0
    %v600 = vadd.f32 %v315, %v599
    %v601 = vpop.f32.mrb[0].mxu0
    %v602 = vadd.f32 %v311, %v601
    %v603 = vpop.f32.mrb[0].mxu0
    %v604 = vadd.f32 %v315, %v603
    %605 = vmatprep.mubr.bf16.mxu0 0
    %606 = vmatmul.mubr.bf16.gmra.mrb[0].mxu0 %v297
    %v607 = vpop.f32.mrb[0].mxu0
    %v608 = vadd.f32 %v311, %v607
    %v609 = vpop.f32.mrb[0].mxu0
    %v610 = vadd.f32 %v315, %v609
    %v611 = vpop.f32.mrb[0].mxu0
    %v612 = vadd.f32 %v311, %v611
    %v613 = vpop.f32.mrb[0].mxu0
    %v614 = vadd.f32 %v315, %v613
    %615 = vmatprep.mubr.bf16.mxu0 0
    %616 = vmatmul.mubr.bf16.gmra.mrb[0].mxu0 %v298
    %v617 = vpop.f32.mrb[0].mxu0
    %v618 = vadd.f32 %v311, %v617
    %v619 = vpop.f32.mrb[0].mxu0
    %v620 = vadd.f32 %v315, %v619
    %v621 = vpop.f32.mrb[0].mxu0
    %v622 = vadd.f32 %v311, %v621
    %v623 = vpop.f32.mrb[0].mxu0
    %v624 = vadd.f32 %v315, %v623
    %625 = vdwg.mxu0
    %626 = vst [vmem:[#allocation2] sm:$0xff] %v515
    %627 = vst [vmem:[#allocation2 + $0x8] sm:$0xff] %v517
    %628 = vst [vmem:[#allocation2 + $0x10] sm:$0xff] %v588
    %629 = vst [vmem:[#allocation2 + $0x18] sm:$0xff] %v590
    %630 = vst [vmem:[#allocation2 + $0x20] sm:$0xff] %v519
    %631 = vst [vmem:[#allocation2 + $0x28] sm:$0xff] %v521
    %632 = vst [vmem:[#allocation2 + $0x30] sm:$0xff] %v592
    %633 = vst [vmem:[#allocation2 + $0x38] sm:$0xff] %v594
    %634 = vst [vmem:[#allocation2 + $0x40] sm:$0xff] %v525
    %635 = vst [vmem:[#allocation2 + $0x48] sm:$0xff] %v527
    %636 = vst [vmem:[#allocation2 + $0x50] sm:$0xff] %v598
    %637 = vst [vmem:[#allocation2 + $0x58] sm:$0xff] %v600
    %638 = vst [vmem:[#allocation2 + $0x60] sm:$0xff] %v529
    %639 = vst [vmem:[#allocation2 + $0x68] sm:$0xff] %v531
    %640 = vst [vmem:[#allocation2 + $0x70] sm:$0xff] %v602
    %641 = vst [vmem:[#allocation2 + $0x78] sm:$0xff] %v604
    %642 = vst [vmem:[#allocation2 + $0x80] sm:$0xff] %v535
    %643 = vst [vmem:[#allocation2 + $0x88] sm:$0xff] %v537
    %644 = vst [vmem:[#allocation2 + $0x90] sm:$0xff] %v608
    %645 = vst [vmem:[#allocation2 + $0x98] sm:$0xff] %v610
    %646 = vst [vmem:[#allocation2 + $0xa0] sm:$0xff] %v539
    %647 = vst [vmem:[#allocation2 + $0xa8] sm:$0xff] %v541
    %648 = vst [vmem:[#allocation2 + $0xb0] sm:$0xff] %v612
    %649 = vst [vmem:[#allocation2 + $0xb8] sm:$0xff] %v614
    %650 = vst [vmem:[#allocation2 + $0xc0] sm:$0xff] %v545
    %651 = vst [vmem:[#allocation2 + $0xc8] sm:$0xff] %v547
    %652 = vst [vmem:[#allocation2 + $0xd0] sm:$0xff] %v618
    %653 = vst [vmem:[#allocation2 + $0xd8] sm:$0xff] %v620
    %654 = vst [vmem:[#allocation2 + $0xe0] sm:$0xff] %v549
    %655 = vst [vmem:[#allocation2 + $0xe8] sm:$0xff] %v551
    %656 = vst [vmem:[#allocation2 + $0xf0] sm:$0xff] %v622
    %657 = vst [vmem:[#allocation2 + $0xf8] sm:$0xff] %v624
    %v659 = vlaneseq
    %v660 = vshrl.u32 %v659, 7
    %v661 = vsub.s32 0, %v660
    %v662 = vrot.slane %v278, %v661
    %v663 = vlaneseq
    %v664 = vshrl.u32 %v663, 7
    %v665 = vsub.s32 1, %v664
    %v666 = vrot.slane %v278, %v665
    %v667 = vlaneseq
    %v668 = vshrl.u32 %v667, 7
    %v669 = vsub.s32 2, %v668
    %v670 = vrot.slane %v278, %v669
    %v671 = vlaneseq
    %v672 = vshrl.u32 %v671, 7
    %v673 = vsub.s32 3, %v672
    %v674 = vrot.slane %v278, %v673
    %s679 = smul.u32 0, 4
    %s680 = smul.addr %s679, 8
    %s681 = scalar_lea.vmem [#allocation2], %s680
    %v682 = vld [vmem:[%s681] sm:$0xff]
    %v683 = vld [vmem:[%s681 + $0x8] sm:$0xff]
    %v684 = vld [vmem:[%s681 + $0x10] sm:$0xff]
    %v685 = vld [vmem:[%s681 + $0x18] sm:$0xff]
    %v686 = vld [vmem:[#allocation3] sm:$0xff]
    %v687 = vld [vmem:[#allocation4] sm:$0xff]
    %v688 = vpack.c.bf16 %v686, %v686
    %v721 = vunpack.c.l.b16 %v213
    %v722 = vunpack.c.h.b16 %v213
    %v723 = vunpack.c.l.b16 %v214
    %v724 = vunpack.c.h.b16 %v214
    %v725 = vunpack.c.l.b16 %v215
    %v726 = vunpack.c.h.b16 %v215
    %v727 = vunpack.c.l.b16 %v216
    %v728 = vunpack.c.h.b16 %v216
    %v729 = vunpack.c.l.b16 %v217
    %v730 = vunpack.c.h.b16 %v217
    %v731 = vunpack.c.l.b16 %v218
    %v732 = vunpack.c.h.b16 %v218
    %v733 = vunpack.c.l.b16 %v219
    %v734 = vunpack.c.h.b16 %v219
    %v735 = vunpack.c.l.b16 %v220
    %v736 = vunpack.c.h.b16 %v220
    %v737 = vunpack.c.l.b16 %v221
    %v738 = vunpack.c.h.b16 %v221
    %v739 = vunpack.c.l.b16 %v222
    %v740 = vunpack.c.h.b16 %v222
    %v741 = vunpack.c.l.b16 %v223
    %v742 = vunpack.c.h.b16 %v223
    %v743 = vunpack.c.l.b16 %v224
    %v744 = vunpack.c.h.b16 %v224
    %v745 = vunpack.c.l.b16 %v225
    %v746 = vunpack.c.h.b16 %v225
    %v747 = vunpack.c.l.b16 %v226
    %v748 = vunpack.c.h.b16 %v226
    %v749 = vunpack.c.l.b16 %v227
    %v750 = vunpack.c.h.b16 %v227
    %v751 = vunpack.c.l.b16 %v228
    %v752 = vunpack.c.h.b16 %v228
    %v753 = vunpack.c.l.b16 %v229
    %v754 = vunpack.c.h.b16 %v229
    %v755 = vunpack.c.l.b16 %v230
    %v756 = vunpack.c.h.b16 %v230
    %v757 = vunpack.c.l.b16 %v231
    %v758 = vunpack.c.h.b16 %v231
    %v759 = vunpack.c.l.b16 %v232
    %v760 = vunpack.c.h.b16 %v232
    %v761 = vunpack.c.l.b16 %v233
    %v762 = vunpack.c.h.b16 %v233
    %v763 = vunpack.c.l.b16 %v234
    %v764 = vunpack.c.h.b16 %v234
    %v765 = vunpack.c.l.b16 %v235
    %v766 = vunpack.c.h.b16 %v235
    %v767 = vunpack.c.l.b16 %v236
    %v768 = vunpack.c.h.b16 %v236
    %v769 = vunpack.c.l.b16 %v237
    %v770 = vunpack.c.h.b16 %v237
    %v771 = vunpack.c.l.b16 %v238
    %v772 = vunpack.c.h.b16 %v238
    %v773 = vunpack.c.l.b16 %v239
    %v774 = vunpack.c.h.b16 %v239
    %v775 = vunpack.c.l.b16 %v240
    %v776 = vunpack.c.h.b16 %v240
    %v777 = vunpack.c.l.b16 %v241
    %v778 = vunpack.c.h.b16 %v241
    %v779 = vunpack.c.l.b16 %v242
    %v780 = vunpack.c.h.b16 %v242
    %v781 = vunpack.c.l.b16 %v243
    %v782 = vunpack.c.h.b16 %v243
    %v783 = vunpack.c.l.b16 %v244
    %v784 = vunpack.c.h.b16 %v244
    %v785 = vpack.c.b16 %v725, %v721
    %v786 = vpack.c.b16 %v726, %v722
    %v787 = vpack.c.b16 %v727, %v723
    %v788 = vpack.c.b16 %v728, %v724
    %v789 = vpack.c.b16 %v733, %v729
    %v790 = vpack.c.b16 %v734, %v730
    %v791 = vpack.c.b16 %v735, %v731
    %v792 = vpack.c.b16 %v736, %v732
    %v793 = vpack.c.b16 %v741, %v737
    %v794 = vpack.c.b16 %v742, %v738
    %v795 = vpack.c.b16 %v743, %v739
    %v796 = vpack.c.b16 %v744, %v740
    %v797 = vpack.c.b16 %v749, %v745
    %v798 = vpack.c.b16 %v750, %v746
    %v799 = vpack.c.b16 %v751, %v747
    %v800 = vpack.c.b16 %v752, %v748
    %v801 = vpack.c.b16 %v757, %v753
    %v802 = vpack.c.b16 %v758, %v754
    %v803 = vpack.c.b16 %v759, %v755
    %v804 = vpack.c.b16 %v760, %v756
    %v805 = vpack.c.b16 %v765, %v761
    %v806 = vpack.c.b16 %v766, %v762
    %v807 = vpack.c.b16 %v767, %v763
    %v808 = vpack.c.b16 %v768, %v764
    %v809 = vpack.c.b16 %v773, %v769
    %v810 = vpack.c.b16 %v774, %v770
    %v811 = vpack.c.b16 %v775, %v771
    %v812 = vpack.c.b16 %v776, %v772
    %v813 = vpack.c.b16 %v781, %v777
    %v814 = vpack.c.b16 %v782, %v778
    %v815 = vpack.c.b16 %v783, %v779
    %v816 = vpack.c.b16 %v784, %v780
    %849 = vmatprep.subr.bf16.mxu0 %v786
    %850 = vmatpush1.bf16.msra.mxu0 %v785
    %851 = vmatprep.subr.bf16.mxu0 %v790
    %852 = vmatpush1.bf16.msra.mxu0 %v789
    %853 = vmatprep.subr.bf16.mxu0 %v794
    %854 = vmatpush1.bf16.msra.mxu0 %v793
    %855 = vmatprep.subr.bf16.mxu0 %v798
    %856 = vmatpush1.bf16.msra.mxu0 %v797
    %857 = vmatprep.subr.bf16.mxu0 %v802
    %858 = vmatpush1.bf16.msra.mxu0 %v801
    %859 = vmatprep.subr.bf16.mxu0 %v806
    %860 = vmatpush1.bf16.msra.mxu0 %v805
    %861 = vmatprep.subr.bf16.mxu0 %v810
    %862 = vmatpush1.bf16.msra.mxu0 %v809
    %863 = vmatprep.subr.bf16.mxu0 %v814
    %864 = vmatpush1.bf16.msra.mxu0 %v813
    %865 = vmatprep.subr.bf16.mxu0 0
    %866 = vmatpush1.bf16.msra.mxu0 0
    %867 = vmatprep.subr.bf16.mxu0 0
    %868 = vmatpush1.bf16.msra.mxu0 0
    %869 = vmatprep.subr.bf16.mxu0 0
    %870 = vmatpush1.bf16.msra.mxu0 0
    %871 = vmatprep.subr.bf16.mxu0 0
    %872 = vmatpush1.bf16.msra.mxu0 0
    %873 = vmatprep.subr.bf16.mxu0 0
    %874 = vmatpush1.bf16.msra.mxu0 0
    %875 = vmatprep.subr.bf16.mxu0 0
    %876 = vmatpush1.bf16.msra.mxu0 0
    %877 = vmatprep.subr.bf16.mxu0 0
    %878 = vmatpush1.bf16.msra.mxu0 0
    %879 = vmatprep.subr.bf16.mxu0 0
    %880 = vmatpush1.bf16.msra.mxu0 0
    %881 = vmatprep.mubr.bf16.mxu0 0
    %882 = vmatmul.mubr.bf16.gmra.mrb[0].mxu0 %v688
    %v883 = vpop.f32.mrb[0].mxu0
    %v884 = vadd.f32 0.0, %v883
    %v885 = vpop.f32.mrb[0].mxu0
    %v886 = vadd.f32 0.0, %v885
    %v887 = vpop.f32.mrb[0].mxu0
    %v888 = vpop.f32.mrb[0].mxu0
    %889 = vdwg.mxu0
    %890 = vmatprep.subr.bf16.mxu0 %v788
    %891 = vmatpush1.bf16.msra.mxu0 %v787
    %892 = vmatprep.subr.bf16.mxu0 %v792
    %893 = vmatpush1.bf16.msra.mxu0 %v791
    %894 = vmatprep.subr.bf16.mxu0 %v796
    %895 = vmatpush1.bf16.msra.mxu0 %v795
    %896 = vmatprep.subr.bf16.mxu0 %v800
    %897 = vmatpush1.bf16.msra.mxu0 %v799
    %898 = vmatprep.subr.bf16.mxu0 %v804
    %899 = vmatpush1.bf16.msra.mxu0 %v803
    %900 = vmatprep.subr.bf16.mxu0 %v808
    %901 = vmatpush1.bf16.msra.mxu0 %v807
    %902 = vmatprep.subr.bf16.mxu0 %v812
    %903 = vmatpush1.bf16.msra.mxu0 %v811
    %904 = vmatprep.subr.bf16.mxu0 %v816
    %905 = vmatpush1.bf16.msra.mxu0 %v815
    %906 = vmatprep.subr.bf16.mxu0 0
    %907 = vmatpush1.bf16.msra.mxu0 0
    %908 = vmatprep.subr.bf16.mxu0 0
    %909 = vmatpush1.bf16.msra.mxu0 0
    %910 = vmatprep.subr.bf16.mxu0 0
    %911 = vmatpush1.bf16.msra.mxu0 0
    %912 = vmatprep.subr.bf16.mxu0 0
    %913 = vmatpush1.bf16.msra.mxu0 0
    %914 = vmatprep.subr.bf16.mxu0 0
    %915 = vmatpush1.bf16.msra.mxu0 0
    %916 = vmatprep.subr.bf16.mxu0 0
    %917 = vmatpush1.bf16.msra.mxu0 0
    %918 = vmatprep.subr.bf16.mxu0 0
    %919 = vmatpush1.bf16.msra.mxu0 0
    %920 = vmatprep.subr.bf16.mxu0 0
    %921 = vmatpush1.bf16.msra.mxu0 0
    %922 = vmatprep.mubr.bf16.mxu0 0
    %923 = vmatmul.mubr.bf16.gmra.mrb[0].mxu0 %v688
    %v924 = vpop.f32.mrb[0].mxu0
    %v925 = vadd.f32 0.0, %v924
    %v926 = vpop.f32.mrb[0].mxu0
    %v927 = vadd.f32 0.0, %v926
    %v928 = vpop.f32.mrb[0].mxu0
    %v929 = vpop.f32.mrb[0].mxu0
    %930 = vdwg.mxu0
    %v931 = vadd.f32 %v682, %v884
    %v932 = vadd.f32 %v683, %v886
    %v933 = vadd.f32 %v684, %v925
    %v934 = vadd.f32 %v685, %v927
    %v935 = vxor.u32 %v931, 2147483648
    %v936 = vmul.f32 %v935, 1.442695
    %v937 = vpow.pop %v936
    %v938 = vadd.f32 %v937, 1.0
    %v939 = vrcp.pop %v938
    %v940 = vmul.f32 1.0, %v939
    %v941 = vxor.u32 %v932, 2147483648
    %v942 = vmul.f32 %v941, 1.442695
    %v943 = vpow.pop %v942
    %v944 = vadd.f32 %v943, 1.0
    %v945 = vrcp.pop %v944
    %v946 = vmul.f32 1.0, %v945
    %v947 = vtanh.pop %v933
    %v948 = vxor.u32 %v934, 2147483648
    %v949 = vmul.f32 %v948, 1.442695
    %v950 = vpow.pop %v949
    %v951 = vadd.f32 %v950, 1.0
    %v952 = vrcp.pop %v951
    %v953 = vmul.f32 1.0, %v952
    %v954 = vmul.f32 %v946, %v687
    %v955 = vmul.f32 %v940, %v947
    %v956 = vadd.f32 %v954, %v955
    %v957 = vtanh.pop %v956
    %v958 = vmul.f32 %v953, %v957
    %959 = vst [vmem:[#allocation3] sm:$0xff] %v958
    %960 = vst [vmem:[#allocation4] sm:$0xff] %v956
    %v961 = vpack.c.bf16 %v958, %v958
    %v994 = vunpack.c.l.b16 %v181
    %v995 = vunpack.c.h.b16 %v181
    %v996 = vunpack.c.l.b16 %v182
    %v997 = vunpack.c.h.b16 %v182
    %v998 = vunpack.c.l.b16 %v183
    %v999 = vunpack.c.h.b16 %v183
    %v1000 = vunpack.c.l.b16 %v184
    %v1001 = vunpack.c.h.b16 %v184
    %v1002 = vunpack.c.l.b16 %v185
    %v1003 = vunpack.c.h.b16 %v185
    %v1004 = vunpack.c.l.b16 %v186
    %v1005 = vunpack.c.h.b16 %v186
    %v1006 = vunpack.c.l.b16 %v187
    %v1007 = vunpack.c.h.b16 %v187
    %v1008 = vunpack.c.l.b16 %v188
    %v1009 = vunpack.c.h.b16 %v188
    %v1010 = vunpack.c.l.b16 %v189
    %v1011 = vunpack.c.h.b16 %v189
    %v1012 = vunpack.c.l.b16 %v190
    %v1013 = vunpack.c.h.b16 %v190
    %v1014 = vunpack.c.l.b16 %v191
    %v1015 = vunpack.c.h.b16 %v191
    %v1016 = vunpack.c.l.b16 %v192
    %v1017 = vunpack.c.h.b16 %v192
    %v1018 = vunpack.c.l.b16 %v193
    %v1019 = vunpack.c.h.b16 %v193
    %v1020 = vunpack.c.l.b16 %v194
    %v1021 = vunpack.c.h.b16 %v194
    %v1022 = vunpack.c.l.b16 %v195
    %v1023 = vunpack.c.h.b16 %v195
    %v1024 = vunpack.c.l.b16 %v196
    %v1025 = vunpack.c.h.b16 %v196
    %v1026 = vunpack.c.l.b16 %v197
    %v1027 = vunpack.c.h.b16 %v197
    %v1028 = vunpack.c.l.b16 %v198
    %v1029 = vunpack.c.h.b16 %v198
    %v1030 = vunpack.c.l.b16 %v199
    %v1031 = vunpack.c.h.b16 %v199
    %v1032 = vunpack.c.l.b16 %v200
    %v1033 = vunpack.c.h.b16 %v200
    %v1034 = vunpack.c.l.b16 %v201
    %v1035 = vunpack.c.h.b16 %v201
    %v1036 = vunpack.c.l.b16 %v202
    %v1037 = vunpack.c.h.b16 %v202
    %v1038 = vunpack.c.l.b16 %v203
    %v1039 = vunpack.c.h.b16 %v203
    %v1040 = vunpack.c.l.b16 %v204
    %v1041 = vunpack.c.h.b16 %v204
    %v1042 = vunpack.c.l.b16 %v205
    %v1043 = vunpack.c.h.b16 %v205
    %v1044 = vunpack.c.l.b16 %v206
    %v1045 = vunpack.c.h.b16 %v206
    %v1046 = vunpack.c.l.b16 %v207
    %v1047 = vunpack.c.h.b16 %v207
    %v1048 = vunpack.c.l.b16 %v208
    %v1049 = vunpack.c.h.b16 %v208
    %v1050 = vunpack.c.l.b16 %v209
    %v1051 = vunpack.c.h.b16 %v209
    %v1052 = vunpack.c.l.b16 %v210
    %v1053 = vunpack.c.h.b16 %v210
    %v1054 = vunpack.c.l.b16 %v211
    %v1055 = vunpack.c.h.b16 %v211
    %v1056 = vunpack.c.l.b16 %v212
    %v1057 = vunpack.c.h.b16 %v212
    %v1058 = vpack.c.b16 %v998, %v994
    %v1059 = vpack.c.b16 %v999, %v995
    %v1060 = vpack.c.b16 %v1000, %v996
    %v1061 = vpack.c.b16 %v1001, %v997
    %v1062 = vpack.c.b16 %v1006, %v1002
    %v1063 = vpack.c.b16 %v1007, %v1003
    %v1064 = vpack.c.b16 %v1008, %v1004
    %v1065 = vpack.c.b16 %v1009, %v1005
    %v1066 = vpack.c.b16 %v1014, %v1010
    %v1067 = vpack.c.b16 %v1015, %v1011
    %v1068 = vpack.c.b16 %v1016, %v1012
    %v1069 = vpack.c.b16 %v1017, %v1013
    %v1070 = vpack.c.b16 %v1022, %v1018
    %v1071 = vpack.c.b16 %v1023, %v1019
    %v1072 = vpack.c.b16 %v1024, %v1020
    %v1073 = vpack.c.b16 %v1025, %v1021
    %v1074 = vpack.c.b16 %v1030, %v1026
    %v1075 = vpack.c.b16 %v1031, %v1027
    %v1076 = vpack.c.b16 %v1032, %v1028
    %v1077 = vpack.c.b16 %v1033, %v1029
    %v1078 = vpack.c.b16 %v1038, %v1034
    %v1079 = vpack.c.b16 %v1039, %v1035
    %v1080 = vpack.c.b16 %v1040, %v1036
    %v1081 = vpack.c.b16 %v1041, %v1037
    %v1082 = vpack.c.b16 %v1046, %v1042
    %v1083 = vpack.c.b16 %v1047, %v1043
    %v1084 = vpack.c.b16 %v1048, %v1044
    %v1085 = vpack.c.b16 %v1049, %v1045
    %v1086 = vpack.c.b16 %v1054, %v1050
    %v1087 = vpack.c.b16 %v1055, %v1051
    %v1088 = vpack.c.b16 %v1056, %v1052
    %v1089 = vpack.c.b16 %v1057, %v1053
    %1122 = vmatprep.subr.bf16.mxu0 %v1059
    %1123 = vmatpush1.bf16.msra.mxu0 %v1058
    %1124 = vmatprep.subr.bf16.mxu0 %v1063
    %1125 = vmatpush1.bf16.msra.mxu0 %v1062
    %1126 = vmatprep.subr.bf16.mxu0 %v1067
    %1127 = vmatpush1.bf16.msra.mxu0 %v1066
    %1128 = vmatprep.subr.bf16.mxu0 %v1071
    %1129 = vmatpush1.bf16.msra.mxu0 %v1070
    %1130 = vmatprep.subr.bf16.mxu0 %v1075
    %1131 = vmatpush1.bf16.msra.mxu0 %v1074
    %1132 = vmatprep.subr.bf16.mxu0 %v1079
    %1133 = vmatpush1.bf16.msra.mxu0 %v1078
    %1134 = vmatprep.subr.bf16.mxu0 %v1083
    %1135 = vmatpush1.bf16.msra.mxu0 %v1082
    %1136 = vmatprep.subr.bf16.mxu0 %v1087
    %1137 = vmatpush1.bf16.msra.mxu0 %v1086
    %1138 = vmatprep.subr.bf16.mxu0 0
    %1139 = vmatpush1.bf16.msra.mxu0 0
    %1140 = vmatprep.subr.bf16.mxu0 0
    %1141 = vmatpush1.bf16.msra.mxu0 0
    %1142 = vmatprep.subr.bf16.mxu0 0
    %1143 = vmatpush1.bf16.msra.mxu0 0
    %1144 = vmatprep.subr.bf16.mxu0 0
    %1145 = vmatpush1.bf16.msra.mxu0 0
    %1146 = vmatprep.subr.bf16.mxu0 0
    %1147 = vmatpush1.bf16.msra.mxu0 0
    %1148 = vmatprep.subr.bf16.mxu0 0
    %1149 = vmatpush1.bf16.msra.mxu0 0
    %1150 = vmatprep.subr.bf16.mxu0 0
    %1151 = vmatpush1.bf16.msra.mxu0 0
    %1152 = vmatprep.subr.bf16.mxu0 0
    %1153 = vmatpush1.bf16.msra.mxu0 0
    %1154 = vmatprep.mubr.bf16.mxu0 0
    %1155 = vmatmul.mubr.bf16.gmra.mrb[0].mxu0 %v961
    %v1156 = vpop.f32.mrb[0].mxu0
    %v1157 = vadd.f32 %v662, %v1156
    %v1158 = vpop.f32.mrb[0].mxu0
    %v1159 = vadd.f32 %v666, %v1158
    %v1160 = vpop.f32.mrb[0].mxu0
    %v1161 = vpop.f32.mrb[0].mxu0
    %1162 = vdwg.mxu0
    %1163 = vmatprep.subr.bf16.mxu0 %v1061
    %1164 = vmatpush1.bf16.msra.mxu0 %v1060
    %1165 = vmatprep.subr.bf16.mxu0 %v1065
    %1166 = vmatpush1.bf16.msra.mxu0 %v1064
    %1167 = vmatprep.subr.bf16.mxu0 %v1069
    %1168 = vmatpush1.bf16.msra.mxu0 %v1068
    %1169 = vmatprep.subr.bf16.mxu0 %v1073
    %1170 = vmatpush1.bf16.msra.mxu0 %v1072
    %1171 = vmatprep.subr.bf16.mxu0 %v1077
    %1172 = vmatpush1.bf16.msra.mxu0 %v1076
    %1173 = vmatprep.subr.bf16.mxu0 %v1081
    %1174 = vmatpush1.bf16.msra.mxu0 %v1080
    %1175 = vmatprep.subr.bf16.mxu0 %v1085
    %1176 = vmatpush1.bf16.msra.mxu0 %v1084
    %1177 = vmatprep.subr.bf16.mxu0 %v1089
    %1178 = vmatpush1.bf16.msra.mxu0 %v1088
    %1179 = vmatprep.subr.bf16.mxu0 0
    %1180 = vmatpush1.bf16.msra.mxu0 0
    %1181 = vmatprep.subr.bf16.mxu0 0
    %1182 = vmatpush1.bf16.msra.mxu0 0
    %1183 = vmatprep.subr.bf16.mxu0 0
    %1184 = vmatpush1.bf16.msra.mxu0 0
    %1185 = vmatprep.subr.bf16.mxu0 0
    %1186 = vmatpush1.bf16.msra.mxu0 0
    %1187 = vmatprep.subr.bf16.mxu0 0
    %1188 = vmatpush1.bf16.msra.mxu0 0
    %1189 = vmatprep.subr.bf16.mxu0 0
    %1190 = vmatpush1.bf16.msra.mxu0 0
    %1191 = vmatprep.subr.bf16.mxu0 0
    %1192 = vmatpush1.bf16.msra.mxu0 0
    %1193 = vmatprep.subr.bf16.mxu0 0
    %1194 = vmatpush1.bf16.msra.mxu0 0
    %1195 = vmatprep.mubr.bf16.mxu0 0
    %1196 = vmatmul.mubr.bf16.gmra.mrb[0].mxu0 %v961
    %v1197 = vpop.f32.mrb[0].mxu0
    %v1198 = vadd.f32 %v670, %v1197
    %v1199 = vpop.f32.mrb[0].mxu0
    %v1200 = vadd.f32 %v674, %v1199
    %v1201 = vpop.f32.mrb[0].mxu0
    %v1202 = vpop.f32.mrb[0].mxu0
    %1203 = vdwg.mxu0
    %s1204 = scalar_lea.vmem [#allocation3], 8
    %v1205 = vld [vmem:[%s1204] sm:$0xff]
    %s1206 = scalar_lea.vmem [#allocation4], 8
    %v1207 = vld [vmem:[%s1206] sm:$0xff]
    %v1208 = vpack.c.bf16 %v1205, %v1205
    %v1241 = vunpack.c.l.b16 %v245
    %v1242 = vunpack.c.h.b16 %v245
    %v1243 = vunpack.c.l.b16 %v246
    %v1244 = vunpack.c.h.b16 %v246
    %v1245 = vunpack.c.l.b16 %v247
    %v1246 = vunpack.c.h.b16 %v247
    %v1247 = vunpack.c.l.b16 %v248
    %v1248 = vunpack.c.h.b16 %v248
    %v1249 = vunpack.c.l.b16 %v249
    %v1250 = vunpack.c.h.b16 %v249
    %v1251 = vunpack.c.l.b16 %v250
    %v1252 = vunpack.c.h.b16 %v250
    %v1253 = vunpack.c.l.b16 %v251
    %v1254 = vunpack.c.h.b16 %v251
    %v1255 = vunpack.c.l.b16 %v252
    %v1256 = vunpack.c.h.b16 %v252
    %v1257 = vunpack.c.l.b16 %v253
    %v1258 = vunpack.c.h.b16 %v253
    %v1259 = vunpack.c.l.b16 %v254
    %v1260 = vunpack.c.h.b16 %v254
    %v1261 = vunpack.c.l.b16 %v255
    %v1262 = vunpack.c.h.b16 %v255
    %v1263 = vunpack.c.l.b16 %v256
    %v1264 = vunpack.c.h.b16 %v256
    %v1265 = vunpack.c.l.b16 %v257
    %v1266 = vunpack.c.h.b16 %v257
    %v1267 = vunpack.c.l.b16 %v258
    %v1268 = vunpack.c.h.b16 %v258
    %v1269 = vunpack.c.l.b16 %v259
    %v1270 = vunpack.c.h.b16 %v259
    %v1271 = vunpack.c.l.b16 %v260
    %v1272 = vunpack.c.h.b16 %v260
    %v1273 = vunpack.c.l.b16 %v261
    %v1274 = vunpack.c.h.b16 %v261
    %v1275 = vunpack.c.l.b16 %v262
    %v1276 = vunpack.c.h.b16 %v262
    %v1277 = vunpack.c.l.b16 %v263
    %v1278 = vunpack.c.h.b16 %v263
    %v1279 = vunpack.c.l.b16 %v264
    %v1280 = vunpack.c.h.b16 %v264
    %v1281 = vunpack.c.l.b16 %v265
    %v1282 = vunpack.c.h.b16 %v265
    %v1283 = vunpack.c.l.b16 %v266
    %v1284 = vunpack.c.h.b16 %v266
    %v1285 = vunpack.c.l.b16 %v267
    %v1286 = vunpack.c.h.b16 %v267
    %v1287 = vunpack.c.l.b16 %v268
    %v1288 = vunpack.c.h.b16 %v268
    %v1289 = vunpack.c.l.b16 %v269
    %v1290 = vunpack.c.h.b16 %v269
    %v1291 = vunpack.c.l.b16 %v270
    %v1292 = vunpack.c.h.b16 %v270
    %v1293 = vunpack.c.l.b16 %v271
    %v1294 = vunpack.c.h.b16 %v271
    %v1295 = vunpack.c.l.b16 %v272
    %v1296 = vunpack.c.h.b16 %v272
    %v1297 = vunpack.c.l.b16 %v273
    %v1298 = vunpack.c.h.b16 %v273
    %v1299 = vunpack.c.l.b16 %v274
    %v1300 = vunpack.c.h.b16 %v274
    %v1301 = vunpack.c.l.b16 %v275
    %v1302 = vunpack.c.h.b16 %v275
    %v1303 = vunpack.c.l.b16 %v276
    %v1304 = vunpack.c.h.b16 %v276
    %v1305 = vpack.c.b16 %v1245, %v1241
    %v1306 = vpack.c.b16 %v1246, %v1242
    %v1307 = vpack.c.b16 %v1247, %v1243
    %v1308 = vpack.c.b16 %v1248, %v1244
    %v1309 = vpack.c.b16 %v1253, %v1249
    %v1310 = vpack.c.b16 %v1254, %v1250
    %v1311 = vpack.c.b16 %v1255, %v1251
    %v1312 = vpack.c.b16 %v1256, %v1252
    %v1313 = vpack.c.b16 %v1261, %v1257
    %v1314 = vpack.c.b16 %v1262, %v1258
    %v1315 = vpack.c.b16 %v1263, %v1259
    %v1316 = vpack.c.b16 %v1264, %v1260
    %v1317 = vpack.c.b16 %v1269, %v1265
    %v1318 = vpack.c.b16 %v1270, %v1266
    %v1319 = vpack.c.b16 %v1271, %v1267
    %v1320 = vpack.c.b16 %v1272, %v1268
    %v1321 = vpack.c.b16 %v1277, %v1273
    %v1322 = vpack.c.b16 %v1278, %v1274
    %v1323 = vpack.c.b16 %v1279, %v1275
    %v1324 = vpack.c.b16 %v1280, %v1276
    %v1325 = vpack.c.b16 %v1285, %v1281
    %v1326 = vpack.c.b16 %v1286, %v1282
    %v1327 = vpack.c.b16 %v1287, %v1283
    %v1328 = vpack.c.b16 %v1288, %v1284
    %v1329 = vpack.c.b16 %v1293, %v1289
    %v1330 = vpack.c.b16 %v1294, %v1290
    %v1331 = vpack.c.b16 %v1295, %v1291
    %v1332 = vpack.c.b16 %v1296, %v1292
    %v1333 = vpack.c.b16 %v1301, %v1297
    %v1334 = vpack.c.b16 %v1302, %v1298
    %v1335 = vpack.c.b16 %v1303, %v1299
    %v1336 = vpack.c.b16 %v1304, %v1300
    %1369 = vmatprep.subr.bf16.mxu0 %v1306
    %1370 = vmatpush1.bf16.msra.mxu0 %v1305
    %1371 = vmatprep.subr.bf16.mxu0 %v1310
    %1372 = vmatpush1.bf16.msra.mxu0 %v1309
    %1373 = vmatprep.subr.bf16.mxu0 %v1314
    %1374 = vmatpush1.bf16.msra.mxu0 %v1313
    %1375 = vmatprep.subr.bf16.mxu0 %v1318
    %1376 = vmatpush1.bf16.msra.mxu0 %v1317
    %1377 = vmatprep.subr.bf16.mxu0 %v1322
    %1378 = vmatpush1.bf16.msra.mxu0 %v1321
    %1379 = vmatprep.subr.bf16.mxu0 %v1326
    %1380 = vmatpush1.bf16.msra.mxu0 %v1325
    %1381 = vmatprep.subr.bf16.mxu0 %v1330
    %1382 = vmatpush1.bf16.msra.mxu0 %v1329
    %1383 = vmatprep.subr.bf16.mxu0 %v1334
    %1384 = vmatpush1.bf16.msra.mxu0 %v1333
    %1385 = vmatprep.subr.bf16.mxu0 0
    %1386 = vmatpush1.bf16.msra.mxu0 0
    %1387 = vmatprep.subr.bf16.mxu0 0
    %1388 = vmatpush1.bf16.msra.mxu0 0
    %1389 = vmatprep.subr.bf16.mxu0 0
    %1390 = vmatpush1.bf16.msra.mxu0 0
    %1391 = vmatprep.subr.bf16.mxu0 0
    %1392 = vmatpush1.bf16.msra.mxu0 0
    %1393 = vmatprep.subr.bf16.mxu0 0
    %1394 = vmatpush1.bf16.msra.mxu0 0
    %1395 = vmatprep.subr.bf16.mxu0 0
    %1396 = vmatpush1.bf16.msra.mxu0 0
    %1397 = vmatprep.subr.bf16.mxu0 0
    %1398 = vmatpush1.bf16.msra.mxu0 0
    %1399 = vmatprep.subr.bf16.mxu0 0
    %1400 = vmatpush1.bf16.msra.mxu0 0
    %1401 = vmatprep.mubr.bf16.mxu0 0
    %1402 = vmatmul.mubr.bf16.gmra.mrb[0].mxu0 %v1208
    %v1403 = vpop.f32.mrb[0].mxu0
    %v1404 = vadd.f32 0.0, %v1403
    %v1405 = vpop.f32.mrb[0].mxu0
    %v1406 = vadd.f32 0.0, %v1405
    %v1407 = vpop.f32.mrb[0].mxu0
    %v1408 = vpop.f32.mrb[0].mxu0
    %1409 = vdwg.mxu0
    %1410 = vmatprep.subr.bf16.mxu0 %v1308
    %1411 = vmatpush1.bf16.msra.mxu0 %v1307
    %1412 = vmatprep.subr.bf16.mxu0 %v1312
    %1413 = vmatpush1.bf16.msra.mxu0 %v1311
    %1414 = vmatprep.subr.bf16.mxu0 %v1316
    %1415 = vmatpush1.bf16.msra.mxu0 %v1315
    %1416 = vmatprep.subr.bf16.mxu0 %v1320
    %1417 = vmatpush1.bf16.msra.mxu0 %v1319
    %1418 = vmatprep.subr.bf16.mxu0 %v1324
    %1419 = vmatpush1.bf16.msra.mxu0 %v1323
    %1420 = vmatprep.subr.bf16.mxu0 %v1328
    %1421 = vmatpush1.bf16.msra.mxu0 %v1327
    %1422 = vmatprep.subr.bf16.mxu0 %v1332
    %1423 = vmatpush1.bf16.msra.mxu0 %v1331
    %1424 = vmatprep.subr.bf16.mxu0 %v1336
    %1425 = vmatpush1.bf16.msra.mxu0 %v1335
    %1426 = vmatprep.subr.bf16.mxu0 0
    %1427 = vmatpush1.bf16.msra.mxu0 0
    %1428 = vmatprep.subr.bf16.mxu0 0
    %1429 = vmatpush1.bf16.msra.mxu0 0
    %1430 = vmatprep.subr.bf16.mxu0 0
    %1431 = vmatpush1.bf16.msra.mxu0 0
    %1432 = vmatprep.subr.bf16.mxu0 0
    %1433 = vmatpush1.bf16.msra.mxu0 0
    %1434 = vmatprep.subr.bf16.mxu0 0
    %1435 = vmatpush1.bf16.msra.mxu0 0
    %1436 = vmatprep.subr.bf16.mxu0 0
    %1437 = vmatpush1.bf16.msra.mxu0 0
    %1438 = vmatprep.subr.bf16.mxu0 0
    %1439 = vmatpush1.bf16.msra.mxu0 0
    %1440 = vmatprep.subr.bf16.mxu0 0
    %1441 = vmatpush1.bf16.msra.mxu0 0
    %1442 = vmatprep.mubr.bf16.mxu0 0
    %1443 = vmatmul.mubr.bf16.gmra.mrb[0].mxu0 %v1208
    %v1444 = vpop.f32.mrb[0].mxu0
    %v1445 = vadd.f32 0.0, %v1444
    %v1446 = vpop.f32.mrb[0].mxu0
    %v1447 = vadd.f32 0.0, %v1446
    %v1448 = vpop.f32.mrb[0].mxu0
    %v1449 = vpop.f32.mrb[0].mxu0
    %1450 = vdwg.mxu0
    %v1451 = vadd.f32 %v1157, %v1404
    %v1452 = vadd.f32 %v1159, %v1406
    %v1453 = vadd.f32 %v1198, %v1445
    %v1454 = vadd.f32 %v1200, %v1447
    %v1455 = vxor.u32 %v1451, 2147483648
    %v1456 = vmul.f32 %v1455, 1.442695
    %v1457 = vpow.pop %v1456
    %v1458 = vadd.f32 %v1457, 1.0
    %v1459 = vrcp.pop %v1458
    %v1460 = vmul.f32 1.0, %v1459
    %v1461 = vxor.u32 %v1452, 2147483648
    %v1462 = vmul.f32 %v1461, 1.442695
    %v1463 = vpow.pop %v1462
    %v1464 = vadd.f32 %v1463, 1.0
    %v1465 = vrcp.pop %v1464
    %v1466 = vmul.f32 1.0, %v1465
    %v1467 = vtanh.pop %v1453
    %v1468 = vxor.u32 %v1454, 2147483648
    %v1469 = vmul.f32 %v1468, 1.442695
    %v1470 = vpow.pop %v1469
    %v1471 = vadd.f32 %v1470, 1.0
    %v1472 = vrcp.pop %v1471
    %v1473 = vmul.f32 1.0, %v1472
    %v1474 = vmul.f32 %v1466, %v1207
    %v1475 = vmul.f32 %v1460, %v1467
    %v1476 = vadd.f32 %v1474, %v1475
    %v1477 = vtanh.pop %v1476
    %v1478 = vmul.f32 %v1473, %v1477
    %1479 = vst [vmem:[%s1204] sm:$0xff] %v1478
    %1480 = vst [vmem:[%s1206] sm:$0xff] %v1476
    %s1481 = smul.u32 1, 4
    %s1482 = smul.addr %s1481, 8
    %s1483 = scalar_lea.vmem [#allocation2], %s1482
    %v1484 = vld [vmem:[%s1483] sm:$0xff]
    %v1485 = vld [vmem:[%s1483 + $0x8] sm:$0xff]
    %v1486 = vld [vmem:[%s1483 + $0x10] sm:$0xff]
    %v1487 = vld [vmem:[%s1483 + $0x18] sm:$0xff]
    %v1488 = vld [vmem:[#allocation3] sm:$0xff]
    %v1489 = vld [vmem:[#allocation4] sm:$0xff]
    %v1490 = vpack.c.bf16 %v1488, %v1488
    %1491 = vmatprep.subr.bf16.mxu0 %v786
    %1492 = vmatpush1.bf16.msra.mxu0 %v785
    %1493 = vmatprep.subr.bf16.mxu0 %v790
    %1494 = vmatpush1.bf16.msra.mxu0 %v789
    %1495 = vmatprep.subr.bf16.mxu0 %v794
    %1496 = vmatpush1.bf16.msra.mxu0 %v793
    %1497 = vmatprep.subr.bf16.mxu0 %v798
    %1498 = vmatpush1.bf16.msra.mxu0 %v797
    %1499 = vmatprep.subr.bf16.mxu0 %v802
    %1500 = vmatpush1.bf16.msra.mxu0 %v801
    %1501 = vmatprep.subr.bf16.mxu0 %v806
    %1502 = vmatpush1.bf16.msra.mxu0 %v805
    %1503 = vmatprep.subr.bf16.mxu0 %v810
    %1504 = vmatpush1.bf16.msra.mxu0 %v809
    %1505 = vmatprep.subr.bf16.mxu0 %v814
    %1506 = vmatpush1.bf16.msra.mxu0 %v813
    %1507 = vmatprep.subr.bf16.mxu0 0
    %1508 = vmatpush1.bf16.msra.mxu0 0
    %1509 = vmatprep.subr.bf16.mxu0 0
    %1510 = vmatpush1.bf16.msra.mxu0 0
    %1511 = vmatprep.subr.bf16.mxu0 0
    %1512 = vmatpush1.bf16.msra.mxu0 0
    %1513 = vmatprep.subr.bf16.mxu0 0
    %1514 = vmatpush1.bf16.msra.mxu0 0
    %1515 = vmatprep.subr.bf16.mxu0 0
    %1516 = vmatpush1.bf16.msra.mxu0 0
    %1517 = vmatprep.subr.bf16.mxu0 0
    %1518 = vmatpush1.bf16.msra.mxu0 0
    %1519 = vmatprep.subr.bf16.mxu0 0
    %1520 = vmatpush1.bf16.msra.mxu0 0
    %1521 = vmatprep.subr.bf16.mxu0 0
    %1522 = vmatpush1.bf16.msra.mxu0 0
    %1523 = vmatprep.mubr.bf16.mxu0 0
    %1524 = vmatmul.mubr.bf16.gmra.mrb[0].mxu0 %v1490
    %v1525 = vpop.f32.mrb[0].mxu0
    %v1526 = vadd.f32 0.0, %v1525
    %v1527 = vpop.f32.mrb[0].mxu0
    %v1528 = vadd.f32 0.0, %v1527
    %v1529 = vpop.f32.mrb[0].mxu0
    %v1530 = vpop.f32.mrb[0].mxu0
    %1531 = vdwg.mxu0
    %1532 = vmatprep.subr.bf16.mxu0 %v788
    %1533 = vmatpush1.bf16.msra.mxu0 %v787
    %1534 = vmatprep.subr.bf16.mxu0 %v792
    %1535 = vmatpush1.bf16.msra.mxu0 %v791
    %1536 = vmatprep.subr.bf16.mxu0 %v796
    %1537 = vmatpush1.bf16.msra.mxu0 %v795
    %1538 = vmatprep.subr.bf16.mxu0 %v800
    %1539 = vmatpush1.bf16.msra.mxu0 %v799
    %1540 = vmatprep.subr.bf16.mxu0 %v804
    %1541 = vmatpush1.bf16.msra.mxu0 %v803
    %1542 = vmatprep.subr.bf16.mxu0 %v808
    %1543 = vmatpush1.bf16.msra.mxu0 %v807
    %1544 = vmatprep.subr.bf16.mxu0 %v812
    %1545 = vmatpush1.bf16.msra.mxu0 %v811
    %1546 = vmatprep.subr.bf16.mxu0 %v816
    %1547 = vmatpush1.bf16.msra.mxu0 %v815
    %1548 = vmatprep.subr.bf16.mxu0 0
    %1549 = vmatpush1.bf16.msra.mxu0 0
    %1550 = vmatprep.subr.bf16.mxu0 0
    %1551 = vmatpush1.bf16.msra.mxu0 0
    %1552 = vmatprep.subr.bf16.mxu0 0
    %1553 = vmatpush1.bf16.msra.mxu0 0
    %1554 = vmatprep.subr.bf16.mxu0 0
    %1555 = vmatpush1.bf16.msra.mxu0 0
    %1556 = vmatprep.subr.bf16.mxu0 0
    %1557 = vmatpush1.bf16.msra.mxu0 0
    %1558 = vmatprep.subr.bf16.mxu0 0
    %1559 = vmatpush1.bf16.msra.mxu0 0
    %1560 = vmatprep.subr.bf16.mxu0 0
    %1561 = vmatpush1.bf16.msra.mxu0 0
    %1562 = vmatprep.subr.bf16.mxu0 0
    %1563 = vmatpush1.bf16.msra.mxu0 0
    %1564 = vmatprep.mubr.bf16.mxu0 0
    %1565 = vmatmul.mubr.bf16.gmra.mrb[0].mxu0 %v1490
    %v1566 = vpop.f32.mrb[0].mxu0
    %v1567 = vadd.f32 0.0, %v1566
    %v1568 = vpop.f32.mrb[0].mxu0
    %v1569 = vadd.f32 0.0, %v1568
    %v1570 = vpop.f32.mrb[0].mxu0
    %v1571 = vpop.f32.mrb[0].mxu0
    %1572 = vdwg.mxu0
    %v1573 = vadd.f32 %v1484, %v1526
    %v1574 = vadd.f32 %v1485, %v1528
    %v1575 = vadd.f32 %v1486, %v1567
    %v1576 = vadd.f32 %v1487, %v1569
    %v1577 = vxor.u32 %v1573, 2147483648
    %v1578 = vmul.f32 %v1577, 1.442695
    %v1579 = vpow.pop %v1578
    %v1580 = vadd.f32 %v1579, 1.0
    %v1581 = vrcp.pop %v1580
    %v1582 = vmul.f32 1.0, %v1581
    %v1583 = vxor.u32 %v1574, 2147483648
    %v1584 = vmul.f32 %v1583, 1.442695
    %v1585 = vpow.pop %v1584
    %v1586 = vadd.f32 %v1585, 1.0
    %v1587 = vrcp.pop %v1586
    %v1588 = vmul.f32 1.0, %v1587
    %v1589 = vtanh.pop %v1575
    %v1590 = vxor.u32 %v1576, 2147483648
    %v1591 = vmul.f32 %v1590, 1.442695
    %v1592 = vpow.pop %v1591
    %v1593 = vadd.f32 %v1592, 1.0
    %v1594 = vrcp.pop %v1593
    %v1595 = vmul.f32 1.0, %v1594
    %v1596 = vmul.f32 %v1588, %v1489
    %v1597 = vmul.f32 %v1582, %v1589
    %v1598 = vadd.f32 %v1596, %v1597
    %v1599 = vtanh.pop %v1598
    %v1600 = vmul.f32 %v1595, %v1599
    %1601 = vst [vmem:[#allocation3] sm:$0xff] %v1600
    %1602 = vst [vmem:[#allocation4] sm:$0xff] %v1598
    %v1603 = vpack.c.bf16 %v1600, %v1600
    %1604 = vmatprep.subr.bf16.mxu0 %v1059
    %1605 = vmatpush1.bf16.msra.mxu0 %v1058
    %1606 = vmatprep.subr.bf16.mxu0 %v1063
    %1607 = vmatpush1.bf16.msra.mxu0 %v1062
    %1608 = vmatprep.subr.bf16.mxu0 %v1067
    %1609 = vmatpush1.bf16.msra.mxu0 %v1066
    %1610 = vmatprep.subr.bf16.mxu0 %v1071
    %1611 = vmatpush1.bf16.msra.mxu0 %v1070
    %1612 = vmatprep.subr.bf16.mxu0 %v1075
    %1613 = vmatpush1.bf16.msra.mxu0 %v1074
    %1614 = vmatprep.subr.bf16.mxu0 %v1079
    %1615 = vmatpush1.bf16.msra.mxu0 %v1078
    %1616 = vmatprep.subr.bf16.mxu0 %v1083
    %1617 = vmatpush1.bf16.msra.mxu0 %v1082
    %1618 = vmatprep.subr.bf16.mxu0 %v1087
    %1619 = vmatpush1.bf16.msra.mxu0 %v1086
    %1620 = vmatprep.subr.bf16.mxu0 0
    %1621 = vmatpush1.bf16.msra.mxu0 0
    %1622 = vmatprep.subr.bf16.mxu0 0
    %1623 = vmatpush1.bf16.msra.mxu0 0
    %1624 = vmatprep.subr.bf16.mxu0 0
    %1625 = vmatpush1.bf16.msra.mxu0 0
    %1626 = vmatprep.subr.bf16.mxu0 0
    %1627 = vmatpush1.bf16.msra.mxu0 0
    %1628 = vmatprep.subr.bf16.mxu0 0
    %1629 = vmatpush1.bf16.msra.mxu0 0
    %1630 = vmatprep.subr.bf16.mxu0 0
    %1631 = vmatpush1.bf16.msra.mxu0 0
    %1632 = vmatprep.subr.bf16.mxu0 0
    %1633 = vmatpush1.bf16.msra.mxu0 0
    %1634 = vmatprep.subr.bf16.mxu0 0
    %1635 = vmatpush1.bf16.msra.mxu0 0
    %1636 = vmatprep.mubr.bf16.mxu0 0
    %1637 = vmatmul.mubr.bf16.gmra.mrb[0].mxu0 %v1603
    %v1638 = vpop.f32.mrb[0].mxu0
    %v1639 = vadd.f32 %v662, %v1638
    %v1640 = vpop.f32.mrb[0].mxu0
    %v1641 = vadd.f32 %v666, %v1640
    %v1642 = vpop.f32.mrb[0].mxu0
    %v1643 = vpop.f32.mrb[0].mxu0
    %1644 = vdwg.mxu0
    %1645 = vmatprep.subr.bf16.mxu0 %v1061
    %1646 = vmatpush1.bf16.msra.mxu0 %v1060
    %1647 = vmatprep.subr.bf16.mxu0 %v1065
    %1648 = vmatpush1.bf16.msra.mxu0 %v1064
    %1649 = vmatprep.subr.bf16.mxu0 %v1069
    %1650 = vmatpush1.bf16.msra.mxu0 %v1068
    %1651 = vmatprep.subr.bf16.mxu0 %v1073
    %1652 = vmatpush1.bf16.msra.mxu0 %v1072
    %1653 = vmatprep.subr.bf16.mxu0 %v1077
    %1654 = vmatpush1.bf16.msra.mxu0 %v1076
    %1655 = vmatprep.subr.bf16.mxu0 %v1081
    %1656 = vmatpush1.bf16.msra.mxu0 %v1080
    %1657 = vmatprep.subr.bf16.mxu0 %v1085
    %1658 = vmatpush1.bf16.msra.mxu0 %v1084
    %1659 = vmatprep.subr.bf16.mxu0 %v1089
    %1660 = vmatpush1.bf16.msra.mxu0 %v1088
    %1661 = vmatprep.subr.bf16.mxu0 0
    %1662 = vmatpush1.bf16.msra.mxu0 0
    %1663 = vmatprep.subr.bf16.mxu0 0
    %1664 = vmatpush1.bf16.msra.mxu0 0
    %1665 = vmatprep.subr.bf16.mxu0 0
    %1666 = vmatpush1.bf16.msra.mxu0 0
    %1667 = vmatprep.subr.bf16.mxu0 0
    %1668 = vmatpush1.bf16.msra.mxu0 0
    %1669 = vmatprep.subr.bf16.mxu0 0
    %1670 = vmatpush1.bf16.msra.mxu0 0
    %1671 = vmatprep.subr.bf16.mxu0 0
    %1672 = vmatpush1.bf16.msra.mxu0 0
    %1673 = vmatprep.subr.bf16.mxu0 0
    %1674 = vmatpush1.bf16.msra.mxu0 0
    %1675 = vmatprep.subr.bf16.mxu0 0
    %1676 = vmatpush1.bf16.msra.mxu0 0
    %1677 = vmatprep.mubr.bf16.mxu0 0
    %1678 = vmatmul.mubr.bf16.gmra.mrb[0].mxu0 %v1603
    %v1679 = vpop.f32.mrb[0].mxu0
    %v1680 = vadd.f32 %v670, %v1679
    %v1681 = vpop.f32.mrb[0].mxu0
    %v1682 = vadd.f32 %v674, %v1681
    %v1683 = vpop.f32.mrb[0].mxu0
    %v1684 = vpop.f32.mrb[0].mxu0
    %1685 = vdwg.mxu0
    %v1686 = vld [vmem:[%s1204] sm:$0xff]
    %v1687 = vld [vmem:[%s1206] sm:$0xff]
    %v1688 = vpack.c.bf16 %v1686, %v1686
    %1689 = vmatprep.subr.bf16.mxu0 %v1306
    %1690 = vmatpush1.bf16.msra.mxu0 %v1305
    %1691 = vmatprep.subr.bf16.mxu0 %v1310
    %1692 = vmatpush1.bf16.msra.mxu0 %v1309
    %1693 = vmatprep.subr.bf16.mxu0 %v1314
    %1694 = vmatpush1.bf16.msra.mxu0 %v1313
    %1695 = vmatprep.subr.bf16.mxu0 %v1318
    %1696 = vmatpush1.bf16.msra.mxu0 %v1317
    %1697 = vmatprep.subr.bf16.mxu0 %v1322
    %1698 = vmatpush1.bf16.msra.mxu0 %v1321
    %1699 = vmatprep.subr.bf16.mxu0 %v1326
    %1700 = vmatpush1.bf16.msra.mxu0 %v1325
    %1701 = vmatprep.subr.bf16.mxu0 %v1330
    %1702 = vmatpush1.bf16.msra.mxu0 %v1329
    %1703 = vmatprep.subr.bf16.mxu0 %v1334
    %1704 = vmatpush1.bf16.msra.mxu0 %v1333
    %1705 = vmatprep.subr.bf16.mxu0 0
    %1706 = vmatpush1.bf16.msra.mxu0 0
    %1707 = vmatprep.subr.bf16.mxu0 0
    %1708 = vmatpush1.bf16.msra.mxu0 0
    %1709 = vmatprep.subr.bf16.mxu0 0
    %1710 = vmatpush1.bf16.msra.mxu0 0
    %1711 = vmatprep.subr.bf16.mxu0 0
    %1712 = vmatpush1.bf16.msra.mxu0 0
    %1713 = vmatprep.subr.bf16.mxu0 0
    %1714 = vmatpush1.bf16.msra.mxu0 0
    %1715 = vmatprep.subr.bf16.mxu0 0
    %1716 = vmatpush1.bf16.msra.mxu0 0
    %1717 = vmatprep.subr.bf16.mxu0 0
    %1718 = vmatpush1.bf16.msra.mxu0 0
    %1719 = vmatprep.subr.bf16.mxu0 0
    %1720 = vmatpush1.bf16.msra.mxu0 0
    %1721 = vmatprep.mubr.bf16.mxu0 0
    %1722 = vmatmul.mubr.bf16.gmra.mrb[0].mxu0 %v1688
    %v1723 = vpop.f32.mrb[0].mxu0
    %v1724 = vadd.f32 0.0, %v1723
    %v1725 = vpop.f32.mrb[0].mxu0
    %v1726 = vadd.f32 0.0, %v1725
    %v1727 = vpop.f32.mrb[0].mxu0
    %v1728 = vpop.f32.mrb[0].mxu0
    %1729 = vdwg.mxu0
    %1730 = vmatprep.subr.bf16.mxu0 %v1308
    %1731 = vmatpush1.bf16.msra.mxu0 %v1307
    %1732 = vmatprep.subr.bf16.mxu0 %v1312
    %1733 = vmatpush1.bf16.msra.mxu0 %v1311
    %1734 = vmatprep.subr.bf16.mxu0 %v1316
    %1735 = vmatpush1.bf16.msra.mxu0 %v1315
    %1736 = vmatprep.subr.bf16.mxu0 %v1320
    %1737 = vmatpush1.bf16.msra.mxu0 %v1319
    %1738 = vmatprep.subr.bf16.mxu0 %v1324
    %1739 = vmatpush1.bf16.msra.mxu0 %v1323
    %1740 = vmatprep.subr.bf16.mxu0 %v1328
    %1741 = vmatpush1.bf16.msra.mxu0 %v1327
    %1742 = vmatprep.subr.bf16.mxu0 %v1332
    %1743 = vmatpush1.bf16.msra.mxu0 %v1331
    %1744 = vmatprep.subr.bf16.mxu0 %v1336
    %1745 = vmatpush1.bf16.msra.mxu0 %v1335
    %1746 = vmatprep.subr.bf16.mxu0 0
    %1747 = vmatpush1.bf16.msra.mxu0 0
    %1748 = vmatprep.subr.bf16.mxu0 0
    %1749 = vmatpush1.bf16.msra.mxu0 0
    %1750 = vmatprep.subr.bf16.mxu0 0
    %1751 = vmatpush1.bf16.msra.mxu0 0
    %1752 = vmatprep.subr.bf16.mxu0 0
    %1753 = vmatpush1.bf16.msra.mxu0 0
    %1754 = vmatprep.subr.bf16.mxu0 0
    %1755 = vmatpush1.bf16.msra.mxu0 0
    %1756 = vmatprep.subr.bf16.mxu0 0
    %1757 = vmatpush1.bf16.msra.mxu0 0
    %1758 = vmatprep.subr.bf16.mxu0 0
    %1759 = vmatpush1.bf16.msra.mxu0 0
    %1760 = vmatprep.subr.bf16.mxu0 0
    %1761 = vmatpush1.bf16.msra.mxu0 0
    %1762 = vmatprep.mubr.bf16.mxu0 0
    %1763 = vmatmul.mubr.bf16.gmra.mrb[0].mxu0 %v1688
    %v1764 = vpop.f32.mrb[0].mxu0
    %v1765 = vadd.f32 0.0, %v1764
    %v1766 = vpop.f32.mrb[0].mxu0
    %v1767 = vadd.f32 0.0, %v1766
    %v1768 = vpop.f32.mrb[0].mxu0
    %v1769 = vpop.f32.mrb[0].mxu0
    %1770 = vdwg.mxu0
    %v1771 = vadd.f32 %v1639, %v1724
    %v1772 = vadd.f32 %v1641, %v1726
    %v1773 = vadd.f32 %v1680, %v1765
    %v1774 = vadd.f32 %v1682, %v1767
    %v1775 = vxor.u32 %v1771, 2147483648
    %v1776 = vmul.f32 %v1775, 1.442695
    %v1777 = vpow.pop %v1776
    %v1778 = vadd.f32 %v1777, 1.0
    %v1779 = vrcp.pop %v1778
    %v1780 = vmul.f32 1.0, %v1779
    %v1781 = vxor.u32 %v1772, 2147483648
    %v1782 = vmul.f32 %v1781, 1.442695
    %v1783 = vpow.pop %v1782
    %v1784 = vadd.f32 %v1783, 1.0
    %v1785 = vrcp.pop %v1784
    %v1786 = vmul.f32 1.0, %v1785
    %v1787 = vtanh.pop %v1773
    %v1788 = vxor.u32 %v1774, 2147483648
    %v1789 = vmul.f32 %v1788, 1.442695
    %v1790 = vpow.pop %v1789
    %v1791 = vadd.f32 %v1790, 1.0
    %v1792 = vrcp.pop %v1791
    %v1793 = vmul.f32 1.0, %v1792
    %v1794 = vmul.f32 %v1786, %v1687
    %v1795 = vmul.f32 %v1780, %v1787
    %v1796 = vadd.f32 %v1794, %v1795
    %v1797 = vtanh.pop %v1796
    %v1798 = vmul.f32 %v1793, %v1797
    %1799 = vst [vmem:[%s1204] sm:$0xff] %v1798
    %1800 = vst [vmem:[%s1206] sm:$0xff] %v1796
    %s1801 = smul.u32 2, 4
    %s1802 = smul.addr %s1801, 8
    %s1803 = scalar_lea.vmem [#allocation2], %s1802
    %v1804 = vld [vmem:[%s1803] sm:$0xff]
    %v1805 = vld [vmem:[%s1803 + $0x8] sm:$0xff]
    %v1806 = vld [vmem:[%s1803 + $0x10] sm:$0xff]
    %v1807 = vld [vmem:[%s1803 + $0x18] sm:$0xff]
    %v1808 = vld [vmem:[#allocation3] sm:$0xff]
    %v1809 = vld [vmem:[#allocation4] sm:$0xff]
    %v1810 = vpack.c.bf16 %v1808, %v1808
    %1811 = vmatprep.subr.bf16.mxu0 %v786
    %1812 = vmatpush1.bf16.msra.mxu0 %v785
    %1813 = vmatprep.subr.bf16.mxu0 %v790
    %1814 = vmatpush1.bf16.msra.mxu0 %v789
    %1815 = vmatprep.subr.bf16.mxu0 %v794
    %1816 = vmatpush1.bf16.msra.mxu0 %v793
    %1817 = vmatprep.subr.bf16.mxu0 %v798
    %1818 = vmatpush1.bf16.msra.mxu0 %v797
    %1819 = vmatprep.subr.bf16.mxu0 %v802
    %1820 = vmatpush1.bf16.msra.mxu0 %v801
    %1821 = vmatprep.subr.bf16.mxu0 %v806
    %1822 = vmatpush1.bf16.msra.mxu0 %v805
    %1823 = vmatprep.subr.bf16.mxu0 %v810
    %1824 = vmatpush1.bf16.msra.mxu0 %v809
    %1825 = vmatprep.subr.bf16.mxu0 %v814
    %1826 = vmatpush1.bf16.msra.mxu0 %v813
    %1827 = vmatprep.subr.bf16.mxu0 0
    %1828 = vmatpush1.bf16.msra.mxu0 0
    %1829 = vmatprep.subr.bf16.mxu0 0
    %1830 = vmatpush1.bf16.msra.mxu0 0
    %1831 = vmatprep.subr.bf16.mxu0 0
    %1832 = vmatpush1.bf16.msra.mxu0 0
    %1833 = vmatprep.subr.bf16.mxu0 0
    %1834 = vmatpush1.bf16.msra.mxu0 0
    %1835 = vmatprep.subr.bf16.mxu0 0
    %1836 = vmatpush1.bf16.msra.mxu0 0
    %1837 = vmatprep.subr.bf16.mxu0 0
    %1838 = vmatpush1.bf16.msra.mxu0 0
    %1839 = vmatprep.subr.bf16.mxu0 0
    %1840 = vmatpush1.bf16.msra.mxu0 0
    %1841 = vmatprep.subr.bf16.mxu0 0
    %1842 = vmatpush1.bf16.msra.mxu0 0
    %1843 = vmatprep.mubr.bf16.mxu0 0
    %1844 = vmatmul.mubr.bf16.gmra.mrb[0].mxu0 %v1810
    %v1845 = vpop.f32.mrb[0].mxu0
    %v1846 = vadd.f32 0.0, %v1845
    %v1847 = vpop.f32.mrb[0].mxu0
    %v1848 = vadd.f32 0.0, %v1847
    %v1849 = vpop.f32.mrb[0].mxu0
    %v1850 = vpop.f32.mrb[0].mxu0
    %1851 = vdwg.mxu0
    %1852 = vmatprep.subr.bf16.mxu0 %v788
    %1853 = vmatpush1.bf16.msra.mxu0 %v787
    %1854 = vmatprep.subr.bf16.mxu0 %v792
    %1855 = vmatpush1.bf16.msra.mxu0 %v791
    %1856 = vmatprep.subr.bf16.mxu0 %v796
    %1857 = vmatpush1.bf16.msra.mxu0 %v795
    %1858 = vmatprep.subr.bf16.mxu0 %v800
    %1859 = vmatpush1.bf16.msra.mxu0 %v799
    %1860 = vmatprep.subr.bf16.mxu0 %v804
    %1861 = vmatpush1.bf16.msra.mxu0 %v803
    %1862 = vmatprep.subr.bf16.mxu0 %v808
    %1863 = vmatpush1.bf16.msra.mxu0 %v807
    %1864 = vmatprep.subr.bf16.mxu0 %v812
    %1865 = vmatpush1.bf16.msra.mxu0 %v811
    %1866 = vmatprep.subr.bf16.mxu0 %v816
    %1867 = vmatpush1.bf16.msra.mxu0 %v815
    %1868 = vmatprep.subr.bf16.mxu0 0
    %1869 = vmatpush1.bf16.msra.mxu0 0
    %1870 = vmatprep.subr.bf16.mxu0 0
    %1871 = vmatpush1.bf16.msra.mxu0 0
    %1872 = vmatprep.subr.bf16.mxu0 0
    %1873 = vmatpush1.bf16.msra.mxu0 0
    %1874 = vmatprep.subr.bf16.mxu0 0
    %1875 = vmatpush1.bf16.msra.mxu0 0
    %1876 = vmatprep.subr.bf16.mxu0 0
    %1877 = vmatpush1.bf16.msra.mxu0 0
    %1878 = vmatprep.subr.bf16.mxu0 0
    %1879 = vmatpush1.bf16.msra.mxu0 0
    %1880 = vmatprep.subr.bf16.mxu0 0
    %1881 = vmatpush1.bf16.msra.mxu0 0
    %1882 = vmatprep.subr.bf16.mxu0 0
    %1883 = vmatpush1.bf16.msra.mxu0 0
    %1884 = vmatprep.mubr.bf16.mxu0 0
    %1885 = vmatmul.mubr.bf16.gmra.mrb[0].mxu0 %v1810
    %v1886 = vpop.f32.mrb[0].mxu0
    %v1887 = vadd.f32 0.0, %v1886
    %v1888 = vpop.f32.mrb[0].mxu0
    %v1889 = vadd.f32 0.0, %v1888
    %v1890 = vpop.f32.mrb[0].mxu0
    %v1891 = vpop.f32.mrb[0].mxu0
    %1892 = vdwg.mxu0
    %v1893 = vadd.f32 %v1804, %v1846
    %v1894 = vadd.f32 %v1805, %v1848
    %v1895 = vadd.f32 %v1806, %v1887
    %v1896 = vadd.f32 %v1807, %v1889
    %v1897 = vxor.u32 %v1893, 2147483648
    %v1898 = vmul.f32 %v1897, 1.442695
    %v1899 = vpow.pop %v1898
    %v1900 = vadd.f32 %v1899, 1.0
    %v1901 = vrcp.pop %v1900
    %v1902 = vmul.f32 1.0, %v1901
    %v1903 = vxor.u32 %v1894, 2147483648
    %v1904 = vmul.f32 %v1903, 1.442695
    %v1905 = vpow.pop %v1904
    %v1906 = vadd.f32 %v1905, 1.0
    %v1907 = vrcp.pop %v1906
    %v1908 = vmul.f32 1.0, %v1907
    %v1909 = vtanh.pop %v1895
    %v1910 = vxor.u32 %v1896, 2147483648
    %v1911 = vmul.f32 %v1910, 1.442695
    %v1912 = vpow.pop %v1911
    %v1913 = vadd.f32 %v1912, 1.0
    %v1914 = vrcp.pop %v1913
    %v1915 = vmul.f32 1.0, %v1914
    %v1916 = vmul.f32 %v1908, %v1809
    %v1917 = vmul.f32 %v1902, %v1909
    %v1918 = vadd.f32 %v1916, %v1917
    %v1919 = vtanh.pop %v1918
    %v1920 = vmul.f32 %v1915, %v1919
    %1921 = vst [vmem:[#allocation3] sm:$0xff] %v1920
    %1922 = vst [vmem:[#allocation4] sm:$0xff] %v1918
    %v1923 = vpack.c.bf16 %v1920, %v1920
    %1924 = vmatprep.subr.bf16.mxu0 %v1059
    %1925 = vmatpush1.bf16.msra.mxu0 %v1058
    %1926 = vmatprep.subr.bf16.mxu0 %v1063
    %1927 = vmatpush1.bf16.msra.mxu0 %v1062
    %1928 = vmatprep.subr.bf16.mxu0 %v1067
    %1929 = vmatpush1.bf16.msra.mxu0 %v1066
    %1930 = vmatprep.subr.bf16.mxu0 %v1071
    %1931 = vmatpush1.bf16.msra.mxu0 %v1070
    %1932 = vmatprep.subr.bf16.mxu0 %v1075
    %1933 = vmatpush1.bf16.msra.mxu0 %v1074
    %1934 = vmatprep.subr.bf16.mxu0 %v1079
    %1935 = vmatpush1.bf16.msra.mxu0 %v1078
    %1936 = vmatprep.subr.bf16.mxu0 %v1083
    %1937 = vmatpush1.bf16.msra.mxu0 %v1082
    %1938 = vmatprep.subr.bf16.mxu0 %v1087
    %1939 = vmatpush1.bf16.msra.mxu0 %v1086
    %1940 = vmatprep.subr.bf16.mxu0 0
    %1941 = vmatpush1.bf16.msra.mxu0 0
    %1942 = vmatprep.subr.bf16.mxu0 0
    %1943 = vmatpush1.bf16.msra.mxu0 0
    %1944 = vmatprep.subr.bf16.mxu0 0
    %1945 = vmatpush1.bf16.msra.mxu0 0
    %1946 = vmatprep.subr.bf16.mxu0 0
    %1947 = vmatpush1.bf16.msra.mxu0 0
    %1948 = vmatprep.subr.bf16.mxu0 0
    %1949 = vmatpush1.bf16.msra.mxu0 0
    %1950 = vmatprep.subr.bf16.mxu0 0
    %1951 = vmatpush1.bf16.msra.mxu0 0
    %1952 = vmatprep.subr.bf16.mxu0 0
    %1953 = vmatpush1.bf16.msra.mxu0 0
    %1954 = vmatprep.subr.bf16.mxu0 0
    %1955 = vmatpush1.bf16.msra.mxu0 0
    %1956 = vmatprep.mubr.bf16.mxu0 0
    %1957 = vmatmul.mubr.bf16.gmra.mrb[0].mxu0 %v1923
    %v1958 = vpop.f32.mrb[0].mxu0
    %v1959 = vadd.f32 %v662, %v1958
    %v1960 = vpop.f32.mrb[0].mxu0
    %v1961 = vadd.f32 %v666, %v1960
    %v1962 = vpop.f32.mrb[0].mxu0
    %v1963 = vpop.f32.mrb[0].mxu0
    %1964 = vdwg.mxu0
    %1965 = vmatprep.subr.bf16.mxu0 %v1061
    %1966 = vmatpush1.bf16.msra.mxu0 %v1060
    %1967 = vmatprep.subr.bf16.mxu0 %v1065
    %1968 = vmatpush1.bf16.msra.mxu0 %v1064
    %1969 = vmatprep.subr.bf16.mxu0 %v1069
    %1970 = vmatpush1.bf16.msra.mxu0 %v1068
    %1971 = vmatprep.subr.bf16.mxu0 %v1073
    %1972 = vmatpush1.bf16.msra.mxu0 %v1072
    %1973 = vmatprep.subr.bf16.mxu0 %v1077
    %1974 = vmatpush1.bf16.msra.mxu0 %v1076
    %1975 = vmatprep.subr.bf16.mxu0 %v1081
    %1976 = vmatpush1.bf16.msra.mxu0 %v1080
    %1977 = vmatprep.subr.bf16.mxu0 %v1085
    %1978 = vmatpush1.bf16.msra.mxu0 %v1084
    %1979 = vmatprep.subr.bf16.mxu0 %v1089
    %1980 = vmatpush1.bf16.msra.mxu0 %v1088
    %1981 = vmatprep.subr.bf16.mxu0 0
    %1982 = vmatpush1.bf16.msra.mxu0 0
    %1983 = vmatprep.subr.bf16.mxu0 0
    %1984 = vmatpush1.bf16.msra.mxu0 0
    %1985 = vmatprep.subr.bf16.mxu0 0
    %1986 = vmatpush1.bf16.msra.mxu0 0
    %1987 = vmatprep.subr.bf16.mxu0 0
    %1988 = vmatpush1.bf16.msra.mxu0 0
    %1989 = vmatprep.subr.bf16.mxu0 0
    %1990 = vmatpush1.bf16.msra.mxu0 0
    %1991 = vmatprep.subr.bf16.mxu0 0
    %1992 = vmatpush1.bf16.msra.mxu0 0
    %1993 = vmatprep.subr.bf16.mxu0 0
    %1994 = vmatpush1.bf16.msra.mxu0 0
    %1995 = vmatprep.subr.bf16.mxu0 0
    %1996 = vmatpush1.bf16.msra.mxu0 0
    %1997 = vmatprep.mubr.bf16.mxu0 0
    %1998 = vmatmul.mubr.bf16.gmra.mrb[0].mxu0 %v1923
    %v1999 = vpop.f32.mrb[0].mxu0
    %v2000 = vadd.f32 %v670, %v1999
    %v2001 = vpop.f32.mrb[0].mxu0
    %v2002 = vadd.f32 %v674, %v2001
    %v2003 = vpop.f32.mrb[0].mxu0
    %v2004 = vpop.f32.mrb[0].mxu0
    %2005 = vdwg.mxu0
    %v2006 = vld [vmem:[%s1204] sm:$0xff]
    %v2007 = vld [vmem:[%s1206] sm:$0xff]
    %v2008 = vpack.c.bf16 %v2006, %v2006
    %2009 = vmatprep.subr.bf16.mxu0 %v1306
    %2010 = vmatpush1.bf16.msra.mxu0 %v1305
    %2011 = vmatprep.subr.bf16.mxu0 %v1310
    %2012 = vmatpush1.bf16.msra.mxu0 %v1309
    %2013 = vmatprep.subr.bf16.mxu0 %v1314
    %2014 = vmatpush1.bf16.msra.mxu0 %v1313
    %2015 = vmatprep.subr.bf16.mxu0 %v1318
    %2016 = vmatpush1.bf16.msra.mxu0 %v1317
    %2017 = vmatprep.subr.bf16.mxu0 %v1322
    %2018 = vmatpush1.bf16.msra.mxu0 %v1321
    %2019 = vmatprep.subr.bf16.mxu0 %v1326
    %2020 = vmatpush1.bf16.msra.mxu0 %v1325
    %2021 = vmatprep.subr.bf16.mxu0 %v1330
    %2022 = vmatpush1.bf16.msra.mxu0 %v1329
    %2023 = vmatprep.subr.bf16.mxu0 %v1334
    %2024 = vmatpush1.bf16.msra.mxu0 %v1333
    %2025 = vmatprep.subr.bf16.mxu0 0
    %2026 = vmatpush1.bf16.msra.mxu0 0
    %2027 = vmatprep.subr.bf16.mxu0 0
    %2028 = vmatpush1.bf16.msra.mxu0 0
    %2029 = vmatprep.subr.bf16.mxu0 0
    %2030 = vmatpush1.bf16.msra.mxu0 0
    %2031 = vmatprep.subr.bf16.mxu0 0
    %2032 = vmatpush1.bf16.msra.mxu0 0
    %2033 = vmatprep.subr.bf16.mxu0 0
    %2034 = vmatpush1.bf16.msra.mxu0 0
    %2035 = vmatprep.subr.bf16.mxu0 0
    %2036 = vmatpush1.bf16.msra.mxu0 0
    %2037 = vmatprep.subr.bf16.mxu0 0
    %2038 = vmatpush1.bf16.msra.mxu0 0
    %2039 = vmatprep.subr.bf16.mxu0 0
    %2040 = vmatpush1.bf16.msra.mxu0 0
    %2041 = vmatprep.mubr.bf16.mxu0 0
    %2042 = vmatmul.mubr.bf16.gmra.mrb[0].mxu0 %v2008
    %v2043 = vpop.f32.mrb[0].mxu0
    %v2044 = vadd.f32 0.0, %v2043
    %v2045 = vpop.f32.mrb[0].mxu0
    %v2046 = vadd.f32 0.0, %v2045
    %v2047 = vpop.f32.mrb[0].mxu0
    %v2048 = vpop.f32.mrb[0].mxu0
    %2049 = vdwg.mxu0
    %2050 = vmatprep.subr.bf16.mxu0 %v1308
    %2051 = vmatpush1.bf16.msra.mxu0 %v1307
    %2052 = vmatprep.subr.bf16.mxu0 %v1312
    %2053 = vmatpush1.bf16.msra.mxu0 %v1311
    %2054 = vmatprep.subr.bf16.mxu0 %v1316
    %2055 = vmatpush1.bf16.msra.mxu0 %v1315
    %2056 = vmatprep.subr.bf16.mxu0 %v1320
    %2057 = vmatpush1.bf16.msra.mxu0 %v1319
    %2058 = vmatprep.subr.bf16.mxu0 %v1324
    %2059 = vmatpush1.bf16.msra.mxu0 %v1323
    %2060 = vmatprep.subr.bf16.mxu0 %v1328
    %2061 = vmatpush1.bf16.msra.mxu0 %v1327
    %2062 = vmatprep.subr.bf16.mxu0 %v1332
    %2063 = vmatpush1.bf16.msra.mxu0 %v1331
    %2064 = vmatprep.subr.bf16.mxu0 %v1336
    %2065 = vmatpush1.bf16.msra.mxu0 %v1335
    %2066 = vmatprep.subr.bf16.mxu0 0
    %2067 = vmatpush1.bf16.msra.mxu0 0
    %2068 = vmatprep.subr.bf16.mxu0 0
    %2069 = vmatpush1.bf16.msra.mxu0 0
    %2070 = vmatprep.subr.bf16.mxu0 0
    %2071 = vmatpush1.bf16.msra.mxu0 0
    %2072 = vmatprep.subr.bf16.mxu0 0
    %2073 = vmatpush1.bf16.msra.mxu0 0
    %2074 = vmatprep.subr.bf16.mxu0 0
    %2075 = vmatpush1.bf16.msra.mxu0 0
    %2076 = vmatprep.subr.bf16.mxu0 0
    %2077 = vmatpush1.bf16.msra.mxu0 0
    %2078 = vmatprep.subr.bf16.mxu0 0
    %2079 = vmatpush1.bf16.msra.mxu0 0
    %2080 = vmatprep.subr.bf16.mxu0 0
    %2081 = vmatpush1.bf16.msra.mxu0 0
    %2082 = vmatprep.mubr.bf16.mxu0 0
    %2083 = vmatmul.mubr.bf16.gmra.mrb[0].mxu0 %v2008
    %v2084 = vpop.f32.mrb[0].mxu0
    %v2085 = vadd.f32 0.0, %v2084
    %v2086 = vpop.f32.mrb[0].mxu0
    %v2087 = vadd.f32 0.0, %v2086
    %v2088 = vpop.f32.mrb[0].mxu0
    %v2089 = vpop.f32.mrb[0].mxu0
    %2090 = vdwg.mxu0
    %v2091 = vadd.f32 %v1959, %v2044
    %v2092 = vadd.f32 %v1961, %v2046
    %v2093 = vadd.f32 %v2000, %v2085
    %v2094 = vadd.f32 %v2002, %v2087
    %v2095 = vxor.u32 %v2091, 2147483648
    %v2096 = vmul.f32 %v2095, 1.442695
    %v2097 = vpow.pop %v2096
    %v2098 = vadd.f32 %v2097, 1.0
    %v2099 = vrcp.pop %v2098
    %v2100 = vmul.f32 1.0, %v2099
    %v2101 = vxor.u32 %v2092, 2147483648
    %v2102 = vmul.f32 %v2101, 1.442695
    %v2103 = vpow.pop %v2102
    %v2104 = vadd.f32 %v2103, 1.0
    %v2105 = vrcp.pop %v2104
    %v2106 = vmul.f32 1.0, %v2105
    %v2107 = vtanh.pop %v2093
    %v2108 = vxor.u32 %v2094, 2147483648
    %v2109 = vmul.f32 %v2108, 1.442695
    %v2110 = vpow.pop %v2109
    %v2111 = vadd.f32 %v2110, 1.0
    %v2112 = vrcp.pop %v2111
    %v2113 = vmul.f32 1.0, %v2112
    %v2114 = vmul.f32 %v2106, %v2007
    %v2115 = vmul.f32 %v2100, %v2107
    %v2116 = vadd.f32 %v2114, %v2115
    %v2117 = vtanh.pop %v2116
    %v2118 = vmul.f32 %v2113, %v2117
    %2119 = vst [vmem:[%s1204] sm:$0xff] %v2118
    %2120 = vst [vmem:[%s1206] sm:$0xff] %v2116
    %s2121 = smul.u32 3, 4
    %s2122 = smul.addr %s2121, 8
    %s2123 = scalar_lea.vmem [#allocation2], %s2122
    %v2124 = vld [vmem:[%s2123] sm:$0xff]
    %v2125 = vld [vmem:[%s2123 + $0x8] sm:$0xff]
    %v2126 = vld [vmem:[%s2123 + $0x10] sm:$0xff]
    %v2127 = vld [vmem:[%s2123 + $0x18] sm:$0xff]
    %v2128 = vld [vmem:[#allocation3] sm:$0xff]
    %v2129 = vld [vmem:[#allocation4] sm:$0xff]
    %v2130 = vpack.c.bf16 %v2128, %v2128
    %2131 = vmatprep.subr.bf16.mxu0 %v786
    %2132 = vmatpush1.bf16.msra.mxu0 %v785
    %2133 = vmatprep.subr.bf16.mxu0 %v790
    %2134 = vmatpush1.bf16.msra.mxu0 %v789
    %2135 = vmatprep.subr.bf16.mxu0 %v794
    %2136 = vmatpush1.bf16.msra.mxu0 %v793
    %2137 = vmatprep.subr.bf16.mxu0 %v798
    %2138 = vmatpush1.bf16.msra.mxu0 %v797
    %2139 = vmatprep.subr.bf16.mxu0 %v802
    %2140 = vmatpush1.bf16.msra.mxu0 %v801
    %2141 = vmatprep.subr.bf16.mxu0 %v806
    %2142 = vmatpush1.bf16.msra.mxu0 %v805
    %2143 = vmatprep.subr.bf16.mxu0 %v810
    %2144 = vmatpush1.bf16.msra.mxu0 %v809
    %2145 = vmatprep.subr.bf16.mxu0 %v814
    %2146 = vmatpush1.bf16.msra.mxu0 %v813
    %2147 = vmatprep.subr.bf16.mxu0 0
    %2148 = vmatpush1.bf16.msra.mxu0 0
    %2149 = vmatprep.subr.bf16.mxu0 0
    %2150 = vmatpush1.bf16.msra.mxu0 0
    %2151 = vmatprep.subr.bf16.mxu0 0
    %2152 = vmatpush1.bf16.msra.mxu0 0
    %2153 = vmatprep.subr.bf16.mxu0 0
    %2154 = vmatpush1.bf16.msra.mxu0 0
    %2155 = vmatprep.subr.bf16.mxu0 0
    %2156 = vmatpush1.bf16.msra.mxu0 0
    %2157 = vmatprep.subr.bf16.mxu0 0
    %2158 = vmatpush1.bf16.msra.mxu0 0
    %2159 = vmatprep.subr.bf16.mxu0 0
    %2160 = vmatpush1.bf16.msra.mxu0 0
    %2161 = vmatprep.subr.bf16.mxu0 0
    %2162 = vmatpush1.bf16.msra.mxu0 0
    %2163 = vmatprep.mubr.bf16.mxu0 0
    %2164 = vmatmul.mubr.bf16.gmra.mrb[0].mxu0 %v2130
    %v2165 = vpop.f32.mrb[0].mxu0
    %v2166 = vadd.f32 0.0, %v2165
    %v2167 = vpop.f32.mrb[0].mxu0
    %v2168 = vadd.f32 0.0, %v2167
    %v2169 = vpop.f32.mrb[0].mxu0
    %v2170 = vpop.f32.mrb[0].mxu0
    %2171 = vdwg.mxu0
    %2172 = vmatprep.subr.bf16.mxu0 %v788
    %2173 = vmatpush1.bf16.msra.mxu0 %v787
    %2174 = vmatprep.subr.bf16.mxu0 %v792
    %2175 = vmatpush1.bf16.msra.mxu0 %v791
    %2176 = vmatprep.subr.bf16.mxu0 %v796
    %2177 = vmatpush1.bf16.msra.mxu0 %v795
    %2178 = vmatprep.subr.bf16.mxu0 %v800
    %2179 = vmatpush1.bf16.msra.mxu0 %v799
    %2180 = vmatprep.subr.bf16.mxu0 %v804
    %2181 = vmatpush1.bf16.msra.mxu0 %v803
    %2182 = vmatprep.subr.bf16.mxu0 %v808
    %2183 = vmatpush1.bf16.msra.mxu0 %v807
    %2184 = vmatprep.subr.bf16.mxu0 %v812
    %2185 = vmatpush1.bf16.msra.mxu0 %v811
    %2186 = vmatprep.subr.bf16.mxu0 %v816
    %2187 = vmatpush1.bf16.msra.mxu0 %v815
    %2188 = vmatprep.subr.bf16.mxu0 0
    %2189 = vmatpush1.bf16.msra.mxu0 0
    %2190 = vmatprep.subr.bf16.mxu0 0
    %2191 = vmatpush1.bf16.msra.mxu0 0
    %2192 = vmatprep.subr.bf16.mxu0 0
    %2193 = vmatpush1.bf16.msra.mxu0 0
    %2194 = vmatprep.subr.bf16.mxu0 0
    %2195 = vmatpush1.bf16.msra.mxu0 0
    %2196 = vmatprep.subr.bf16.mxu0 0
    %2197 = vmatpush1.bf16.msra.mxu0 0
    %2198 = vmatprep.subr.bf16.mxu0 0
    %2199 = vmatpush1.bf16.msra.mxu0 0
    %2200 = vmatprep.subr.bf16.mxu0 0
    %2201 = vmatpush1.bf16.msra.mxu0 0
    %2202 = vmatprep.subr.bf16.mxu0 0
    %2203 = vmatpush1.bf16.msra.mxu0 0
    %2204 = vmatprep.mubr.bf16.mxu0 0
    %2205 = vmatmul.mubr.bf16.gmra.mrb[0].mxu0 %v2130
    %v2206 = vpop.f32.mrb[0].mxu0
    %v2207 = vadd.f32 0.0, %v2206
    %v2208 = vpop.f32.mrb[0].mxu0
    %v2209 = vadd.f32 0.0, %v2208
    %v2210 = vpop.f32.mrb[0].mxu0
    %v2211 = vpop.f32.mrb[0].mxu0
    %2212 = vdwg.mxu0
    %v2213 = vadd.f32 %v2124, %v2166
    %v2214 = vadd.f32 %v2125, %v2168
    %v2215 = vadd.f32 %v2126, %v2207
    %v2216 = vadd.f32 %v2127, %v2209
    %v2217 = vxor.u32 %v2213, 2147483648
    %v2218 = vmul.f32 %v2217, 1.442695
    %v2219 = vpow.pop %v2218
    %v2220 = vadd.f32 %v2219, 1.0
    %v2221 = vrcp.pop %v2220
    %v2222 = vmul.f32 1.0, %v2221
    %v2223 = vxor.u32 %v2214, 2147483648
    %v2224 = vmul.f32 %v2223, 1.442695
    %v2225 = vpow.pop %v2224
    %v2226 = vadd.f32 %v2225, 1.0
    %v2227 = vrcp.pop %v2226
    %v2228 = vmul.f32 1.0, %v2227
    %v2229 = vtanh.pop %v2215
    %v2230 = vxor.u32 %v2216, 2147483648
    %v2231 = vmul.f32 %v2230, 1.442695
    %v2232 = vpow.pop %v2231
    %v2233 = vadd.f32 %v2232, 1.0
    %v2234 = vrcp.pop %v2233
    %v2235 = vmul.f32 1.0, %v2234
    %v2236 = vmul.f32 %v2228, %v2129
    %v2237 = vmul.f32 %v2222, %v2229
    %v2238 = vadd.f32 %v2236, %v2237
    %v2239 = vtanh.pop %v2238
    %v2240 = vmul.f32 %v2235, %v2239
    %2241 = vst [vmem:[#allocation3] sm:$0xff] %v2240
    %2242 = vst [vmem:[#allocation4] sm:$0xff] %v2238
    %v2243 = vpack.c.bf16 %v2240, %v2240
    %2244 = vmatprep.subr.bf16.mxu0 %v1059
    %2245 = vmatpush1.bf16.msra.mxu0 %v1058
    %2246 = vmatprep.subr.bf16.mxu0 %v1063
    %2247 = vmatpush1.bf16.msra.mxu0 %v1062
    %2248 = vmatprep.subr.bf16.mxu0 %v1067
    %2249 = vmatpush1.bf16.msra.mxu0 %v1066
    %2250 = vmatprep.subr.bf16.mxu0 %v1071
    %2251 = vmatpush1.bf16.msra.mxu0 %v1070
    %2252 = vmatprep.subr.bf16.mxu0 %v1075
    %2253 = vmatpush1.bf16.msra.mxu0 %v1074
    %2254 = vmatprep.subr.bf16.mxu0 %v1079
    %2255 = vmatpush1.bf16.msra.mxu0 %v1078
    %2256 = vmatprep.subr.bf16.mxu0 %v1083
    %2257 = vmatpush1.bf16.msra.mxu0 %v1082
    %2258 = vmatprep.subr.bf16.mxu0 %v1087
    %2259 = vmatpush1.bf16.msra.mxu0 %v1086
    %2260 = vmatprep.subr.bf16.mxu0 0
    %2261 = vmatpush1.bf16.msra.mxu0 0
    %2262 = vmatprep.subr.bf16.mxu0 0
    %2263 = vmatpush1.bf16.msra.mxu0 0
    %2264 = vmatprep.subr.bf16.mxu0 0
    %2265 = vmatpush1.bf16.msra.mxu0 0
    %2266 = vmatprep.subr.bf16.mxu0 0
    %2267 = vmatpush1.bf16.msra.mxu0 0
    %2268 = vmatprep.subr.bf16.mxu0 0
    %2269 = vmatpush1.bf16.msra.mxu0 0
    %2270 = vmatprep.subr.bf16.mxu0 0
    %2271 = vmatpush1.bf16.msra.mxu0 0
    %2272 = vmatprep.subr.bf16.mxu0 0
    %2273 = vmatpush1.bf16.msra.mxu0 0
    %2274 = vmatprep.subr.bf16.mxu0 0
    %2275 = vmatpush1.bf16.msra.mxu0 0
    %2276 = vmatprep.mubr.bf16.mxu0 0
    %2277 = vmatmul.mubr.bf16.gmra.mrb[0].mxu0 %v2243
    %v2278 = vpop.f32.mrb[0].mxu0
    %v2279 = vadd.f32 %v662, %v2278
    %v2280 = vpop.f32.mrb[0].mxu0
    %v2281 = vadd.f32 %v666, %v2280
    %v2282 = vpop.f32.mrb[0].mxu0
    %v2283 = vpop.f32.mrb[0].mxu0
    %2284 = vdwg.mxu0
    %2285 = vmatprep.subr.bf16.mxu0 %v1061
    %2286 = vmatpush1.bf16.msra.mxu0 %v1060
    %2287 = vmatprep.subr.bf16.mxu0 %v1065
    %2288 = vmatpush1.bf16.msra.mxu0 %v1064
    %2289 = vmatprep.subr.bf16.mxu0 %v1069
    %2290 = vmatpush1.bf16.msra.mxu0 %v1068
    %2291 = vmatprep.subr.bf16.mxu0 %v1073
    %2292 = vmatpush1.bf16.msra.mxu0 %v1072
    %2293 = vmatprep.subr.bf16.mxu0 %v1077
    %2294 = vmatpush1.bf16.msra.mxu0 %v1076
    %2295 = vmatprep.subr.bf16.mxu0 %v1081
    %2296 = vmatpush1.bf16.msra.mxu0 %v1080
    %2297 = vmatprep.subr.bf16.mxu0 %v1085
    %2298 = vmatpush1.bf16.msra.mxu0 %v1084
    %2299 = vmatprep.subr.bf16.mxu0 %v1089
    %2300 = vmatpush1.bf16.msra.mxu0 %v1088
    %2301 = vmatprep.subr.bf16.mxu0 0
    %2302 = vmatpush1.bf16.msra.mxu0 0
    %2303 = vmatprep.subr.bf16.mxu0 0
    %2304 = vmatpush1.bf16.msra.mxu0 0
    %2305 = vmatprep.subr.bf16.mxu0 0
    %2306 = vmatpush1.bf16.msra.mxu0 0
    %2307 = vmatprep.subr.bf16.mxu0 0
    %2308 = vmatpush1.bf16.msra.mxu0 0
    %2309 = vmatprep.subr.bf16.mxu0 0
    %2310 = vmatpush1.bf16.msra.mxu0 0
    %2311 = vmatprep.subr.bf16.mxu0 0
    %2312 = vmatpush1.bf16.msra.mxu0 0
    %2313 = vmatprep.subr.bf16.mxu0 0
    %2314 = vmatpush1.bf16.msra.mxu0 0
    %2315 = vmatprep.subr.bf16.mxu0 0
    %2316 = vmatpush1.bf16.msra.mxu0 0
    %2317 = vmatprep.mubr.bf16.mxu0 0
    %2318 = vmatmul.mubr.bf16.gmra.mrb[0].mxu0 %v2243
    %v2319 = vpop.f32.mrb[0].mxu0
    %v2320 = vadd.f32 %v670, %v2319
    %v2321 = vpop.f32.mrb[0].mxu0
    %v2322 = vadd.f32 %v674, %v2321
    %v2323 = vpop.f32.mrb[0].mxu0
    %v2324 = vpop.f32.mrb[0].mxu0
    %2325 = vdwg.mxu0
    %v2326 = vld [vmem:[%s1204] sm:$0xff]
    %v2327 = vld [vmem:[%s1206] sm:$0xff]
    %v2328 = vpack.c.bf16 %v2326, %v2326
    %2329 = vmatprep.subr.bf16.mxu0 %v1306
    %2330 = vmatpush1.bf16.msra.mxu0 %v1305
    %2331 = vmatprep.subr.bf16.mxu0 %v1310
    %2332 = vmatpush1.bf16.msra.mxu0 %v1309
    %2333 = vmatprep.subr.bf16.mxu0 %v1314
    %2334 = vmatpush1.bf16.msra.mxu0 %v1313
    %2335 = vmatprep.subr.bf16.mxu0 %v1318
    %2336 = vmatpush1.bf16.msra.mxu0 %v1317
    %2337 = vmatprep.subr.bf16.mxu0 %v1322
    %2338 = vmatpush1.bf16.msra.mxu0 %v1321
    %2339 = vmatprep.subr.bf16.mxu0 %v1326
    %2340 = vmatpush1.bf16.msra.mxu0 %v1325
    %2341 = vmatprep.subr.bf16.mxu0 %v1330
    %2342 = vmatpush1.bf16.msra.mxu0 %v1329
    %2343 = vmatprep.subr.bf16.mxu0 %v1334
    %2344 = vmatpush1.bf16.msra.mxu0 %v1333
    %2345 = vmatprep.subr.bf16.mxu0 0
    %2346 = vmatpush1.bf16.msra.mxu0 0
    %2347 = vmatprep.subr.bf16.mxu0 0
    %2348 = vmatpush1.bf16.msra.mxu0 0
    %2349 = vmatprep.subr.bf16.mxu0 0
    %2350 = vmatpush1.bf16.msra.mxu0 0
    %2351 = vmatprep.subr.bf16.mxu0 0
    %2352 = vmatpush1.bf16.msra.mxu0 0
    %2353 = vmatprep.subr.bf16.mxu0 0
    %2354 = vmatpush1.bf16.msra.mxu0 0
    %2355 = vmatprep.subr.bf16.mxu0 0
    %2356 = vmatpush1.bf16.msra.mxu0 0
    %2357 = vmatprep.subr.bf16.mxu0 0
    %2358 = vmatpush1.bf16.msra.mxu0 0
    %2359 = vmatprep.subr.bf16.mxu0 0
    %2360 = vmatpush1.bf16.msra.mxu0 0
    %2361 = vmatprep.mubr.bf16.mxu0 0
    %2362 = vmatmul.mubr.bf16.gmra.mrb[0].mxu0 %v2328
    %v2363 = vpop.f32.mrb[0].mxu0
    %v2364 = vadd.f32 0.0, %v2363
    %v2365 = vpop.f32.mrb[0].mxu0
    %v2366 = vadd.f32 0.0, %v2365
    %v2367 = vpop.f32.mrb[0].mxu0
    %v2368 = vpop.f32.mrb[0].mxu0
    %2369 = vdwg.mxu0
    %2370 = vmatprep.subr.bf16.mxu0 %v1308
    %2371 = vmatpush1.bf16.msra.mxu0 %v1307
    %2372 = vmatprep.subr.bf16.mxu0 %v1312
    %2373 = vmatpush1.bf16.msra.mxu0 %v1311
    %2374 = vmatprep.subr.bf16.mxu0 %v1316
    %2375 = vmatpush1.bf16.msra.mxu0 %v1315
    %2376 = vmatprep.subr.bf16.mxu0 %v1320
    %2377 = vmatpush1.bf16.msra.mxu0 %v1319
    %2378 = vmatprep.subr.bf16.mxu0 %v1324
    %2379 = vmatpush1.bf16.msra.mxu0 %v1323
    %2380 = vmatprep.subr.bf16.mxu0 %v1328
    %2381 = vmatpush1.bf16.msra.mxu0 %v1327
    %2382 = vmatprep.subr.bf16.mxu0 %v1332
    %2383 = vmatpush1.bf16.msra.mxu0 %v1331
    %2384 = vmatprep.subr.bf16.mxu0 %v1336
    %2385 = vmatpush1.bf16.msra.mxu0 %v1335
    %2386 = vmatprep.subr.bf16.mxu0 0
    %2387 = vmatpush1.bf16.msra.mxu0 0
    %2388 = vmatprep.subr.bf16.mxu0 0
    %2389 = vmatpush1.bf16.msra.mxu0 0
    %2390 = vmatprep.subr.bf16.mxu0 0
    %2391 = vmatpush1.bf16.msra.mxu0 0
    %2392 = vmatprep.subr.bf16.mxu0 0
    %2393 = vmatpush1.bf16.msra.mxu0 0
    %2394 = vmatprep.subr.bf16.mxu0 0
    %2395 = vmatpush1.bf16.msra.mxu0 0
    %2396 = vmatprep.subr.bf16.mxu0 0
    %2397 = vmatpush1.bf16.msra.mxu0 0
    %2398 = vmatprep.subr.bf16.mxu0 0
    %2399 = vmatpush1.bf16.msra.mxu0 0
    %2400 = vmatprep.subr.bf16.mxu0 0
    %2401 = vmatpush1.bf16.msra.mxu0 0
    %2402 = vmatprep.mubr.bf16.mxu0 0
    %2403 = vmatmul.mubr.bf16.gmra.mrb[0].mxu0 %v2328
    %v2404 = vpop.f32.mrb[0].mxu0
    %v2405 = vadd.f32 0.0, %v2404
    %v2406 = vpop.f32.mrb[0].mxu0
    %v2407 = vadd.f32 0.0, %v2406
    %v2408 = vpop.f32.mrb[0].mxu0
    %v2409 = vpop.f32.mrb[0].mxu0
    %2410 = vdwg.mxu0
    %v2411 = vadd.f32 %v2279, %v2364
    %v2412 = vadd.f32 %v2281, %v2366
    %v2413 = vadd.f32 %v2320, %v2405
    %v2414 = vadd.f32 %v2322, %v2407
    %v2415 = vxor.u32 %v2411, 2147483648
    %v2416 = vmul.f32 %v2415, 1.442695
    %v2417 = vpow.pop %v2416
    %v2418 = vadd.f32 %v2417, 1.0
    %v2419 = vrcp.pop %v2418
    %v2420 = vmul.f32 1.0, %v2419
    %v2421 = vxor.u32 %v2412, 2147483648
    %v2422 = vmul.f32 %v2421, 1.442695
    %v2423 = vpow.pop %v2422
    %v2424 = vadd.f32 %v2423, 1.0
    %v2425 = vrcp.pop %v2424
    %v2426 = vmul.f32 1.0, %v2425
    %v2427 = vtanh.pop %v2413
    %v2428 = vxor.u32 %v2414, 2147483648
    %v2429 = vmul.f32 %v2428, 1.442695
    %v2430 = vpow.pop %v2429
    %v2431 = vadd.f32 %v2430, 1.0
    %v2432 = vrcp.pop %v2431
    %v2433 = vmul.f32 1.0, %v2432
    %v2434 = vmul.f32 %v2426, %v2327
    %v2435 = vmul.f32 %v2420, %v2427
    %v2436 = vadd.f32 %v2434, %v2435
    %v2437 = vtanh.pop %v2436
    %v2438 = vmul.f32 %v2433, %v2437
    %2439 = vst [vmem:[%s1204] sm:$0xff] %v2438
    %2440 = vst [vmem:[%s1206] sm:$0xff] %v2436
    %s2441 = smul.u32 4, 4
    %s2442 = smul.addr %s2441, 8
    %s2443 = scalar_lea.vmem [#allocation2], %s2442
    %v2444 = vld [vmem:[%s2443] sm:$0xff]
    %v2445 = vld [vmem:[%s2443 + $0x8] sm:$0xff]
    %v2446 = vld [vmem:[%s2443 + $0x10] sm:$0xff]
    %v2447 = vld [vmem:[%s2443 + $0x18] sm:$0xff]
    %v2448 = vld [vmem:[#allocation3] sm:$0xff]
    %v2449 = vld [vmem:[#allocation4] sm:$0xff]
    %v2450 = vpack.c.bf16 %v2448, %v2448
    %2451 = vmatprep.subr.bf16.mxu0 %v786
    %2452 = vmatpush1.bf16.msra.mxu0 %v785
    %2453 = vmatprep.subr.bf16.mxu0 %v790
    %2454 = vmatpush1.bf16.msra.mxu0 %v789
    %2455 = vmatprep.subr.bf16.mxu0 %v794
    %2456 = vmatpush1.bf16.msra.mxu0 %v793
    %2457 = vmatprep.subr.bf16.mxu0 %v798
    %2458 = vmatpush1.bf16.msra.mxu0 %v797
    %2459 = vmatprep.subr.bf16.mxu0 %v802
    %2460 = vmatpush1.bf16.msra.mxu0 %v801
    %2461 = vmatprep.subr.bf16.mxu0 %v806
    %2462 = vmatpush1.bf16.msra.mxu0 %v805
    %2463 = vmatprep.subr.bf16.mxu0 %v810
    %2464 = vmatpush1.bf16.msra.mxu0 %v809
    %2465 = vmatprep.subr.bf16.mxu0 %v814
    %2466 = vmatpush1.bf16.msra.mxu0 %v813
    %2467 = vmatprep.subr.bf16.mxu0 0
    %2468 = vmatpush1.bf16.msra.mxu0 0
    %2469 = vmatprep.subr.bf16.mxu0 0
    %2470 = vmatpush1.bf16.msra.mxu0 0
    %2471 = vmatprep.subr.bf16.mxu0 0
    %2472 = vmatpush1.bf16.msra.mxu0 0
    %2473 = vmatprep.subr.bf16.mxu0 0
    %2474 = vmatpush1.bf16.msra.mxu0 0
    %2475 = vmatprep.subr.bf16.mxu0 0
    %2476 = vmatpush1.bf16.msra.mxu0 0
    %2477 = vmatprep.subr.bf16.mxu0 0
    %2478 = vmatpush1.bf16.msra.mxu0 0
    %2479 = vmatprep.subr.bf16.mxu0 0
    %2480 = vmatpush1.bf16.msra.mxu0 0
    %2481 = vmatprep.subr.bf16.mxu0 0
    %2482 = vmatpush1.bf16.msra.mxu0 0
    %2483 = vmatprep.mubr.bf16.mxu0 0
    %2484 = vmatmul.mubr.bf16.gmra.mrb[0].mxu0 %v2450
    %v2485 = vpop.f32.mrb[0].mxu0
    %v2486 = vadd.f32 0.0, %v2485
    %v2487 = vpop.f32.mrb[0].mxu0
    %v2488 = vadd.f32 0.0, %v2487
    %v2489 = vpop.f32.mrb[0].mxu0
    %v2490 = vpop.f32.mrb[0].mxu0
    %2491 = vdwg.mxu0
    %2492 = vmatprep.subr.bf16.mxu0 %v788
    %2493 = vmatpush1.bf16.msra.mxu0 %v787
    %2494 = vmatprep.subr.bf16.mxu0 %v792
    %2495 = vmatpush1.bf16.msra.mxu0 %v791
    %2496 = vmatprep.subr.bf16.mxu0 %v796
    %2497 = vmatpush1.bf16.msra.mxu0 %v795
    %2498 = vmatprep.subr.bf16.mxu0 %v800
    %2499 = vmatpush1.bf16.msra.mxu0 %v799
    %2500 = vmatprep.subr.bf16.mxu0 %v804
    %2501 = vmatpush1.bf16.msra.mxu0 %v803
    %2502 = vmatprep.subr.bf16.mxu0 %v808
    %2503 = vmatpush1.bf16.msra.mxu0 %v807
    %2504 = vmatprep.subr.bf16.mxu0 %v812
    %2505 = vmatpush1.bf16.msra.mxu0 %v811
    %2506 = vmatprep.subr.bf16.mxu0 %v816
    %2507 = vmatpush1.bf16.msra.mxu0 %v815
    %2508 = vmatprep.subr.bf16.mxu0 0
    %2509 = vmatpush1.bf16.msra.mxu0 0
    %2510 = vmatprep.subr.bf16.mxu0 0
    %2511 = vmatpush1.bf16.msra.mxu0 0
    %2512 = vmatprep.subr.bf16.mxu0 0
    %2513 = vmatpush1.bf16.msra.mxu0 0
    %2514 = vmatprep.subr.bf16.mxu0 0
    %2515 = vmatpush1.bf16.msra.mxu0 0
    %2516 = vmatprep.subr.bf16.mxu0 0
    %2517 = vmatpush1.bf16.msra.mxu0 0
    %2518 = vmatprep.subr.bf16.mxu0 0
    %2519 = vmatpush1.bf16.msra.mxu0 0
    %2520 = vmatprep.subr.bf16.mxu0 0
    %2521 = vmatpush1.bf16.msra.mxu0 0
    %2522 = vmatprep.subr.bf16.mxu0 0
    %2523 = vmatpush1.bf16.msra.mxu0 0
    %2524 = vmatprep.mubr.bf16.mxu0 0
    %2525 = vmatmul.mubr.bf16.gmra.mrb[0].mxu0 %v2450
    %v2526 = vpop.f32.mrb[0].mxu0
    %v2527 = vadd.f32 0.0, %v2526
    %v2528 = vpop.f32.mrb[0].mxu0
    %v2529 = vadd.f32 0.0, %v2528
    %v2530 = vpop.f32.mrb[0].mxu0
    %v2531 = vpop.f32.mrb[0].mxu0
    %2532 = vdwg.mxu0
    %v2533 = vadd.f32 %v2444, %v2486
    %v2534 = vadd.f32 %v2445, %v2488
    %v2535 = vadd.f32 %v2446, %v2527
    %v2536 = vadd.f32 %v2447, %v2529
    %v2537 = vxor.u32 %v2533, 2147483648
    %v2538 = vmul.f32 %v2537, 1.442695
    %v2539 = vpow.pop %v2538
    %v2540 = vadd.f32 %v2539, 1.0
    %v2541 = vrcp.pop %v2540
    %v2542 = vmul.f32 1.0, %v2541
    %v2543 = vxor.u32 %v2534, 2147483648
    %v2544 = vmul.f32 %v2543, 1.442695
    %v2545 = vpow.pop %v2544
    %v2546 = vadd.f32 %v2545, 1.0
    %v2547 = vrcp.pop %v2546
    %v2548 = vmul.f32 1.0, %v2547
    %v2549 = vtanh.pop %v2535
    %v2550 = vxor.u32 %v2536, 2147483648
    %v2551 = vmul.f32 %v2550, 1.442695
    %v2552 = vpow.pop %v2551
    %v2553 = vadd.f32 %v2552, 1.0
    %v2554 = vrcp.pop %v2553
    %v2555 = vmul.f32 1.0, %v2554
    %v2556 = vmul.f32 %v2548, %v2449
    %v2557 = vmul.f32 %v2542, %v2549
    %v2558 = vadd.f32 %v2556, %v2557
    %v2559 = vtanh.pop %v2558
    %v2560 = vmul.f32 %v2555, %v2559
    %2561 = vst [vmem:[#allocation3] sm:$0xff] %v2560
    %2562 = vst [vmem:[#allocation4] sm:$0xff] %v2558
    %v2563 = vpack.c.bf16 %v2560, %v2560
    %2564 = vmatprep.subr.bf16.mxu0 %v1059
    %2565 = vmatpush1.bf16.msra.mxu0 %v1058
    %2566 = vmatprep.subr.bf16.mxu0 %v1063
    %2567 = vmatpush1.bf16.msra.mxu0 %v1062
    %2568 = vmatprep.subr.bf16.mxu0 %v1067
    %2569 = vmatpush1.bf16.msra.mxu0 %v1066
    %2570 = vmatprep.subr.bf16.mxu0 %v1071
    %2571 = vmatpush1.bf16.msra.mxu0 %v1070
    %2572 = vmatprep.subr.bf16.mxu0 %v1075
    %2573 = vmatpush1.bf16.msra.mxu0 %v1074
    %2574 = vmatprep.subr.bf16.mxu0 %v1079
    %2575 = vmatpush1.bf16.msra.mxu0 %v1078
    %2576 = vmatprep.subr.bf16.mxu0 %v1083
    %2577 = vmatpush1.bf16.msra.mxu0 %v1082
    %2578 = vmatprep.subr.bf16.mxu0 %v1087
    %2579 = vmatpush1.bf16.msra.mxu0 %v1086
    %2580 = vmatprep.subr.bf16.mxu0 0
    %2581 = vmatpush1.bf16.msra.mxu0 0
    %2582 = vmatprep.subr.bf16.mxu0 0
    %2583 = vmatpush1.bf16.msra.mxu0 0
    %2584 = vmatprep.subr.bf16.mxu0 0
    %2585 = vmatpush1.bf16.msra.mxu0 0
    %2586 = vmatprep.subr.bf16.mxu0 0
    %2587 = vmatpush1.bf16.msra.mxu0 0
    %2588 = vmatprep.subr.bf16.mxu0 0
    %2589 = vmatpush1.bf16.msra.mxu0 0
    %2590 = vmatprep.subr.bf16.mxu0 0
    %2591 = vmatpush1.bf16.msra.mxu0 0
    %2592 = vmatprep.subr.bf16.mxu0 0
    %2593 = vmatpush1.bf16.msra.mxu0 0
    %2594 = vmatprep.subr.bf16.mxu0 0
    %2595 = vmatpush1.bf16.msra.mxu0 0
    %2596 = vmatprep.mubr.bf16.mxu0 0
    %2597 = vmatmul.mubr.bf16.gmra.mrb[0].mxu0 %v2563
    %v2598 = vpop.f32.mrb[0].mxu0
    %v2599 = vadd.f32 %v662, %v2598
    %v2600 = vpop.f32.mrb[0].mxu0
    %v2601 = vadd.f32 %v666, %v2600
    %v2602 = vpop.f32.mrb[0].mxu0
    %v2603 = vpop.f32.mrb[0].mxu0
    %2604 = vdwg.mxu0
    %2605 = vmatprep.subr.bf16.mxu0 %v1061
    %2606 = vmatpush1.bf16.msra.mxu0 %v1060
    %2607 = vmatprep.subr.bf16.mxu0 %v1065
    %2608 = vmatpush1.bf16.msra.mxu0 %v1064
    %2609 = vmatprep.subr.bf16.mxu0 %v1069
    %2610 = vmatpush1.bf16.msra.mxu0 %v1068
    %2611 = vmatprep.subr.bf16.mxu0 %v1073
    %2612 = vmatpush1.bf16.msra.mxu0 %v1072
    %2613 = vmatprep.subr.bf16.mxu0 %v1077
    %2614 = vmatpush1.bf16.msra.mxu0 %v1076
    %2615 = vmatprep.subr.bf16.mxu0 %v1081
    %2616 = vmatpush1.bf16.msra.mxu0 %v1080
    %2617 = vmatprep.subr.bf16.mxu0 %v1085
    %2618 = vmatpush1.bf16.msra.mxu0 %v1084
    %2619 = vmatprep.subr.bf16.mxu0 %v1089
    %2620 = vmatpush1.bf16.msra.mxu0 %v1088
    %2621 = vmatprep.subr.bf16.mxu0 0
    %2622 = vmatpush1.bf16.msra.mxu0 0
    %2623 = vmatprep.subr.bf16.mxu0 0
    %2624 = vmatpush1.bf16.msra.mxu0 0
    %2625 = vmatprep.subr.bf16.mxu0 0
    %2626 = vmatpush1.bf16.msra.mxu0 0
    %2627 = vmatprep.subr.bf16.mxu0 0
    %2628 = vmatpush1.bf16.msra.mxu0 0
    %2629 = vmatprep.subr.bf16.mxu0 0
    %2630 = vmatpush1.bf16.msra.mxu0 0
    %2631 = vmatprep.subr.bf16.mxu0 0
    %2632 = vmatpush1.bf16.msra.mxu0 0
    %2633 = vmatprep.subr.bf16.mxu0 0
    %2634 = vmatpush1.bf16.msra.mxu0 0
    %2635 = vmatprep.subr.bf16.mxu0 0
    %2636 = vmatpush1.bf16.msra.mxu0 0
    %2637 = vmatprep.mubr.bf16.mxu0 0
    %2638 = vmatmul.mubr.bf16.gmra.mrb[0].mxu0 %v2563
    %v2639 = vpop.f32.mrb[0].mxu0
    %v2640 = vadd.f32 %v670, %v2639
    %v2641 = vpop.f32.mrb[0].mxu0
    %v2642 = vadd.f32 %v674, %v2641
    %v2643 = vpop.f32.mrb[0].mxu0
    %v2644 = vpop.f32.mrb[0].mxu0
    %2645 = vdwg.mxu0
    %v2646 = vld [vmem:[%s1204] sm:$0xff]
    %v2647 = vld [vmem:[%s1206] sm:$0xff]
    %v2648 = vpack.c.bf16 %v2646, %v2646
    %2649 = vmatprep.subr.bf16.mxu0 %v1306
    %2650 = vmatpush1.bf16.msra.mxu0 %v1305
    %2651 = vmatprep.subr.bf16.mxu0 %v1310
    %2652 = vmatpush1.bf16.msra.mxu0 %v1309
    %2653 = vmatprep.subr.bf16.mxu0 %v1314
    %2654 = vmatpush1.bf16.msra.mxu0 %v1313
    %2655 = vmatprep.subr.bf16.mxu0 %v1318
    %2656 = vmatpush1.bf16.msra.mxu0 %v1317
    %2657 = vmatprep.subr.bf16.mxu0 %v1322
    %2658 = vmatpush1.bf16.msra.mxu0 %v1321
    %2659 = vmatprep.subr.bf16.mxu0 %v1326
    %2660 = vmatpush1.bf16.msra.mxu0 %v1325
    %2661 = vmatprep.subr.bf16.mxu0 %v1330
    %2662 = vmatpush1.bf16.msra.mxu0 %v1329
    %2663 = vmatprep.subr.bf16.mxu0 %v1334
    %2664 = vmatpush1.bf16.msra.mxu0 %v1333
    %2665 = vmatprep.subr.bf16.mxu0 0
    %2666 = vmatpush1.bf16.msra.mxu0 0
    %2667 = vmatprep.subr.bf16.mxu0 0
    %2668 = vmatpush1.bf16.msra.mxu0 0
    %2669 = vmatprep.subr.bf16.mxu0 0
    %2670 = vmatpush1.bf16.msra.mxu0 0
    %2671 = vmatprep.subr.bf16.mxu0 0
    %2672 = vmatpush1.bf16.msra.mxu0 0
    %2673 = vmatprep.subr.bf16.mxu0 0
    %2674 = vmatpush1.bf16.msra.mxu0 0
    %2675 = vmatprep.subr.bf16.mxu0 0
    %2676 = vmatpush1.bf16.msra.mxu0 0
    %2677 = vmatprep.subr.bf16.mxu0 0
    %2678 = vmatpush1.bf16.msra.mxu0 0
    %2679 = vmatprep.subr.bf16.mxu0 0
    %2680 = vmatpush1.bf16.msra.mxu0 0
    %2681 = vmatprep.mubr.bf16.mxu0 0
    %2682 = vmatmul.mubr.bf16.gmra.mrb[0].mxu0 %v2648
    %v2683 = vpop.f32.mrb[0].mxu0
    %v2684 = vadd.f32 0.0, %v2683
    %v2685 = vpop.f32.mrb[0].mxu0
    %v2686 = vadd.f32 0.0, %v2685
    %v2687 = vpop.f32.mrb[0].mxu0
    %v2688 = vpop.f32.mrb[0].mxu0
    %2689 = vdwg.mxu0
    %2690 = vmatprep.subr.bf16.mxu0 %v1308
    %2691 = vmatpush1.bf16.msra.mxu0 %v1307
    %2692 = vmatprep.subr.bf16.mxu0 %v1312
    %2693 = vmatpush1.bf16.msra.mxu0 %v1311
    %2694 = vmatprep.subr.bf16.mxu0 %v1316
    %2695 = vmatpush1.bf16.msra.mxu0 %v1315
    %2696 = vmatprep.subr.bf16.mxu0 %v1320
    %2697 = vmatpush1.bf16.msra.mxu0 %v1319
    %2698 = vmatprep.subr.bf16.mxu0 %v1324
    %2699 = vmatpush1.bf16.msra.mxu0 %v1323
    %2700 = vmatprep.subr.bf16.mxu0 %v1328
    %2701 = vmatpush1.bf16.msra.mxu0 %v1327
    %2702 = vmatprep.subr.bf16.mxu0 %v1332
    %2703 = vmatpush1.bf16.msra.mxu0 %v1331
    %2704 = vmatprep.subr.bf16.mxu0 %v1336
    %2705 = vmatpush1.bf16.msra.mxu0 %v1335
    %2706 = vmatprep.subr.bf16.mxu0 0
    %2707 = vmatpush1.bf16.msra.mxu0 0
    %2708 = vmatprep.subr.bf16.mxu0 0
    %2709 = vmatpush1.bf16.msra.mxu0 0
    %2710 = vmatprep.subr.bf16.mxu0 0
    %2711 = vmatpush1.bf16.msra.mxu0 0
    %2712 = vmatprep.subr.bf16.mxu0 0
    %2713 = vmatpush1.bf16.msra.mxu0 0
    %2714 = vmatprep.subr.bf16.mxu0 0
    %2715 = vmatpush1.bf16.msra.mxu0 0
    %2716 = vmatprep.subr.bf16.mxu0 0
    %2717 = vmatpush1.bf16.msra.mxu0 0
    %2718 = vmatprep.subr.bf16.mxu0 0
    %2719 = vmatpush1.bf16.msra.mxu0 0
    %2720 = vmatprep.subr.bf16.mxu0 0
    %2721 = vmatpush1.bf16.msra.mxu0 0
    %2722 = vmatprep.mubr.bf16.mxu0 0
    %2723 = vmatmul.mubr.bf16.gmra.mrb[0].mxu0 %v2648
    %v2724 = vpop.f32.mrb[0].mxu0
    %v2725 = vadd.f32 0.0, %v2724
    %v2726 = vpop.f32.mrb[0].mxu0
    %v2727 = vadd.f32 0.0, %v2726
    %v2728 = vpop.f32.mrb[0].mxu0
    %v2729 = vpop.f32.mrb[0].mxu0
    %2730 = vdwg.mxu0
    %v2731 = vadd.f32 %v2599, %v2684
    %v2732 = vadd.f32 %v2601, %v2686
    %v2733 = vadd.f32 %v2640, %v2725
    %v2734 = vadd.f32 %v2642, %v2727
    %v2735 = vxor.u32 %v2731, 2147483648
    %v2736 = vmul.f32 %v2735, 1.442695
    %v2737 = vpow.pop %v2736
    %v2738 = vadd.f32 %v2737, 1.0
    %v2739 = vrcp.pop %v2738
    %v2740 = vmul.f32 1.0, %v2739
    %v2741 = vxor.u32 %v2732, 2147483648
    %v2742 = vmul.f32 %v2741, 1.442695
    %v2743 = vpow.pop %v2742
    %v2744 = vadd.f32 %v2743, 1.0
    %v2745 = vrcp.pop %v2744
    %v2746 = vmul.f32 1.0, %v2745
    %v2747 = vtanh.pop %v2733
    %v2748 = vxor.u32 %v2734, 2147483648
    %v2749 = vmul.f32 %v2748, 1.442695
    %v2750 = vpow.pop %v2749
    %v2751 = vadd.f32 %v2750, 1.0
    %v2752 = vrcp.pop %v2751
    %v2753 = vmul.f32 1.0, %v2752
    %v2754 = vmul.f32 %v2746, %v2647
    %v2755 = vmul.f32 %v2740, %v2747
    %v2756 = vadd.f32 %v2754, %v2755
    %v2757 = vtanh.pop %v2756
    %v2758 = vmul.f32 %v2753, %v2757
    %2759 = vst [vmem:[%s1204] sm:$0xff] %v2758
    %2760 = vst [vmem:[%s1206] sm:$0xff] %v2756
    %s2761 = smul.u32 5, 4
    %s2762 = smul.addr %s2761, 8
    %s2763 = scalar_lea.vmem [#allocation2], %s2762
    %v2764 = vld [vmem:[%s2763] sm:$0xff]
    %v2765 = vld [vmem:[%s2763 + $0x8] sm:$0xff]
    %v2766 = vld [vmem:[%s2763 + $0x10] sm:$0xff]
    %v2767 = vld [vmem:[%s2763 + $0x18] sm:$0xff]
    %v2768 = vld [vmem:[#allocation3] sm:$0xff]
    %v2769 = vld [vmem:[#allocation4] sm:$0xff]
    %v2770 = vpack.c.bf16 %v2768, %v2768
    %2771 = vmatprep.subr.bf16.mxu0 %v786
    %2772 = vmatpush1.bf16.msra.mxu0 %v785
    %2773 = vmatprep.subr.bf16.mxu0 %v790
    %2774 = vmatpush1.bf16.msra.mxu0 %v789
    %2775 = vmatprep.subr.bf16.mxu0 %v794
    %2776 = vmatpush1.bf16.msra.mxu0 %v793
    %2777 = vmatprep.subr.bf16.mxu0 %v798
    %2778 = vmatpush1.bf16.msra.mxu0 %v797
    %2779 = vmatprep.subr.bf16.mxu0 %v802
    %2780 = vmatpush1.bf16.msra.mxu0 %v801
    %2781 = vmatprep.subr.bf16.mxu0 %v806
    %2782 = vmatpush1.bf16.msra.mxu0 %v805
    %2783 = vmatprep.subr.bf16.mxu0 %v810
    %2784 = vmatpush1.bf16.msra.mxu0 %v809
    %2785 = vmatprep.subr.bf16.mxu0 %v814
    %2786 = vmatpush1.bf16.msra.mxu0 %v813
    %2787 = vmatprep.subr.bf16.mxu0 0
    %2788 = vmatpush1.bf16.msra.mxu0 0
    %2789 = vmatprep.subr.bf16.mxu0 0
    %2790 = vmatpush1.bf16.msra.mxu0 0
    %2791 = vmatprep.subr.bf16.mxu0 0
    %2792 = vmatpush1.bf16.msra.mxu0 0
    %2793 = vmatprep.subr.bf16.mxu0 0
    %2794 = vmatpush1.bf16.msra.mxu0 0
    %2795 = vmatprep.subr.bf16.mxu0 0
    %2796 = vmatpush1.bf16.msra.mxu0 0
    %2797 = vmatprep.subr.bf16.mxu0 0
    %2798 = vmatpush1.bf16.msra.mxu0 0
    %2799 = vmatprep.subr.bf16.mxu0 0
    %2800 = vmatpush1.bf16.msra.mxu0 0
    %2801 = vmatprep.subr.bf16.mxu0 0
    %2802 = vmatpush1.bf16.msra.mxu0 0
    %2803 = vmatprep.mubr.bf16.mxu0 0
    %2804 = vmatmul.mubr.bf16.gmra.mrb[0].mxu0 %v2770
    %v2805 = vpop.f32.mrb[0].mxu0
    %v2806 = vadd.f32 0.0, %v2805
    %v2807 = vpop.f32.mrb[0].mxu0
    %v2808 = vadd.f32 0.0, %v2807
    %v2809 = vpop.f32.mrb[0].mxu0
    %v2810 = vpop.f32.mrb[0].mxu0
    %2811 = vdwg.mxu0
    %2812 = vmatprep.subr.bf16.mxu0 %v788
    %2813 = vmatpush1.bf16.msra.mxu0 %v787
    %2814 = vmatprep.subr.bf16.mxu0 %v792
    %2815 = vmatpush1.bf16.msra.mxu0 %v791
    %2816 = vmatprep.subr.bf16.mxu0 %v796
    %2817 = vmatpush1.bf16.msra.mxu0 %v795
    %2818 = vmatprep.subr.bf16.mxu0 %v800
    %2819 = vmatpush1.bf16.msra.mxu0 %v799
    %2820 = vmatprep.subr.bf16.mxu0 %v804
    %2821 = vmatpush1.bf16.msra.mxu0 %v803
    %2822 = vmatprep.subr.bf16.mxu0 %v808
    %2823 = vmatpush1.bf16.msra.mxu0 %v807
    %2824 = vmatprep.subr.bf16.mxu0 %v812
    %2825 = vmatpush1.bf16.msra.mxu0 %v811
    %2826 = vmatprep.subr.bf16.mxu0 %v816
    %2827 = vmatpush1.bf16.msra.mxu0 %v815
    %2828 = vmatprep.subr.bf16.mxu0 0
    %2829 = vmatpush1.bf16.msra.mxu0 0
    %2830 = vmatprep.subr.bf16.mxu0 0
    %2831 = vmatpush1.bf16.msra.mxu0 0
    %2832 = vmatprep.subr.bf16.mxu0 0
    %2833 = vmatpush1.bf16.msra.mxu0 0
    %2834 = vmatprep.subr.bf16.mxu0 0
    %2835 = vmatpush1.bf16.msra.mxu0 0
    %2836 = vmatprep.subr.bf16.mxu0 0
    %2837 = vmatpush1.bf16.msra.mxu0 0
    %2838 = vmatprep.subr.bf16.mxu0 0
    %2839 = vmatpush1.bf16.msra.mxu0 0
    %2840 = vmatprep.subr.bf16.mxu0 0
    %2841 = vmatpush1.bf16.msra.mxu0 0
    %2842 = vmatprep.subr.bf16.mxu0 0
    %2843 = vmatpush1.bf16.msra.mxu0 0
    %2844 = vmatprep.mubr.bf16.mxu0 0
    %2845 = vmatmul.mubr.bf16.gmra.mrb[0].mxu0 %v2770
    %v2846 = vpop.f32.mrb[0].mxu0
    %v2847 = vadd.f32 0.0, %v2846
    %v2848 = vpop.f32.mrb[0].mxu0
    %v2849 = vadd.f32 0.0, %v2848
    %v2850 = vpop.f32.mrb[0].mxu0
    %v2851 = vpop.f32.mrb[0].mxu0
    %2852 = vdwg.mxu0
    %v2853 = vadd.f32 %v2764, %v2806
    %v2854 = vadd.f32 %v2765, %v2808
    %v2855 = vadd.f32 %v2766, %v2847
    %v2856 = vadd.f32 %v2767, %v2849
    %v2857 = vxor.u32 %v2853, 2147483648
    %v2858 = vmul.f32 %v2857, 1.442695
    %v2859 = vpow.pop %v2858
    %v2860 = vadd.f32 %v2859, 1.0
    %v2861 = vrcp.pop %v2860
    %v2862 = vmul.f32 1.0, %v2861
    %v2863 = vxor.u32 %v2854, 2147483648
    %v2864 = vmul.f32 %v2863, 1.442695
    %v2865 = vpow.pop %v2864
    %v2866 = vadd.f32 %v2865, 1.0
    %v2867 = vrcp.pop %v2866
    %v2868 = vmul.f32 1.0, %v2867
    %v2869 = vtanh.pop %v2855
    %v2870 = vxor.u32 %v2856, 2147483648
    %v2871 = vmul.f32 %v2870, 1.442695
    %v2872 = vpow.pop %v2871
    %v2873 = vadd.f32 %v2872, 1.0
    %v2874 = vrcp.pop %v2873
    %v2875 = vmul.f32 1.0, %v2874
    %v2876 = vmul.f32 %v2868, %v2769
    %v2877 = vmul.f32 %v2862, %v2869
    %v2878 = vadd.f32 %v2876, %v2877
    %v2879 = vtanh.pop %v2878
    %v2880 = vmul.f32 %v2875, %v2879
    %2881 = vst [vmem:[#allocation3] sm:$0xff] %v2880
    %2882 = vst [vmem:[#allocation4] sm:$0xff] %v2878
    %v2883 = vpack.c.bf16 %v2880, %v2880
    %2884 = vmatprep.subr.bf16.mxu0 %v1059
    %2885 = vmatpush1.bf16.msra.mxu0 %v1058
    %2886 = vmatprep.subr.bf16.mxu0 %v1063
    %2887 = vmatpush1.bf16.msra.mxu0 %v1062
    %2888 = vmatprep.subr.bf16.mxu0 %v1067
    %2889 = vmatpush1.bf16.msra.mxu0 %v1066
    %2890 = vmatprep.subr.bf16.mxu0 %v1071
    %2891 = vmatpush1.bf16.msra.mxu0 %v1070
    %2892 = vmatprep.subr.bf16.mxu0 %v1075
    %2893 = vmatpush1.bf16.msra.mxu0 %v1074
    %2894 = vmatprep.subr.bf16.mxu0 %v1079
    %2895 = vmatpush1.bf16.msra.mxu0 %v1078
    %2896 = vmatprep.subr.bf16.mxu0 %v1083
    %2897 = vmatpush1.bf16.msra.mxu0 %v1082
    %2898 = vmatprep.subr.bf16.mxu0 %v1087
    %2899 = vmatpush1.bf16.msra.mxu0 %v1086
    %2900 = vmatprep.subr.bf16.mxu0 0
    %2901 = vmatpush1.bf16.msra.mxu0 0
    %2902 = vmatprep.subr.bf16.mxu0 0
    %2903 = vmatpush1.bf16.msra.mxu0 0
    %2904 = vmatprep.subr.bf16.mxu0 0
    %2905 = vmatpush1.bf16.msra.mxu0 0
    %2906 = vmatprep.subr.bf16.mxu0 0
    %2907 = vmatpush1.bf16.msra.mxu0 0
    %2908 = vmatprep.subr.bf16.mxu0 0
    %2909 = vmatpush1.bf16.msra.mxu0 0
    %2910 = vmatprep.subr.bf16.mxu0 0
    %2911 = vmatpush1.bf16.msra.mxu0 0
    %2912 = vmatprep.subr.bf16.mxu0 0
    %2913 = vmatpush1.bf16.msra.mxu0 0
    %2914 = vmatprep.subr.bf16.mxu0 0
    %2915 = vmatpush1.bf16.msra.mxu0 0
    %2916 = vmatprep.mubr.bf16.mxu0 0
    %2917 = vmatmul.mubr.bf16.gmra.mrb[0].mxu0 %v2883
    %v2918 = vpop.f32.mrb[0].mxu0
    %v2919 = vadd.f32 %v662, %v2918
    %v2920 = vpop.f32.mrb[0].mxu0
    %v2921 = vadd.f32 %v666, %v2920
    %v2922 = vpop.f32.mrb[0].mxu0
    %v2923 = vpop.f32.mrb[0].mxu0
    %2924 = vdwg.mxu0
    %2925 = vmatprep.subr.bf16.mxu0 %v1061
    %2926 = vmatpush1.bf16.msra.mxu0 %v1060
    %2927 = vmatprep.subr.bf16.mxu0 %v1065
    %2928 = vmatpush1.bf16.msra.mxu0 %v1064
    %2929 = vmatprep.subr.bf16.mxu0 %v1069
    %2930 = vmatpush1.bf16.msra.mxu0 %v1068
    %2931 = vmatprep.subr.bf16.mxu0 %v1073
    %2932 = vmatpush1.bf16.msra.mxu0 %v1072
    %2933 = vmatprep.subr.bf16.mxu0 %v1077
    %2934 = vmatpush1.bf16.msra.mxu0 %v1076
    %2935 = vmatprep.subr.bf16.mxu0 %v1081
    %2936 = vmatpush1.bf16.msra.mxu0 %v1080
    %2937 = vmatprep.subr.bf16.mxu0 %v1085
    %2938 = vmatpush1.bf16.msra.mxu0 %v1084
    %2939 = vmatprep.subr.bf16.mxu0 %v1089
    %2940 = vmatpush1.bf16.msra.mxu0 %v1088
    %2941 = vmatprep.subr.bf16.mxu0 0
    %2942 = vmatpush1.bf16.msra.mxu0 0
    %2943 = vmatprep.subr.bf16.mxu0 0
    %2944 = vmatpush1.bf16.msra.mxu0 0
    %2945 = vmatprep.subr.bf16.mxu0 0
    %2946 = vmatpush1.bf16.msra.mxu0 0
    %2947 = vmatprep.subr.bf16.mxu0 0
    %2948 = vmatpush1.bf16.msra.mxu0 0
    %2949 = vmatprep.subr.bf16.mxu0 0
    %2950 = vmatpush1.bf16.msra.mxu0 0
    %2951 = vmatprep.subr.bf16.mxu0 0
    %2952 = vmatpush1.bf16.msra.mxu0 0
    %2953 = vmatprep.subr.bf16.mxu0 0
    %2954 = vmatpush1.bf16.msra.mxu0 0
    %2955 = vmatprep.subr.bf16.mxu0 0
    %2956 = vmatpush1.bf16.msra.mxu0 0
    %2957 = vmatprep.mubr.bf16.mxu0 0
    %2958 = vmatmul.mubr.bf16.gmra.mrb[0].mxu0 %v2883
    %v2959 = vpop.f32.mrb[0].mxu0
    %v2960 = vadd.f32 %v670, %v2959
    %v2961 = vpop.f32.mrb[0].mxu0
    %v2962 = vadd.f32 %v674, %v2961
    %v2963 = vpop.f32.mrb[0].mxu0
    %v2964 = vpop.f32.mrb[0].mxu0
    %2965 = vdwg.mxu0
    %v2966 = vld [vmem:[%s1204] sm:$0xff]
    %v2967 = vld [vmem:[%s1206] sm:$0xff]
    %v2968 = vpack.c.bf16 %v2966, %v2966
    %2969 = vmatprep.subr.bf16.mxu0 %v1306
    %2970 = vmatpush1.bf16.msra.mxu0 %v1305
    %2971 = vmatprep.subr.bf16.mxu0 %v1310
    %2972 = vmatpush1.bf16.msra.mxu0 %v1309
    %2973 = vmatprep.subr.bf16.mxu0 %v1314
    %2974 = vmatpush1.bf16.msra.mxu0 %v1313
    %2975 = vmatprep.subr.bf16.mxu0 %v1318
    %2976 = vmatpush1.bf16.msra.mxu0 %v1317
    %2977 = vmatprep.subr.bf16.mxu0 %v1322
    %2978 = vmatpush1.bf16.msra.mxu0 %v1321
    %2979 = vmatprep.subr.bf16.mxu0 %v1326
    %2980 = vmatpush1.bf16.msra.mxu0 %v1325
    %2981 = vmatprep.subr.bf16.mxu0 %v1330
    %2982 = vmatpush1.bf16.msra.mxu0 %v1329
    %2983 = vmatprep.subr.bf16.mxu0 %v1334
    %2984 = vmatpush1.bf16.msra.mxu0 %v1333
    %2985 = vmatprep.subr.bf16.mxu0 0
    %2986 = vmatpush1.bf16.msra.mxu0 0
    %2987 = vmatprep.subr.bf16.mxu0 0
    %2988 = vmatpush1.bf16.msra.mxu0 0
    %2989 = vmatprep.subr.bf16.mxu0 0
    %2990 = vmatpush1.bf16.msra.mxu0 0
    %2991 = vmatprep.subr.bf16.mxu0 0
    %2992 = vmatpush1.bf16.msra.mxu0 0
    %2993 = vmatprep.subr.bf16.mxu0 0
    %2994 = vmatpush1.bf16.msra.mxu0 0
    %2995 = vmatprep.subr.bf16.mxu0 0
    %2996 = vmatpush1.bf16.msra.mxu0 0
    %2997 = vmatprep.subr.bf16.mxu0 0
    %2998 = vmatpush1.bf16.msra.mxu0 0
    %2999 = vmatprep.subr.bf16.mxu0 0
    %3000 = vmatpush1.bf16.msra.mxu0 0
    %3001 = vmatprep.mubr.bf16.mxu0 0
    %3002 = vmatmul.mubr.bf16.gmra.mrb[0].mxu0 %v2968
    %v3003 = vpop.f32.mrb[0].mxu0
    %v3004 = vadd.f32 0.0, %v3003
    %v3005 = vpop.f32.mrb[0].mxu0
    %v3006 = vadd.f32 0.0, %v3005
    %v3007 = vpop.f32.mrb[0].mxu0
    %v3008 = vpop.f32.mrb[0].mxu0
    %3009 = vdwg.mxu0
    %3010 = vmatprep.subr.bf16.mxu0 %v1308
    %3011 = vmatpush1.bf16.msra.mxu0 %v1307
    %3012 = vmatprep.subr.bf16.mxu0 %v1312
    %3013 = vmatpush1.bf16.msra.mxu0 %v1311
    %3014 = vmatprep.subr.bf16.mxu0 %v1316
    %3015 = vmatpush1.bf16.msra.mxu0 %v1315
    %3016 = vmatprep.subr.bf16.mxu0 %v1320
    %3017 = vmatpush1.bf16.msra.mxu0 %v1319
    %3018 = vmatprep.subr.bf16.mxu0 %v1324
    %3019 = vmatpush1.bf16.msra.mxu0 %v1323
    %3020 = vmatprep.subr.bf16.mxu0 %v1328
    %3021 = vmatpush1.bf16.msra.mxu0 %v1327
    %3022 = vmatprep.subr.bf16.mxu0 %v1332
    %3023 = vmatpush1.bf16.msra.mxu0 %v1331
    %3024 = vmatprep.subr.bf16.mxu0 %v1336
    %3025 = vmatpush1.bf16.msra.mxu0 %v1335
    %3026 = vmatprep.subr.bf16.mxu0 0
    %3027 = vmatpush1.bf16.msra.mxu0 0
    %3028 = vmatprep.subr.bf16.mxu0 0
    %3029 = vmatpush1.bf16.msra.mxu0 0
    %3030 = vmatprep.subr.bf16.mxu0 0
    %3031 = vmatpush1.bf16.msra.mxu0 0
    %3032 = vmatprep.subr.bf16.mxu0 0
    %3033 = vmatpush1.bf16.msra.mxu0 0
    %3034 = vmatprep.subr.bf16.mxu0 0
    %3035 = vmatpush1.bf16.msra.mxu0 0
    %3036 = vmatprep.subr.bf16.mxu0 0
    %3037 = vmatpush1.bf16.msra.mxu0 0
    %3038 = vmatprep.subr.bf16.mxu0 0
    %3039 = vmatpush1.bf16.msra.mxu0 0
    %3040 = vmatprep.subr.bf16.mxu0 0
    %3041 = vmatpush1.bf16.msra.mxu0 0
    %3042 = vmatprep.mubr.bf16.mxu0 0
    %3043 = vmatmul.mubr.bf16.gmra.mrb[0].mxu0 %v2968
    %v3044 = vpop.f32.mrb[0].mxu0
    %v3045 = vadd.f32 0.0, %v3044
    %v3046 = vpop.f32.mrb[0].mxu0
    %v3047 = vadd.f32 0.0, %v3046
    %v3048 = vpop.f32.mrb[0].mxu0
    %v3049 = vpop.f32.mrb[0].mxu0
    %3050 = vdwg.mxu0
    %v3051 = vadd.f32 %v2919, %v3004
    %v3052 = vadd.f32 %v2921, %v3006
    %v3053 = vadd.f32 %v2960, %v3045
    %v3054 = vadd.f32 %v2962, %v3047
    %v3055 = vxor.u32 %v3051, 2147483648
    %v3056 = vmul.f32 %v3055, 1.442695
    %v3057 = vpow.pop %v3056
    %v3058 = vadd.f32 %v3057, 1.0
    %v3059 = vrcp.pop %v3058
    %v3060 = vmul.f32 1.0, %v3059
    %v3061 = vxor.u32 %v3052, 2147483648
    %v3062 = vmul.f32 %v3061, 1.442695
    %v3063 = vpow.pop %v3062
    %v3064 = vadd.f32 %v3063, 1.0
    %v3065 = vrcp.pop %v3064
    %v3066 = vmul.f32 1.0, %v3065
    %v3067 = vtanh.pop %v3053
    %v3068 = vxor.u32 %v3054, 2147483648
    %v3069 = vmul.f32 %v3068, 1.442695
    %v3070 = vpow.pop %v3069
    %v3071 = vadd.f32 %v3070, 1.0
    %v3072 = vrcp.pop %v3071
    %v3073 = vmul.f32 1.0, %v3072
    %v3074 = vmul.f32 %v3066, %v2967
    %v3075 = vmul.f32 %v3060, %v3067
    %v3076 = vadd.f32 %v3074, %v3075
    %v3077 = vtanh.pop %v3076
    %v3078 = vmul.f32 %v3073, %v3077
    %3079 = vst [vmem:[%s1204] sm:$0xff] %v3078
    %3080 = vst [vmem:[%s1206] sm:$0xff] %v3076
    %s3081 = smul.u32 6, 4
    %s3082 = smul.addr %s3081, 8
    %s3083 = scalar_lea.vmem [#allocation2], %s3082
    %v3084 = vld [vmem:[%s3083] sm:$0xff]
    %v3085 = vld [vmem:[%s3083 + $0x8] sm:$0xff]
    %v3086 = vld [vmem:[%s3083 + $0x10] sm:$0xff]
    %v3087 = vld [vmem:[%s3083 + $0x18] sm:$0xff]
    %v3088 = vld [vmem:[#allocation3] sm:$0xff]
    %v3089 = vld [vmem:[#allocation4] sm:$0xff]
    %v3090 = vpack.c.bf16 %v3088, %v3088
    %3091 = vmatprep.subr.bf16.mxu0 %v786
    %3092 = vmatpush1.bf16.msra.mxu0 %v785
    %3093 = vmatprep.subr.bf16.mxu0 %v790
    %3094 = vmatpush1.bf16.msra.mxu0 %v789
    %3095 = vmatprep.subr.bf16.mxu0 %v794
    %3096 = vmatpush1.bf16.msra.mxu0 %v793
    %3097 = vmatprep.subr.bf16.mxu0 %v798
    %3098 = vmatpush1.bf16.msra.mxu0 %v797
    %3099 = vmatprep.subr.bf16.mxu0 %v802
    %3100 = vmatpush1.bf16.msra.mxu0 %v801
    %3101 = vmatprep.subr.bf16.mxu0 %v806
    %3102 = vmatpush1.bf16.msra.mxu0 %v805
    %3103 = vmatprep.subr.bf16.mxu0 %v810
    %3104 = vmatpush1.bf16.msra.mxu0 %v809
    %3105 = vmatprep.subr.bf16.mxu0 %v814
    %3106 = vmatpush1.bf16.msra.mxu0 %v813
    %3107 = vmatprep.subr.bf16.mxu0 0
    %3108 = vmatpush1.bf16.msra.mxu0 0
    %3109 = vmatprep.subr.bf16.mxu0 0
    %3110 = vmatpush1.bf16.msra.mxu0 0
    %3111 = vmatprep.subr.bf16.mxu0 0
    %3112 = vmatpush1.bf16.msra.mxu0 0
    %3113 = vmatprep.subr.bf16.mxu0 0
    %3114 = vmatpush1.bf16.msra.mxu0 0
    %3115 = vmatprep.subr.bf16.mxu0 0
    %3116 = vmatpush1.bf16.msra.mxu0 0
    %3117 = vmatprep.subr.bf16.mxu0 0
    %3118 = vmatpush1.bf16.msra.mxu0 0
    %3119 = vmatprep.subr.bf16.mxu0 0
    %3120 = vmatpush1.bf16.msra.mxu0 0
    %3121 = vmatprep.subr.bf16.mxu0 0
    %3122 = vmatpush1.bf16.msra.mxu0 0
    %3123 = vmatprep.mubr.bf16.mxu0 0
    %3124 = vmatmul.mubr.bf16.gmra.mrb[0].mxu0 %v3090
    %v3125 = vpop.f32.mrb[0].mxu0
    %v3126 = vadd.f32 0.0, %v3125
    %v3127 = vpop.f32.mrb[0].mxu0
    %v3128 = vadd.f32 0.0, %v3127
    %v3129 = vpop.f32.mrb[0].mxu0
    %v3130 = vpop.f32.mrb[0].mxu0
    %3131 = vdwg.mxu0
    %3132 = vmatprep.subr.bf16.mxu0 %v788
    %3133 = vmatpush1.bf16.msra.mxu0 %v787
    %3134 = vmatprep.subr.bf16.mxu0 %v792
    %3135 = vmatpush1.bf16.msra.mxu0 %v791
    %3136 = vmatprep.subr.bf16.mxu0 %v796
    %3137 = vmatpush1.bf16.msra.mxu0 %v795
    %3138 = vmatprep.subr.bf16.mxu0 %v800
    %3139 = vmatpush1.bf16.msra.mxu0 %v799
    %3140 = vmatprep.subr.bf16.mxu0 %v804
    %3141 = vmatpush1.bf16.msra.mxu0 %v803
    %3142 = vmatprep.subr.bf16.mxu0 %v808
    %3143 = vmatpush1.bf16.msra.mxu0 %v807
    %3144 = vmatprep.subr.bf16.mxu0 %v812
    %3145 = vmatpush1.bf16.msra.mxu0 %v811
    %3146 = vmatprep.subr.bf16.mxu0 %v816
    %3147 = vmatpush1.bf16.msra.mxu0 %v815
    %3148 = vmatprep.subr.bf16.mxu0 0
    %3149 = vmatpush1.bf16.msra.mxu0 0
    %3150 = vmatprep.subr.bf16.mxu0 0
    %3151 = vmatpush1.bf16.msra.mxu0 0
    %3152 = vmatprep.subr.bf16.mxu0 0
    %3153 = vmatpush1.bf16.msra.mxu0 0
    %3154 = vmatprep.subr.bf16.mxu0 0
    %3155 = vmatpush1.bf16.msra.mxu0 0
    %3156 = vmatprep.subr.bf16.mxu0 0
    %3157 = vmatpush1.bf16.msra.mxu0 0
    %3158 = vmatprep.subr.bf16.mxu0 0
    %3159 = vmatpush1.bf16.msra.mxu0 0
    %3160 = vmatprep.subr.bf16.mxu0 0
    %3161 = vmatpush1.bf16.msra.mxu0 0
    %3162 = vmatprep.subr.bf16.mxu0 0
    %3163 = vmatpush1.bf16.msra.mxu0 0
    %3164 = vmatprep.mubr.bf16.mxu0 0
    %3165 = vmatmul.mubr.bf16.gmra.mrb[0].mxu0 %v3090
    %v3166 = vpop.f32.mrb[0].mxu0
    %v3167 = vadd.f32 0.0, %v3166
    %v3168 = vpop.f32.mrb[0].mxu0
    %v3169 = vadd.f32 0.0, %v3168
    %v3170 = vpop.f32.mrb[0].mxu0
    %v3171 = vpop.f32.mrb[0].mxu0
    %3172 = vdwg.mxu0
    %v3173 = vadd.f32 %v3084, %v3126
    %v3174 = vadd.f32 %v3085, %v3128
    %v3175 = vadd.f32 %v3086, %v3167
    %v3176 = vadd.f32 %v3087, %v3169
    %v3177 = vxor.u32 %v3173, 2147483648
    %v3178 = vmul.f32 %v3177, 1.442695
    %v3179 = vpow.pop %v3178
    %v3180 = vadd.f32 %v3179, 1.0
    %v3181 = vrcp.pop %v3180
    %v3182 = vmul.f32 1.0, %v3181
    %v3183 = vxor.u32 %v3174, 2147483648
    %v3184 = vmul.f32 %v3183, 1.442695
    %v3185 = vpow.pop %v3184
    %v3186 = vadd.f32 %v3185, 1.0
    %v3187 = vrcp.pop %v3186
    %v3188 = vmul.f32 1.0, %v3187
    %v3189 = vtanh.pop %v3175
    %v3190 = vxor.u32 %v3176, 2147483648
    %v3191 = vmul.f32 %v3190, 1.442695
    %v3192 = vpow.pop %v3191
    %v3193 = vadd.f32 %v3192, 1.0
    %v3194 = vrcp.pop %v3193
    %v3195 = vmul.f32 1.0, %v3194
    %v3196 = vmul.f32 %v3188, %v3089
    %v3197 = vmul.f32 %v3182, %v3189
    %v3198 = vadd.f32 %v3196, %v3197
    %v3199 = vtanh.pop %v3198
    %v3200 = vmul.f32 %v3195, %v3199
    %3201 = vst [vmem:[#allocation3] sm:$0xff] %v3200
    %3202 = vst [vmem:[#allocation4] sm:$0xff] %v3198
    %v3203 = vpack.c.bf16 %v3200, %v3200
    %3204 = vmatprep.subr.bf16.mxu0 %v1059
    %3205 = vmatpush1.bf16.msra.mxu0 %v1058
    %3206 = vmatprep.subr.bf16.mxu0 %v1063
    %3207 = vmatpush1.bf16.msra.mxu0 %v1062
    %3208 = vmatprep.subr.bf16.mxu0 %v1067
    %3209 = vmatpush1.bf16.msra.mxu0 %v1066
    %3210 = vmatprep.subr.bf16.mxu0 %v1071
    %3211 = vmatpush1.bf16.msra.mxu0 %v1070
    %3212 = vmatprep.subr.bf16.mxu0 %v1075
    %3213 = vmatpush1.bf16.msra.mxu0 %v1074
    %3214 = vmatprep.subr.bf16.mxu0 %v1079
    %3215 = vmatpush1.bf16.msra.mxu0 %v1078
    %3216 = vmatprep.subr.bf16.mxu0 %v1083
    %3217 = vmatpush1.bf16.msra.mxu0 %v1082
    %3218 = vmatprep.subr.bf16.mxu0 %v1087
    %3219 = vmatpush1.bf16.msra.mxu0 %v1086
    %3220 = vmatprep.subr.bf16.mxu0 0
    %3221 = vmatpush1.bf16.msra.mxu0 0
    %3222 = vmatprep.subr.bf16.mxu0 0
    %3223 = vmatpush1.bf16.msra.mxu0 0
    %3224 = vmatprep.subr.bf16.mxu0 0
    %3225 = vmatpush1.bf16.msra.mxu0 0
    %3226 = vmatprep.subr.bf16.mxu0 0
    %3227 = vmatpush1.bf16.msra.mxu0 0
    %3228 = vmatprep.subr.bf16.mxu0 0
    %3229 = vmatpush1.bf16.msra.mxu0 0
    %3230 = vmatprep.subr.bf16.mxu0 0
    %3231 = vmatpush1.bf16.msra.mxu0 0
    %3232 = vmatprep.subr.bf16.mxu0 0
    %3233 = vmatpush1.bf16.msra.mxu0 0
    %3234 = vmatprep.subr.bf16.mxu0 0
    %3235 = vmatpush1.bf16.msra.mxu0 0
    %3236 = vmatprep.mubr.bf16.mxu0 0
    %3237 = vmatmul.mubr.bf16.gmra.mrb[0].mxu0 %v3203
    %v3238 = vpop.f32.mrb[0].mxu0
    %v3239 = vadd.f32 %v662, %v3238
    %v3240 = vpop.f32.mrb[0].mxu0
    %v3241 = vadd.f32 %v666, %v3240
    %v3242 = vpop.f32.mrb[0].mxu0
    %v3243 = vpop.f32.mrb[0].mxu0
    %3244 = vdwg.mxu0
    %3245 = vmatprep.subr.bf16.mxu0 %v1061
    %3246 = vmatpush1.bf16.msra.mxu0 %v1060
    %3247 = vmatprep.subr.bf16.mxu0 %v1065
    %3248 = vmatpush1.bf16.msra.mxu0 %v1064
    %3249 = vmatprep.subr.bf16.mxu0 %v1069
    %3250 = vmatpush1.bf16.msra.mxu0 %v1068
    %3251 = vmatprep.subr.bf16.mxu0 %v1073
    %3252 = vmatpush1.bf16.msra.mxu0 %v1072
    %3253 = vmatprep.subr.bf16.mxu0 %v1077
    %3254 = vmatpush1.bf16.msra.mxu0 %v1076
    %3255 = vmatprep.subr.bf16.mxu0 %v1081
    %3256 = vmatpush1.bf16.msra.mxu0 %v1080
    %3257 = vmatprep.subr.bf16.mxu0 %v1085
    %3258 = vmatpush1.bf16.msra.mxu0 %v1084
    %3259 = vmatprep.subr.bf16.mxu0 %v1089
    %3260 = vmatpush1.bf16.msra.mxu0 %v1088
    %3261 = vmatprep.subr.bf16.mxu0 0
    %3262 = vmatpush1.bf16.msra.mxu0 0
    %3263 = vmatprep.subr.bf16.mxu0 0
    %3264 = vmatpush1.bf16.msra.mxu0 0
    %3265 = vmatprep.subr.bf16.mxu0 0
    %3266 = vmatpush1.bf16.msra.mxu0 0
    %3267 = vmatprep.subr.bf16.mxu0 0
    %3268 = vmatpush1.bf16.msra.mxu0 0
    %3269 = vmatprep.subr.bf16.mxu0 0
    %3270 = vmatpush1.bf16.msra.mxu0 0
    %3271 = vmatprep.subr.bf16.mxu0 0
    %3272 = vmatpush1.bf16.msra.mxu0 0
    %3273 = vmatprep.subr.bf16.mxu0 0
    %3274 = vmatpush1.bf16.msra.mxu0 0
    %3275 = vmatprep.subr.bf16.mxu0 0
    %3276 = vmatpush1.bf16.msra.mxu0 0
    %3277 = vmatprep.mubr.bf16.mxu0 0
    %3278 = vmatmul.mubr.bf16.gmra.mrb[0].mxu0 %v3203
    %v3279 = vpop.f32.mrb[0].mxu0
    %v3280 = vadd.f32 %v670, %v3279
    %v3281 = vpop.f32.mrb[0].mxu0
    %v3282 = vadd.f32 %v674, %v3281
    %v3283 = vpop.f32.mrb[0].mxu0
    %v3284 = vpop.f32.mrb[0].mxu0
    %3285 = vdwg.mxu0
    %v3286 = vld [vmem:[%s1204] sm:$0xff]
    %v3287 = vld [vmem:[%s1206] sm:$0xff]
    %v3288 = vpack.c.bf16 %v3286, %v3286
    %3289 = vmatprep.subr.bf16.mxu0 %v1306
    %3290 = vmatpush1.bf16.msra.mxu0 %v1305
    %3291 = vmatprep.subr.bf16.mxu0 %v1310
    %3292 = vmatpush1.bf16.msra.mxu0 %v1309
    %3293 = vmatprep.subr.bf16.mxu0 %v1314
    %3294 = vmatpush1.bf16.msra.mxu0 %v1313
    %3295 = vmatprep.subr.bf16.mxu0 %v1318
    %3296 = vmatpush1.bf16.msra.mxu0 %v1317
    %3297 = vmatprep.subr.bf16.mxu0 %v1322
    %3298 = vmatpush1.bf16.msra.mxu0 %v1321
    %3299 = vmatprep.subr.bf16.mxu0 %v1326
    %3300 = vmatpush1.bf16.msra.mxu0 %v1325
    %3301 = vmatprep.subr.bf16.mxu0 %v1330
    %3302 = vmatpush1.bf16.msra.mxu0 %v1329
    %3303 = vmatprep.subr.bf16.mxu0 %v1334
    %3304 = vmatpush1.bf16.msra.mxu0 %v1333
    %3305 = vmatprep.subr.bf16.mxu0 0
    %3306 = vmatpush1.bf16.msra.mxu0 0
    %3307 = vmatprep.subr.bf16.mxu0 0
    %3308 = vmatpush1.bf16.msra.mxu0 0
    %3309 = vmatprep.subr.bf16.mxu0 0
    %3310 = vmatpush1.bf16.msra.mxu0 0
    %3311 = vmatprep.subr.bf16.mxu0 0
    %3312 = vmatpush1.bf16.msra.mxu0 0
    %3313 = vmatprep.subr.bf16.mxu0 0
    %3314 = vmatpush1.bf16.msra.mxu0 0
    %3315 = vmatprep.subr.bf16.mxu0 0
    %3316 = vmatpush1.bf16.msra.mxu0 0
    %3317 = vmatprep.subr.bf16.mxu0 0
    %3318 = vmatpush1.bf16.msra.mxu0 0
    %3319 = vmatprep.subr.bf16.mxu0 0
    %3320 = vmatpush1.bf16.msra.mxu0 0
    %3321 = vmatprep.mubr.bf16.mxu0 0
    %3322 = vmatmul.mubr.bf16.gmra.mrb[0].mxu0 %v3288
    %v3323 = vpop.f32.mrb[0].mxu0
    %v3324 = vadd.f32 0.0, %v3323
    %v3325 = vpop.f32.mrb[0].mxu0
    %v3326 = vadd.f32 0.0, %v3325
    %v3327 = vpop.f32.mrb[0].mxu0
    %v3328 = vpop.f32.mrb[0].mxu0
    %3329 = vdwg.mxu0
    %3330 = vmatprep.subr.bf16.mxu0 %v1308
    %3331 = vmatpush1.bf16.msra.mxu0 %v1307
    %3332 = vmatprep.subr.bf16.mxu0 %v1312
    %3333 = vmatpush1.bf16.msra.mxu0 %v1311
    %3334 = vmatprep.subr.bf16.mxu0 %v1316
    %3335 = vmatpush1.bf16.msra.mxu0 %v1315
    %3336 = vmatprep.subr.bf16.mxu0 %v1320
    %3337 = vmatpush1.bf16.msra.mxu0 %v1319
    %3338 = vmatprep.subr.bf16.mxu0 %v1324
    %3339 = vmatpush1.bf16.msra.mxu0 %v1323
    %3340 = vmatprep.subr.bf16.mxu0 %v1328
    %3341 = vmatpush1.bf16.msra.mxu0 %v1327
    %3342 = vmatprep.subr.bf16.mxu0 %v1332
    %3343 = vmatpush1.bf16.msra.mxu0 %v1331
    %3344 = vmatprep.subr.bf16.mxu0 %v1336
    %3345 = vmatpush1.bf16.msra.mxu0 %v1335
    %3346 = vmatprep.subr.bf16.mxu0 0
    %3347 = vmatpush1.bf16.msra.mxu0 0
    %3348 = vmatprep.subr.bf16.mxu0 0
    %3349 = vmatpush1.bf16.msra.mxu0 0
    %3350 = vmatprep.subr.bf16.mxu0 0
    %3351 = vmatpush1.bf16.msra.mxu0 0
    %3352 = vmatprep.subr.bf16.mxu0 0
    %3353 = vmatpush1.bf16.msra.mxu0 0
    %3354 = vmatprep.subr.bf16.mxu0 0
    %3355 = vmatpush1.bf16.msra.mxu0 0
    %3356 = vmatprep.subr.bf16.mxu0 0
    %3357 = vmatpush1.bf16.msra.mxu0 0
    %3358 = vmatprep.subr.bf16.mxu0 0
    %3359 = vmatpush1.bf16.msra.mxu0 0
    %3360 = vmatprep.subr.bf16.mxu0 0
    %3361 = vmatpush1.bf16.msra.mxu0 0
    %3362 = vmatprep.mubr.bf16.mxu0 0
    %3363 = vmatmul.mubr.bf16.gmra.mrb[0].mxu0 %v3288
    %v3364 = vpop.f32.mrb[0].mxu0
    %v3365 = vadd.f32 0.0, %v3364
    %v3366 = vpop.f32.mrb[0].mxu0
    %v3367 = vadd.f32 0.0, %v3366
    %v3368 = vpop.f32.mrb[0].mxu0
    %v3369 = vpop.f32.mrb[0].mxu0
    %3370 = vdwg.mxu0
    %v3371 = vadd.f32 %v3239, %v3324
    %v3372 = vadd.f32 %v3241, %v3326
    %v3373 = vadd.f32 %v3280, %v3365
    %v3374 = vadd.f32 %v3282, %v3367
    %v3375 = vxor.u32 %v3371, 2147483648
    %v3376 = vmul.f32 %v3375, 1.442695
    %v3377 = vpow.pop %v3376
    %v3378 = vadd.f32 %v3377, 1.0
    %v3379 = vrcp.pop %v3378
    %v3380 = vmul.f32 1.0, %v3379
    %v3381 = vxor.u32 %v3372, 2147483648
    %v3382 = vmul.f32 %v3381, 1.442695
    %v3383 = vpow.pop %v3382
    %v3384 = vadd.f32 %v3383, 1.0
    %v3385 = vrcp.pop %v3384
    %v3386 = vmul.f32 1.0, %v3385
    %v3387 = vtanh.pop %v3373
    %v3388 = vxor.u32 %v3374, 2147483648
    %v3389 = vmul.f32 %v3388, 1.442695
    %v3390 = vpow.pop %v3389
    %v3391 = vadd.f32 %v3390, 1.0
    %v3392 = vrcp.pop %v3391
    %v3393 = vmul.f32 1.0, %v3392
    %v3394 = vmul.f32 %v3386, %v3287
    %v3395 = vmul.f32 %v3380, %v3387
    %v3396 = vadd.f32 %v3394, %v3395
    %v3397 = vtanh.pop %v3396
    %v3398 = vmul.f32 %v3393, %v3397
    %3399 = vst [vmem:[%s1204] sm:$0xff] %v3398
    %3400 = vst [vmem:[%s1206] sm:$0xff] %v3396
    %s3401 = smul.u32 7, 4
    %s3402 = smul.addr %s3401, 8
    %s3403 = scalar_lea.vmem [#allocation2], %s3402
    %v3404 = vld [vmem:[%s3403] sm:$0xff]
    %v3405 = vld [vmem:[%s3403 + $0x8] sm:$0xff]
    %v3406 = vld [vmem:[%s3403 + $0x10] sm:$0xff]
    %v3407 = vld [vmem:[%s3403 + $0x18] sm:$0xff]
    %v3408 = vld [vmem:[#allocation3] sm:$0xff]
    %v3409 = vld [vmem:[#allocation4] sm:$0xff]
    %v3410 = vpack.c.bf16 %v3408, %v3408
    %3411 = vmatprep.subr.bf16.mxu0 %v786
    %3412 = vmatpush1.bf16.msra.mxu0 %v785
    %3413 = vmatprep.subr.bf16.mxu0 %v790
    %3414 = vmatpush1.bf16.msra.mxu0 %v789
    %3415 = vmatprep.subr.bf16.mxu0 %v794
    %3416 = vmatpush1.bf16.msra.mxu0 %v793
    %3417 = vmatprep.subr.bf16.mxu0 %v798
    %3418 = vmatpush1.bf16.msra.mxu0 %v797
    %3419 = vmatprep.subr.bf16.mxu0 %v802
    %3420 = vmatpush1.bf16.msra.mxu0 %v801
    %3421 = vmatprep.subr.bf16.mxu0 %v806
    %3422 = vmatpush1.bf16.msra.mxu0 %v805
    %3423 = vmatprep.subr.bf16.mxu0 %v810
    %3424 = vmatpush1.bf16.msra.mxu0 %v809
    %3425 = vmatprep.subr.bf16.mxu0 %v814
    %3426 = vmatpush1.bf16.msra.mxu0 %v813
    %3427 = vmatprep.subr.bf16.mxu0 0
    %3428 = vmatpush1.bf16.msra.mxu0 0
    %3429 = vmatprep.subr.bf16.mxu0 0
    %3430 = vmatpush1.bf16.msra.mxu0 0
    %3431 = vmatprep.subr.bf16.mxu0 0
    %3432 = vmatpush1.bf16.msra.mxu0 0
    %3433 = vmatprep.subr.bf16.mxu0 0
    %3434 = vmatpush1.bf16.msra.mxu0 0
    %3435 = vmatprep.subr.bf16.mxu0 0
    %3436 = vmatpush1.bf16.msra.mxu0 0
    %3437 = vmatprep.subr.bf16.mxu0 0
    %3438 = vmatpush1.bf16.msra.mxu0 0
    %3439 = vmatprep.subr.bf16.mxu0 0
    %3440 = vmatpush1.bf16.msra.mxu0 0
    %3441 = vmatprep.subr.bf16.mxu0 0
    %3442 = vmatpush1.bf16.msra.mxu0 0
    %3443 = vmatprep.mubr.bf16.mxu0 0
    %3444 = vmatmul.mubr.bf16.gmra.mrb[0].mxu0 %v3410
    %v3445 = vpop.f32.mrb[0].mxu0
    %v3446 = vadd.f32 0.0, %v3445
    %v3447 = vpop.f32.mrb[0].mxu0
    %v3448 = vadd.f32 0.0, %v3447
    %v3449 = vpop.f32.mrb[0].mxu0
    %v3450 = vpop.f32.mrb[0].mxu0
    %3451 = vdwg.mxu0
    %3452 = vmatprep.subr.bf16.mxu0 %v788
    %3453 = vmatpush1.bf16.msra.mxu0 %v787
    %3454 = vmatprep.subr.bf16.mxu0 %v792
    %3455 = vmatpush1.bf16.msra.mxu0 %v791
    %3456 = vmatprep.subr.bf16.mxu0 %v796
    %3457 = vmatpush1.bf16.msra.mxu0 %v795
    %3458 = vmatprep.subr.bf16.mxu0 %v800
    %3459 = vmatpush1.bf16.msra.mxu0 %v799
    %3460 = vmatprep.subr.bf16.mxu0 %v804
    %3461 = vmatpush1.bf16.msra.mxu0 %v803
    %3462 = vmatprep.subr.bf16.mxu0 %v808
    %3463 = vmatpush1.bf16.msra.mxu0 %v807
    %3464 = vmatprep.subr.bf16.mxu0 %v812
    %3465 = vmatpush1.bf16.msra.mxu0 %v811
    %3466 = vmatprep.subr.bf16.mxu0 %v816
    %3467 = vmatpush1.bf16.msra.mxu0 %v815
    %3468 = vmatprep.subr.bf16.mxu0 0
    %3469 = vmatpush1.bf16.msra.mxu0 0
    %3470 = vmatprep.subr.bf16.mxu0 0
    %3471 = vmatpush1.bf16.msra.mxu0 0
    %3472 = vmatprep.subr.bf16.mxu0 0
    %3473 = vmatpush1.bf16.msra.mxu0 0
    %3474 = vmatprep.subr.bf16.mxu0 0
    %3475 = vmatpush1.bf16.msra.mxu0 0
    %3476 = vmatprep.subr.bf16.mxu0 0
    %3477 = vmatpush1.bf16.msra.mxu0 0
    %3478 = vmatprep.subr.bf16.mxu0 0
    %3479 = vmatpush1.bf16.msra.mxu0 0
    %3480 = vmatprep.subr.bf16.mxu0 0
    %3481 = vmatpush1.bf16.msra.mxu0 0
    %3482 = vmatprep.subr.bf16.mxu0 0
    %3483 = vmatpush1.bf16.msra.mxu0 0
    %3484 = vmatprep.mubr.bf16.mxu0 0
    %3485 = vmatmul.mubr.bf16.gmra.mrb[0].mxu0 %v3410
    %v3486 = vpop.f32.mrb[0].mxu0
    %v3487 = vadd.f32 0.0, %v3486
    %v3488 = vpop.f32.mrb[0].mxu0
    %v3489 = vadd.f32 0.0, %v3488
    %v3490 = vpop.f32.mrb[0].mxu0
    %v3491 = vpop.f32.mrb[0].mxu0
    %3492 = vdwg.mxu0
    %v3493 = vadd.f32 %v3404, %v3446
    %v3494 = vadd.f32 %v3405, %v3448
    %v3495 = vadd.f32 %v3406, %v3487
    %v3496 = vadd.f32 %v3407, %v3489
    %v3497 = vxor.u32 %v3493, 2147483648
    %v3498 = vmul.f32 %v3497, 1.442695
    %v3499 = vpow.pop %v3498
    %v3500 = vadd.f32 %v3499, 1.0
    %v3501 = vrcp.pop %v3500
    %v3502 = vmul.f32 1.0, %v3501
    %v3503 = vxor.u32 %v3494, 2147483648
    %v3504 = vmul.f32 %v3503, 1.442695
    %v3505 = vpow.pop %v3504
    %v3506 = vadd.f32 %v3505, 1.0
    %v3507 = vrcp.pop %v3506
    %v3508 = vmul.f32 1.0, %v3507
    %v3509 = vtanh.pop %v3495
    %v3510 = vxor.u32 %v3496, 2147483648
    %v3511 = vmul.f32 %v3510, 1.442695
    %v3512 = vpow.pop %v3511
    %v3513 = vadd.f32 %v3512, 1.0
    %v3514 = vrcp.pop %v3513
    %v3515 = vmul.f32 1.0, %v3514
    %v3516 = vmul.f32 %v3508, %v3409
    %v3517 = vmul.f32 %v3502, %v3509
    %v3518 = vadd.f32 %v3516, %v3517
    %v3519 = vtanh.pop %v3518
    %v3520 = vmul.f32 %v3515, %v3519
    %3521 = vst [vmem:[#allocation3] sm:$0xff] %v3520
    %3522 = vst [vmem:[#allocation4] sm:$0xff] %v3518
    %v3523 = vpack.c.bf16 %v3520, %v3520
    %3524 = vmatprep.subr.bf16.mxu0 %v1059
    %3525 = vmatpush1.bf16.msra.mxu0 %v1058
    %3526 = vmatprep.subr.bf16.mxu0 %v1063
    %3527 = vmatpush1.bf16.msra.mxu0 %v1062
    %3528 = vmatprep.subr.bf16.mxu0 %v1067
    %3529 = vmatpush1.bf16.msra.mxu0 %v1066
    %3530 = vmatprep.subr.bf16.mxu0 %v1071
    %3531 = vmatpush1.bf16.msra.mxu0 %v1070
    %3532 = vmatprep.subr.bf16.mxu0 %v1075
    %3533 = vmatpush1.bf16.msra.mxu0 %v1074
    %3534 = vmatprep.subr.bf16.mxu0 %v1079
    %3535 = vmatpush1.bf16.msra.mxu0 %v1078
    %3536 = vmatprep.subr.bf16.mxu0 %v1083
    %3537 = vmatpush1.bf16.msra.mxu0 %v1082
    %3538 = vmatprep.subr.bf16.mxu0 %v1087
    %3539 = vmatpush1.bf16.msra.mxu0 %v1086
    %3540 = vmatprep.subr.bf16.mxu0 0
    %3541 = vmatpush1.bf16.msra.mxu0 0
    %3542 = vmatprep.subr.bf16.mxu0 0
    %3543 = vmatpush1.bf16.msra.mxu0 0
    %3544 = vmatprep.subr.bf16.mxu0 0
    %3545 = vmatpush1.bf16.msra.mxu0 0
    %3546 = vmatprep.subr.bf16.mxu0 0
    %3547 = vmatpush1.bf16.msra.mxu0 0
    %3548 = vmatprep.subr.bf16.mxu0 0
    %3549 = vmatpush1.bf16.msra.mxu0 0
    %3550 = vmatprep.subr.bf16.mxu0 0
    %3551 = vmatpush1.bf16.msra.mxu0 0
    %3552 = vmatprep.subr.bf16.mxu0 0
    %3553 = vmatpush1.bf16.msra.mxu0 0
    %3554 = vmatprep.subr.bf16.mxu0 0
    %3555 = vmatpush1.bf16.msra.mxu0 0
    %3556 = vmatprep.mubr.bf16.mxu0 0
    %3557 = vmatmul.mubr.bf16.gmra.mrb[0].mxu0 %v3523
    %v3558 = vpop.f32.mrb[0].mxu0
    %v3559 = vadd.f32 %v662, %v3558
    %v3560 = vpop.f32.mrb[0].mxu0
    %v3561 = vadd.f32 %v666, %v3560
    %v3562 = vpop.f32.mrb[0].mxu0
    %v3563 = vpop.f32.mrb[0].mxu0
    %3564 = vdwg.mxu0
    %3565 = vmatprep.subr.bf16.mxu0 %v1061
    %3566 = vmatpush1.bf16.msra.mxu0 %v1060
    %3567 = vmatprep.subr.bf16.mxu0 %v1065
    %3568 = vmatpush1.bf16.msra.mxu0 %v1064
    %3569 = vmatprep.subr.bf16.mxu0 %v1069
    %3570 = vmatpush1.bf16.msra.mxu0 %v1068
    %3571 = vmatprep.subr.bf16.mxu0 %v1073
    %3572 = vmatpush1.bf16.msra.mxu0 %v1072
    %3573 = vmatprep.subr.bf16.mxu0 %v1077
    %3574 = vmatpush1.bf16.msra.mxu0 %v1076
    %3575 = vmatprep.subr.bf16.mxu0 %v1081
    %3576 = vmatpush1.bf16.msra.mxu0 %v1080
    %3577 = vmatprep.subr.bf16.mxu0 %v1085
    %3578 = vmatpush1.bf16.msra.mxu0 %v1084
    %3579 = vmatprep.subr.bf16.mxu0 %v1089
    %3580 = vmatpush1.bf16.msra.mxu0 %v1088
    %3581 = vmatprep.subr.bf16.mxu0 0
    %3582 = vmatpush1.bf16.msra.mxu0 0
    %3583 = vmatprep.subr.bf16.mxu0 0
    %3584 = vmatpush1.bf16.msra.mxu0 0
    %3585 = vmatprep.subr.bf16.mxu0 0
    %3586 = vmatpush1.bf16.msra.mxu0 0
    %3587 = vmatprep.subr.bf16.mxu0 0
    %3588 = vmatpush1.bf16.msra.mxu0 0
    %3589 = vmatprep.subr.bf16.mxu0 0
    %3590 = vmatpush1.bf16.msra.mxu0 0
    %3591 = vmatprep.subr.bf16.mxu0 0
    %3592 = vmatpush1.bf16.msra.mxu0 0
    %3593 = vmatprep.subr.bf16.mxu0 0
    %3594 = vmatpush1.bf16.msra.mxu0 0
    %3595 = vmatprep.subr.bf16.mxu0 0
    %3596 = vmatpush1.bf16.msra.mxu0 0
    %3597 = vmatprep.mubr.bf16.mxu0 0
    %3598 = vmatmul.mubr.bf16.gmra.mrb[0].mxu0 %v3523
    %v3599 = vpop.f32.mrb[0].mxu0
    %v3600 = vadd.f32 %v670, %v3599
    %v3601 = vpop.f32.mrb[0].mxu0
    %v3602 = vadd.f32 %v674, %v3601
    %v3603 = vpop.f32.mrb[0].mxu0
    %v3604 = vpop.f32.mrb[0].mxu0
    %3605 = vdwg.mxu0
    %v3606 = vld [vmem:[%s1204] sm:$0xff]
    %v3607 = vld [vmem:[%s1206] sm:$0xff]
    %v3608 = vpack.c.bf16 %v3606, %v3606
    %3609 = vmatprep.subr.bf16.mxu0 %v1306
    %3610 = vmatpush1.bf16.msra.mxu0 %v1305
    %3611 = vmatprep.subr.bf16.mxu0 %v1310
    %3612 = vmatpush1.bf16.msra.mxu0 %v1309
    %3613 = vmatprep.subr.bf16.mxu0 %v1314
    %3614 = vmatpush1.bf16.msra.mxu0 %v1313
    %3615 = vmatprep.subr.bf16.mxu0 %v1318
    %3616 = vmatpush1.bf16.msra.mxu0 %v1317
    %3617 = vmatprep.subr.bf16.mxu0 %v1322
    %3618 = vmatpush1.bf16.msra.mxu0 %v1321
    %3619 = vmatprep.subr.bf16.mxu0 %v1326
    %3620 = vmatpush1.bf16.msra.mxu0 %v1325
    %3621 = vmatprep.subr.bf16.mxu0 %v1330
    %3622 = vmatpush1.bf16.msra.mxu0 %v1329
    %3623 = vmatprep.subr.bf16.mxu0 %v1334
    %3624 = vmatpush1.bf16.msra.mxu0 %v1333
    %3625 = vmatprep.subr.bf16.mxu0 0
    %3626 = vmatpush1.bf16.msra.mxu0 0
    %3627 = vmatprep.subr.bf16.mxu0 0
    %3628 = vmatpush1.bf16.msra.mxu0 0
    %3629 = vmatprep.subr.bf16.mxu0 0
    %3630 = vmatpush1.bf16.msra.mxu0 0
    %3631 = vmatprep.subr.bf16.mxu0 0
    %3632 = vmatpush1.bf16.msra.mxu0 0
    %3633 = vmatprep.subr.bf16.mxu0 0
    %3634 = vmatpush1.bf16.msra.mxu0 0
    %3635 = vmatprep.subr.bf16.mxu0 0
    %3636 = vmatpush1.bf16.msra.mxu0 0
    %3637 = vmatprep.subr.bf16.mxu0 0
    %3638 = vmatpush1.bf16.msra.mxu0 0
    %3639 = vmatprep.subr.bf16.mxu0 0
    %3640 = vmatpush1.bf16.msra.mxu0 0
    %3641 = vmatprep.mubr.bf16.mxu0 0
    %3642 = vmatmul.mubr.bf16.gmra.mrb[0].mxu0 %v3608
    %v3643 = vpop.f32.mrb[0].mxu0
    %v3644 = vadd.f32 0.0, %v3643
    %v3645 = vpop.f32.mrb[0].mxu0
    %v3646 = vadd.f32 0.0, %v3645
    %v3647 = vpop.f32.mrb[0].mxu0
    %v3648 = vpop.f32.mrb[0].mxu0
    %3649 = vdwg.mxu0
    %3650 = vmatprep.subr.bf16.mxu0 %v1308
    %3651 = vmatpush1.bf16.msra.mxu0 %v1307
    %3652 = vmatprep.subr.bf16.mxu0 %v1312
    %3653 = vmatpush1.bf16.msra.mxu0 %v1311
    %3654 = vmatprep.subr.bf16.mxu0 %v1316
    %3655 = vmatpush1.bf16.msra.mxu0 %v1315
    %3656 = vmatprep.subr.bf16.mxu0 %v1320
    %3657 = vmatpush1.bf16.msra.mxu0 %v1319
    %3658 = vmatprep.subr.bf16.mxu0 %v1324
    %3659 = vmatpush1.bf16.msra.mxu0 %v1323
    %3660 = vmatprep.subr.bf16.mxu0 %v1328
    %3661 = vmatpush1.bf16.msra.mxu0 %v1327
    %3662 = vmatprep.subr.bf16.mxu0 %v1332
    %3663 = vmatpush1.bf16.msra.mxu0 %v1331
    %3664 = vmatprep.subr.bf16.mxu0 %v1336
    %3665 = vmatpush1.bf16.msra.mxu0 %v1335
    %3666 = vmatprep.subr.bf16.mxu0 0
    %3667 = vmatpush1.bf16.msra.mxu0 0
    %3668 = vmatprep.subr.bf16.mxu0 0
    %3669 = vmatpush1.bf16.msra.mxu0 0
    %3670 = vmatprep.subr.bf16.mxu0 0
    %3671 = vmatpush1.bf16.msra.mxu0 0
    %3672 = vmatprep.subr.bf16.mxu0 0
    %3673 = vmatpush1.bf16.msra.mxu0 0
    %3674 = vmatprep.subr.bf16.mxu0 0
    %3675 = vmatpush1.bf16.msra.mxu0 0
    %3676 = vmatprep.subr.bf16.mxu0 0
    %3677 = vmatpush1.bf16.msra.mxu0 0
    %3678 = vmatprep.subr.bf16.mxu0 0
    %3679 = vmatpush1.bf16.msra.mxu0 0
    %3680 = vmatprep.subr.bf16.mxu0 0
    %3681 = vmatpush1.bf16.msra.mxu0 0
    %3682 = vmatprep.mubr.bf16.mxu0 0
    %3683 = vmatmul.mubr.bf16.gmra.mrb[0].mxu0 %v3608
    %v3684 = vpop.f32.mrb[0].mxu0
    %v3685 = vadd.f32 0.0, %v3684
    %v3686 = vpop.f32.mrb[0].mxu0
    %v3687 = vadd.f32 0.0, %v3686
    %v3688 = vpop.f32.mrb[0].mxu0
    %v3689 = vpop.f32.mrb[0].mxu0
    %3690 = vdwg.mxu0
    %v3691 = vadd.f32 %v3559, %v3644
    %v3692 = vadd.f32 %v3561, %v3646
    %v3693 = vadd.f32 %v3600, %v3685
    %v3694 = vadd.f32 %v3602, %v3687
    %v3695 = vxor.u32 %v3691, 2147483648
    %v3696 = vmul.f32 %v3695, 1.442695
    %v3697 = vpow.pop %v3696
    %v3698 = vadd.f32 %v3697, 1.0
    %v3699 = vrcp.pop %v3698
    %v3700 = vmul.f32 1.0, %v3699
    %v3701 = vxor.u32 %v3692, 2147483648
    %v3702 = vmul.f32 %v3701, 1.442695
    %v3703 = vpow.pop %v3702
    %v3704 = vadd.f32 %v3703, 1.0
    %v3705 = vrcp.pop %v3704
    %v3706 = vmul.f32 1.0, %v3705
    %v3707 = vtanh.pop %v3693
    %v3708 = vxor.u32 %v3694, 2147483648
    %v3709 = vmul.f32 %v3708, 1.442695
    %v3710 = vpow.pop %v3709
    %v3711 = vadd.f32 %v3710, 1.0
    %v3712 = vrcp.pop %v3711
    %v3713 = vmul.f32 1.0, %v3712
    %v3714 = vmul.f32 %v3706, %v3607
    %v3715 = vmul.f32 %v3700, %v3707
    %v3716 = vadd.f32 %v3714, %v3715
    %v3717 = vtanh.pop %v3716
    %v3718 = vmul.f32 %v3713, %v3717
    %3719 = vst [vmem:[%s1204] sm:$0xff] %v3718
    %3720 = vst [vmem:[%s1206] sm:$0xff] %v3716
    %v3721 = vld [vmem:[#allocation3] sm:$0xff]
    %v3722 = vld [vmem:[#allocation3 + $0x8] sm:$0xff]
    %3723 = vst [vmem:[#allocation20] sm:$0xff] %v3721
    %3724 = vst [vmem:[#allocation20 + $0x8] sm:$0xff] %v3722
    %v3725 = vld [vmem:[#allocation4] sm:$0xff]
    %v3726 = vld [vmem:[#allocation4 + $0x8] sm:$0xff]
    %3727 = vst [vmem:[#allocation22] sm:$0xff] %v3725
    %3728 = vst [vmem:[#allocation22 + $0x8] sm:$0xff] %v3726
    %v3729 = vld [vmem:[%s1204] sm:$0xff]
    %v3730 = vpack.c.bf16 %v3729, %v3729
    %v3731 = vld [vmem:[#allocation17] sm:$0xf]
    %v3732 = vld [vmem:[#allocation17 + $0x4] sm:$0xf]
    %v3733 = vld [vmem:[#allocation17 + $0x8] sm:$0xf]
    %v3734 = vld [vmem:[#allocation17 + $0xc] sm:$0xf]
    %v3735 = vld [vmem:[#allocation17 + $0x10] sm:$0xf]
    %v3736 = vld [vmem:[#allocation17 + $0x14] sm:$0xf]
    %v3737 = vld [vmem:[#allocation17 + $0x18] sm:$0xf]
    %v3738 = vld [vmem:[#allocation17 + $0x1c] sm:$0xf]
    %v3739 = vld [vmem:[#allocation17 + $0x20] sm:$0xf]
    %v3740 = vld [vmem:[#allocation17 + $0x24] sm:$0xf]
    %v3741 = vld [vmem:[#allocation17 + $0x28] sm:$0xf]
    %v3742 = vld [vmem:[#allocation17 + $0x2c] sm:$0xf]
    %v3743 = vld [vmem:[#allocation17 + $0x30] sm:$0xf]
    %v3744 = vld [vmem:[#allocation17 + $0x34] sm:$0xf]
    %v3745 = vld [vmem:[#allocation17 + $0x38] sm:$0xf]
    %v3746 = vld [vmem:[#allocation17 + $0x3c] sm:$0xf]
    %v3747 = vld [vmem:[%s8] sm:$0x1]
    %v3749 = vlaneseq
    %v3750 = vshrl.u32 %v3749, 7
    %v3751 = vsub.s32 0, %v3750
    %v3752 = vrot.slane %v3747, %v3751
    %v3770 = vunpack.c.l.b16 %v3731
    %v3771 = vunpack.c.l.b16 %v3732
    %v3772 = vunpack.c.l.b16 %v3733
    %v3773 = vunpack.c.l.b16 %v3734
    %v3774 = vunpack.c.l.b16 %v3735
    %v3775 = vunpack.c.l.b16 %v3736
    %v3776 = vunpack.c.l.b16 %v3737
    %v3777 = vunpack.c.l.b16 %v3738
    %v3778 = vunpack.c.l.b16 %v3739
    %v3779 = vunpack.c.l.b16 %v3740
    %v3780 = vunpack.c.l.b16 %v3741
    %v3781 = vunpack.c.l.b16 %v3742
    %v3782 = vunpack.c.l.b16 %v3743
    %v3783 = vunpack.c.l.b16 %v3744
    %v3784 = vunpack.c.l.b16 %v3745
    %v3785 = vunpack.c.l.b16 %v3746
    %v3786 = vpack.c.b16 %v3771, %v3770
    %v3787 = vpack.c.b16 %v3773, %v3772
    %v3788 = vpack.c.b16 %v3775, %v3774
    %v3789 = vpack.c.b16 %v3777, %v3776
    %v3790 = vpack.c.b16 %v3779, %v3778
    %v3791 = vpack.c.b16 %v3781, %v3780
    %v3792 = vpack.c.b16 %v3783, %v3782
    %v3793 = vpack.c.b16 %v3785, %v3784
    %3802 = vmatprep.subr.bf16.mxu0 0
    %3803 = vmatpush1.bf16.msra.mxu0 %v3786
    %3804 = vmatprep.subr.bf16.mxu0 0
    %3805 = vmatpush1.bf16.msra.mxu0 %v3787
    %3806 = vmatprep.subr.bf16.mxu0 0
    %3807 = vmatpush1.bf16.msra.mxu0 %v3788
    %3808 = vmatprep.subr.bf16.mxu0 0
    %3809 = vmatpush1.bf16.msra.mxu0 %v3789
    %3810 = vmatprep.subr.bf16.mxu0 0
    %3811 = vmatpush1.bf16.msra.mxu0 %v3790
    %3812 = vmatprep.subr.bf16.mxu0 0
    %3813 = vmatpush1.bf16.msra.mxu0 %v3791
    %3814 = vmatprep.subr.bf16.mxu0 0
    %3815 = vmatpush1.bf16.msra.mxu0 %v3792
    %3816 = vmatprep.subr.bf16.mxu0 0
    %3817 = vmatpush1.bf16.msra.mxu0 %v3793
    %3818 = vmatprep.subr.bf16.mxu0 0
    %3819 = vmatpush1.bf16.msra.mxu0 0
    %3820 = vmatprep.subr.bf16.mxu0 0
    %3821 = vmatpush1.bf16.msra.mxu0 0
    %3822 = vmatprep.subr.bf16.mxu0 0
    %3823 = vmatpush1.bf16.msra.mxu0 0
    %3824 = vmatprep.subr.bf16.mxu0 0
    %3825 = vmatpush1.bf16.msra.mxu0 0
    %3826 = vmatprep.subr.bf16.mxu0 0
    %3827 = vmatpush1.bf16.msra.mxu0 0
    %3828 = vmatprep.subr.bf16.mxu0 0
    %3829 = vmatpush1.bf16.msra.mxu0 0
    %3830 = vmatprep.subr.bf16.mxu0 0
    %3831 = vmatpush1.bf16.msra.mxu0 0
    %3832 = vmatprep.subr.bf16.mxu0 0
    %3833 = vmatpush1.bf16.msra.mxu0 0
    %3834 = vmatprep.mubr.bf16.mxu0 0
    %3835 = vmatmul.mubr.bf16.gmra.mrb[0].mxu0 %v3730
    %v3836 = vpop.f32.mrb[0].mxu0
    %v3837 = vadd.f32 %v3752, %v3836
    %v3838 = vpop.f32.mrb[0].mxu0
    %v3839 = vpop.f32.mrb[0].mxu0
    %v3840 = vpop.f32.mrb[0].mxu0
    %3841 = vdwg.mxu0
    %v3842 = vxor.u32 %v3837, 2147483648
    %v3843 = vmul.f32 %v3842, 1.442695
    %v3844 = vpow.pop %v3843
    %v3845 = vadd.f32 %v3844, 1.0
    %v3846 = vrcp.pop %v3845
    %v3847 = vmul.f32 1.0, %v3846
    %3848 = vst [vmem:[#allocation19] sm:$0xff] %v3847
    // Predicated region
    $region78: #{tpu_custom_call.1} parent=1 // pred_check
      _
    $region79: #{tpu_custom_call.1} parent=1 // pred_check_branch
      %3850 = sbr.rel (0) target = $region81
    $region80: #{tpu_custom_call.1} parent=1 // pred_region
      %s3852 = ssub.s32 128, 128
      %3853 = vsyncadd [#allocation7], %s3852
      %s3855 = sshll.u32 [#allocation19], 4
      %s3856 = int_to_ptr.vmem [resolvable:$true] %s3855
      %3858 = dma.vmem_to_hbm [thread:$0]  %s3856, 128, %s11, [#allocation7]
    $region81: #{tpu_custom_call.1} parent=1 // pred_fallthru
      _
    // Predicated region
    $region82: #{tpu_custom_call.1} parent=1 // pred_check
      _
    $region83: #{tpu_custom_call.1} parent=1 // pred_check_branch
      %3860 = sbr.rel (0) target = $region85
    $region84: #{tpu_custom_call.1} parent=1 // pred_region
      %s3862 = ssub.s32 256, 256
      %3863 = vsyncadd [#allocation21], %s3862
      %s3864 = sshll.u32 [#allocation20], 4
      %s3865 = int_to_ptr.vmem [resolvable:$true] %s3864
      %3870 = dma.vmem_to_hbm [thread:$0]  %s3865, 256, %s12, [#allocation21], 128, 128, 8
    $region85: #{tpu_custom_call.1} parent=1 // pred_fallthru
      _
    // Predicated region
    $region86: #{tpu_custom_call.1} parent=1 // pred_check
      _
    $region87: #{tpu_custom_call.1} parent=1 // pred_check_branch
      %3872 = sbr.rel (0) target = $region89
    $region88: #{tpu_custom_call.1} parent=1 // pred_region
      %s3874 = ssub.s32 256, 256
      %3875 = vsyncadd [#allocation21], %s3874
      %s3876 = sshll.u32 [#allocation22], 4
      %s3877 = int_to_ptr.vmem [resolvable:$true] %s3876
      %3882 = dma.vmem_to_hbm [thread:$0]  %s3877, 256, %s13, [#allocation21], 128, 128, 8
    $region89: #{tpu_custom_call.1} parent=1 // pred_fallthru
      _
    // Predicated region
    $region90: #{tpu_custom_call.1} parent=1 // pred_check
      _
    $region91: #{tpu_custom_call.1} parent=1 // pred_check_branch
      %3884 = sbr.rel (0) target = $region93
    $region92: #{tpu_custom_call.1} parent=1 // pred_region
      %3885 = dma.done [#allocation7], 128
    $region93: #{tpu_custom_call.1} parent=1 // pred_fallthru
      _
    // Predicated region
    $region94: #{tpu_custom_call.1} parent=1 // pred_check
      _
    $region95: #{tpu_custom_call.1} parent=1 // pred_check_branch
      %3887 = sbr.rel (0) target = $region97
    $region96: #{tpu_custom_call.1} parent=1 // pred_region
      %3888 = dma.done [#allocation21], 256
    $region97: #{tpu_custom_call.1} parent=1 // pred_fallthru
      _
    // Predicated region
    $region98: #{tpu_custom_call.1} parent=1 // pred_check
      _
    $region99: #{tpu_custom_call.1} parent=1 // pred_check_branch
      %3890 = sbr.rel (0) target = $region101
    $region100: #{tpu_custom_call.1} parent=1 // pred_region
      %3891 = dma.done [#allocation21], 256
    $region101: #{tpu_custom_call.1} parent=1 // pred_fallthru
      _
    %3892 = vsyncpa [#allocation6], 1
    %3893 = vsyncpa [#allocation9], 1
    %3894 = vsyncpa [#allocation12], 1
    %3895 = vsyncpa [#allocation15], 1
    %3896 = vsyncpa [#allocation18], 1
    %3897 = vsyncpa [#allocation7], 1
    %3898 = vsyncpa [#allocation21], 1

</llo_original>
